<compile_context>
chip_gen: v6e
topology: v6e:2x2x1
jax: 0.10.0
libtpu: 0.0.40
codegen_flags: <defaults>
</compile_context>

<pallas_src>
import math

import jax
import jax.numpy as jnp
from jax.experimental import pallas as pl
from jax.experimental.pallas import tpu as pltpu


def conv2d_size_out(size, kernel_size, stride):
    return (size - (kernel_size - 1) - 1) // stride + 1


def _round_up(x, m):
    return (x + m - 1) // m * m


# ----------------------------------------------------------------------------
# Fused kernel builder (all shapes/offsets are static Python ints).
# ----------------------------------------------------------------------------
def _build_kernel(cfg):
    B, ph, pw = cfg["B"], cfg["ph"], cfg["pw"]
    oh2, ow2, oh3, ow3 = cfg["oh2"], cfg["ow2"], cfg["oh3"], cfg["ow3"]
    N1, N1P = cfg["N1"], cfg["N1P"]
    M2, M2P = cfg["M2"], cfg["M2P"]
    npos = oh3 * ow3
    f32, bf16 = jnp.float32, jnp.bfloat16

    # Tap shift (in rows of the source grid), listed in the same order as the
    # repacked weight rows: (a, e) for conv1, (ky, kx) for conv2/conv3.
    shifts1 = [a * pw + e for a in range(2) for e in range(2)]        # 2x2 s1
    shifts2 = [ky * pw + kx for ky in range(4) for kx in range(4)]    # 4x4 s1 (dense)
    shifts3 = [ky * ow2 + kx for ky in range(3) for kx in range(3)]   # 3x3 s1

    def conv_block(src_ref, n_rows, shifts, cin, w_ref, b_ref, taps_per_chunk):
        """sum_t src[shift_t : shift_t+n_rows] @ W_t  as dense-K matmul chunks."""
        acc = None
        for t0 in range(0, len(shifts), taps_per_chunk):
            chunk = shifts[t0:t0 + taps_per_chunk]
            slab = jnp.concatenate(
                [src_ref[pl.ds(d, n_rows), :] for d in chunk], axis=1
            ).astype(bf16)                                    # (n_rows, len*cin)
            w = w_ref[pl.ds(t0 * cin, len(chunk) * cin), :]   # bf16 (len*cin, oc)
            part = jnp.dot(slab, w, preferred_element_type=f32)
            acc = part if acc is None else acc + part
        return jnp.maximum(acc + b_ref[...], 0.0)

    def kernel(xs_ref, w1_ref, b1_ref, w2_ref, b2_ref, w3_ref, b3_ref,
               fcb_ref, hb_ref, fcw_hbm, hw_hbm, out_ref,
               a1_ref, a2d_ref, a2s_ref, a3_ref, fcw_vm, hw_vm, sem):
        # Prefetch the late (fc1 / head) weights from HBM while the convs run.
        cp_fc = pltpu.make_async_copy(fcw_hbm, fcw_vm, sem.at[0])
        cp_hd = pltpu.make_async_copy(hw_hbm, hw_vm, sem.at[1])
        cp_fc.start()
        cp_hd.start()

        # conv1: the 8x8/stride-4 conv is a 2x2/stride-1 conv on the 4x4
        # space-to-depth grid (done in the wrapper).  Rows = (b, py, px).
        a1 = conv_block(xs_ref, N1, shifts1, 64, w1_ref, b1_ref, 4)   # (N1, 32)
        a1_ref[pl.ds(0, N1), :] = a1
        a1_ref[pl.ds(N1, N1P - N1), :] = jnp.zeros((N1P - N1, 32), f32)

        # conv2 (4x4/stride-2): computed densely (stride 1) on the conv1 grid;
        # the stride-2 anchors are extracted in the compaction step below.
        a2 = conv_block(a1_ref, N1, shifts2, 32, w2_ref, b2_ref, 8)   # (N1, 64)
        a2d_ref[pl.ds(0, N1), :] = a2

        # Compact stride-2 subsample: keep rows (b, 2*oy2, 2*ox2).
        for b in range(B):
            for oy2 in range(oh2):
                base = b * ph * pw + 2 * oy2 * pw
                rows = jnp.concatenate(
                    [a2d_ref[pl.ds(base + 2 * ox2, 1), :] for ox2 in range(ow2)],
                    axis=0)                                           # (ow2, 64)
                a2s_ref[pl.ds((b * oh2 + oy2) * ow2, ow2), :] = rows
        a2s_ref[pl.ds(M2, M2P - M2), :] = jnp.zeros((M2P - M2, 64), f32)

        # conv3 (3x3/stride-1) densely on the compact conv2 grid.
        a3 = conv_block(a2s_ref, M2, shifts3, 64, w3_ref, b3_ref, 4)  # (M2, 64)
        a3_ref[pl.ds(0, M2), :] = a3

        # fc1: gather the valid conv3 outputs position-major (matching the
        # torch (C,H,W) flatten via the fc1 weight repack) and do one matmul.
        cp_fc.wait()
        cols = []
        for p in range(npos):
            y, xk = p // ow3, p % ow3
            r = y * ow2 + xk
            cols.append(jnp.concatenate(
                [a3_ref[pl.ds(b * oh2 * ow2 + r, 1), :] for b in range(B)],
                axis=0))                                              # (B, 64)
        h_in = jnp.concatenate(cols, axis=1).astype(bf16)             # (B, npos*64)
        h = jnp.maximum(
            jnp.dot(h_in, fcw_vm[...], preferred_element_type=f32) + fcb_ref[...],
            0.0)                                                      # (B, 512)

        # head, written as a lane-dense 128-wide slab (sliced outside).
        cp_hd.wait()
        out = jnp.dot(h.astype(bf16), hw_vm[...],
                      preferred_element_type=f32) + hb_ref[...]
        out_ref[...] = out.astype(out_ref.dtype)

    return kernel


# ----------------------------------------------------------------------------
# One-time parameter repack (bf16) + pallas_call construction.
# ----------------------------------------------------------------------------
def prepare_dqn_big(params, x_shape):
    B, C, H, W = x_shape
    assert C == 4, "DQN_Big expects 4 input channels"
    oh1, ow1 = conv2d_size_out(H, 8, 4), conv2d_size_out(W, 8, 4)
    oh2, ow2 = conv2d_size_out(oh1, 4, 2), conv2d_size_out(ow1, 4, 2)
    oh3, ow3 = conv2d_size_out(oh2, 3, 1), conv2d_size_out(ow2, 3, 1)
    assert oh3 >= 1 and ow3 >= 1, "input too small for DQN_Big conv trunk"
    ph, pw = oh1 + 1, ow1 + 1                 # 4x4 space-to-depth grid dims
    N1 = B * ph * pw
    XS_ROWS = _round_up(N1 + pw + 2, 8)       # conv1 shift slack (zero padded)
    N1P = _round_up(N1 + 3 * pw + 3, 8)       # conv2 shift slack (zeroed in kernel)
    M2 = B * oh2 * ow2
    M2P = _round_up(M2 + 2 * ow2 + 2, 8)      # conv3 shift slack
    npos = oh3 * ow3
    n_out = params["headw"].shape[0]
    n_pad = _round_up(max(n_out, 128), 128)

    bf16 = jnp.bfloat16
    # conv1: (oc,c,8,8) -> per-tap (a,e) x (dy,dx,c) rows -> (256, 32) bf16.
    w1 = params["c1w"].transpose(2, 3, 1, 0)                         # (ky,kx,c,oc)
    w1 = w1.reshape(2, 4, 2, 4, 4, 32).transpose(0, 2, 1, 3, 4, 5)   # (a,e,dy,dx,c,oc)
    w1 = w1.reshape(4 * 64, 32).astype(bf16)
    # conv2: (64,32,4,4) -> rows (ky,kx,c) -> (512, 64) bf16.
    w2 = params["c2w"].transpose(2, 3, 1, 0).reshape(16 * 32, 64).astype(bf16)
    # conv3: (64,64,3,3) -> rows (ky,kx,c) -> (576, 64) bf16.
    w3 = params["c3w"].transpose(2, 3, 1, 0).reshape(9 * 64, 64).astype(bf16)
    # fc1: torch flatten order (c,y,x) -> rows (p=(y,x), c) -> (npos*64, 512).
    fcw = params["fc1w"].reshape(512, 64, oh3, ow3)
    fcw = fcw.transpose(2, 3, 1, 0).reshape(npos * 64, 512).astype(bf16)
    # head: (n_out, 512) -> lane-dense padded (512, n_pad) bf16.
    hw = jnp.zeros((512, n_pad), jnp.float32).at[:, :n_out].set(
        params["headw"].T).astype(bf16)
    hb = jnp.zeros((1, n_pad), jnp.float32).at[0, :n_out].set(params["headb"])

    b1 = params["c1b"].reshape(1, 32).astype(jnp.float32)
    b2 = params["c2b"].reshape(1, 64).astype(jnp.float32)
    b3 = params["c3b"].reshape(1, 64).astype(jnp.float32)
    fcb = params["fc1b"].reshape(1, 512).astype(jnp.float32)

    cfg = dict(B=B, ph=ph, pw=pw, oh2=oh2, ow2=ow2, oh3=oh3, ow3=ow3,
               N1=N1, N1P=N1P, M2=M2, M2P=M2P, n_out=n_out, n_pad=n_pad)
    kernel = _build_kernel(cfg)

    def zmap(ndim):
        return lambda i: (0,) * ndim

    vmem_in_shapes = [(XS_ROWS, 64), w1.shape, b1.shape, w2.shape, b2.shape,
                      w3.shape, b3.shape, fcb.shape, hb.shape]
    in_specs = [pl.BlockSpec(s, zmap(len(s))) for s in vmem_in_shapes]
    in_specs += [pl.BlockSpec(memory_space=pl.ANY),    # fc1 weight (HBM, manual DMA)
                 pl.BlockSpec(memory_space=pl.ANY)]    # head weight (HBM, manual DMA)

    scratch_shapes = [
        pltpu.VMEM((N1P, 32), jnp.float32),                 # a1 (padded)
        pltpu.VMEM((_round_up(N1, 8), 64), jnp.float32),    # a2 dense
        pltpu.VMEM((M2P, 64), jnp.float32),                 # a2 compact (padded)
        pltpu.VMEM((_round_up(M2, 8), 64), jnp.float32),    # a3
        pltpu.VMEM((npos * 64, 512), bf16),                 # fc1 weight landing buffer
        pltpu.VMEM((512, n_pad), bf16),                     # head weight landing buffer
        pltpu.SemaphoreType.DMA((2,)),
    ]

    pc = pl.pallas_call(
        kernel,
        out_shape=jax.ShapeDtypeStruct((B, n_pad), jnp.float32),
        grid=(1,),
        in_specs=in_specs,
        out_specs=pl.BlockSpec((B, n_pad), zmap(2)),
        scratch_shapes=scratch_shapes,
        compiler_params=pltpu.CompilerParams(
            dimension_semantics=("arbitrary",),
            vmem_limit_bytes=32 * 1024 * 1024),
    )

    weight_args = (w1, b1, w2, b2, w3, b3, fcb, hb, fcw, hw)

    def apply_fn(x):
        # Single input layout transform: NCHW -> NHWC -> 4x4 space-to-depth,
        # plus zero rows for the conv1 shift slack.  (Fuses under jit.)
        xh = jnp.transpose(x, (0, 2, 3, 1))[:, :4 * ph, :4 * pw, :]
        xs = xh.reshape(B, ph, 4, pw, 4, C).transpose(0, 1, 3, 2, 4, 5)
        xs = xs.reshape(N1, 4 * 4 * C).astype(jnp.float32)
        xs = jnp.concatenate(
            [xs, jnp.zeros((XS_ROWS - N1, 4 * 4 * C), jnp.float32)], axis=0)
        out = pc(xs, *weight_args)
        return out[:, :n_out]

    return dict(cfg=cfg, apply=jax.jit(apply_fn))


def dqn_big_apply(prep, x):
    return prep["apply"](x)


def dqn_big_forward(params, x):
    return dqn_big_apply(prepare_dqn_big(params, x.shape), x)


# ----------------------------------------------------------------------------
# Deterministic parameter init (PyTorch-default-style uniform bounds).
# ----------------------------------------------------------------------------
def _init_uniform(key, shape, fan_in):
    bound = 1.0 / math.sqrt(fan_in)
    return jax.random.uniform(key, shape, jnp.float32, -bound, bound)


def init_dqn_big_params(key, height, width, n_outputs):
    convw = conv2d_size_out(conv2d_size_out(conv2d_size_out(width, 8, 4), 4, 2), 3, 1)
    convh = conv2d_size_out(conv2d_size_out(conv2d_size_out(height, 8, 4), 4, 2), 3, 1)
    lin_in = convw * convh * 64
    ks = jax.random.split(key, 10)
    return {
        "c1w": _init_uniform(ks[0], (32, 4, 8, 8), 4 * 8 * 8),
        "c1b": _init_uniform(ks[1], (32,), 4 * 8 * 8),
        "c2w": _init_uniform(ks[2], (64, 32, 4, 4), 32 * 4 * 4),
        "c2b": _init_uniform(ks[3], (64,), 32 * 4 * 4),
        "c3w": _init_uniform(ks[4], (64, 64, 3, 3), 64 * 3 * 3),
        "c3b": _init_uniform(ks[5], (64,), 64 * 3 * 3),
        "fc1w": _init_uniform(ks[6], (512, lin_in), lin_in),
        "fc1b": _init_uniform(ks[7], (512,), lin_in),
        "headw": _init_uniform(ks[8], (n_outputs, 512), 512),
        "headb": _init_uniform(ks[9], (n_outputs,), 512),
    }


# ----------------------------------------------------------------------------
# Pure-JAX reference (mirrors the PyTorch module) for a correctness check.
# ----------------------------------------------------------------------------
def _reference_forward(params, x):
    def conv(inp, w, b, s):
        y = jax.lax.conv_general_dilated(
            inp, w, window_strides=(s, s), padding="VALID",
            dimension_numbers=("NCHW", "OIHW", "NCHW"),
            precision=jax.lax.Precision.HIGHEST)
        return jax.nn.relu(y + b[None, :, None, None])

    y = conv(x, params["c1w"], params["c1b"], 4)
    y = conv(y, params["c2w"], params["c2b"], 2)
    y = conv(y, params["c3w"], params["c3b"], 1)
    flat = y.reshape(y.shape[0], -1)
    h = jax.nn.relu(jnp.dot(flat, params["fc1w"].T,
                            precision=jax.lax.Precision.HIGHEST) + params["fc1b"])
    return jnp.dot(h, params["headw"].T,
                   precision=jax.lax.Precision.HIGHEST) + params["headb"]


if __name__ == "__main__":
    B, C, N_OUTPUTS = 2, 4, 6
    # 36x36 -> 1x1 conv trunk (lin_in=64); 52x52 -> 3x3 trunk (lin_in=576).
    for (H, W) in [(36, 36), (52, 52)]:
        key = jax.random.PRNGKey(0)
        k_params, k_x = jax.random.split(key)
        params = init_dqn_big_params(k_params, H, W, N_OUTPUTS)
        x = jax.random.normal(k_x, (B, C, H, W), jnp.float32)

        prep = prepare_dqn_big(params, x.shape)
        out = jax.block_until_ready(dqn_big_apply(prep, x))
        assert out.shape == (B, N_OUTPUTS)

        ref = jax.block_until_ready(_reference_forward(params, x))
        err = float(jnp.max(jnp.abs(out - ref)))
        scale = float(jnp.max(jnp.abs(ref))) + 1e-6
        # bf16 weights/activations with f32 accumulation => small relative error.
        assert err <= 3e-2 * scale + 1e-3, f"mismatch at {(H, W)}: {err} vs scale {scale}"

    print("KERNEL_OK")
</pallas_src>

<mosaic_0001>
module attributes {stable_mosaic.version = 11 : i64} {
  func.func @kernel(%arg0: i32, %arg1: memref<176x64xf32, #tpu.memory_space<vmem>>, %arg2: memref<256x32xbf16, #tpu.memory_space<vmem>>, %arg3: memref<1x32xf32, #tpu.memory_space<vmem>>, %arg4: memref<512x64xbf16, #tpu.memory_space<vmem>>, %arg5: memref<1x64xf32, #tpu.memory_space<vmem>>, %arg6: memref<576x64xbf16, #tpu.memory_space<vmem>>, %arg7: memref<1x64xf32, #tpu.memory_space<vmem>>, %arg8: memref<1x512xf32, #tpu.memory_space<vmem>>, %arg9: memref<1x128xf32, #tpu.memory_space<vmem>>, %arg10: memref<64x512xbf16, #tpu.memory_space<any>>, %arg11: memref<512x128xbf16, #tpu.memory_space<any>>, %arg12: memref<2x128xf32, #tpu.memory_space<vmem>>, %arg13: memref<192x32xf32, #tpu.memory_space<vmem>>, %arg14: memref<168x64xf32, #tpu.memory_space<vmem>>, %arg15: memref<32x64xf32, #tpu.memory_space<vmem>>, %arg16: memref<24x64xf32, #tpu.memory_space<vmem>>, %arg17: memref<64x512xbf16, #tpu.memory_space<vmem>>, %arg18: memref<512x128xbf16, #tpu.memory_space<vmem>>, %arg19: memref<2x!tpu.dma_semaphore, #tpu.memory_space<semaphore_mem>>) attributes {dimension_semantics = [#tpu.dimension_semantics<arbitrary>], iteration_bounds = array<i64: 1>, scalar_prefetch = 0 : i64, scratch_operands = 7 : i64, tpu.core_type = #tpu.core_type<tc>, window_params = [{pipeline_mode = #tpu.pipeline_mode<synchronous>, transform_indices = @transform_0, window_bounds = array<i64: 176, 64>}, {pipeline_mode = #tpu.pipeline_mode<synchronous>, transform_indices = @transform_1, window_bounds = array<i64: 256, 32>}, {pipeline_mode = #tpu.pipeline_mode<synchronous>, transform_indices = @transform_2, window_bounds = array<i64: 1, 32>}, {pipeline_mode = #tpu.pipeline_mode<synchronous>, transform_indices = @transform_3, window_bounds = array<i64: 512, 64>}, {pipeline_mode = #tpu.pipeline_mode<synchronous>, transform_indices = @transform_4, window_bounds = array<i64: 1, 64>}, {pipeline_mode = #tpu.pipeline_mode<synchronous>, transform_indices = @transform_5, window_bounds = array<i64: 576, 64>}, {pipeline_mode = #tpu.pipeline_mode<synchronous>, transform_indices = @transform_6, window_bounds = array<i64: 1, 64>}, {pipeline_mode = #tpu.pipeline_mode<synchronous>, transform_indices = @transform_7, window_bounds = array<i64: 1, 512>}, {pipeline_mode = #tpu.pipeline_mode<synchronous>, transform_indices = @transform_8, window_bounds = array<i64: 1, 128>}, {}, {}, {pipeline_mode = #tpu.pipeline_mode<synchronous>, transform_indices = @transform_11, window_bounds = array<i64: 2, 128>}]} {
    %c0_i32 = arith.constant 0 : i32
    %0 = tpu.memref_slice %arg19[%c0_i32] : memref<2x!tpu.dma_semaphore, #tpu.memory_space<semaphore_mem>> -> memref<1x!tpu.dma_semaphore, #tpu.memory_space<semaphore_mem>>
    %1 = tpu.memref_squeeze %0 : memref<1x!tpu.dma_semaphore, #tpu.memory_space<semaphore_mem>> -> memref<!tpu.dma_semaphore, #tpu.memory_space<semaphore_mem>>
    tpu.enqueue_dma source(%arg10 : memref<64x512xbf16, #tpu.memory_space<any>>) target(%arg17 : memref<64x512xbf16, #tpu.memory_space<vmem>>) target_semaphore(%1 : memref<!tpu.dma_semaphore, #tpu.memory_space<semaphore_mem>>)
    %c1_i32 = arith.constant 1 : i32
    %2 = tpu.memref_slice %arg19[%c1_i32] : memref<2x!tpu.dma_semaphore, #tpu.memory_space<semaphore_mem>> -> memref<1x!tpu.dma_semaphore, #tpu.memory_space<semaphore_mem>>
    %3 = tpu.memref_squeeze %2 : memref<1x!tpu.dma_semaphore, #tpu.memory_space<semaphore_mem>> -> memref<!tpu.dma_semaphore, #tpu.memory_space<semaphore_mem>>
    tpu.enqueue_dma source(%arg11 : memref<512x128xbf16, #tpu.memory_space<any>>) target(%arg18 : memref<512x128xbf16, #tpu.memory_space<vmem>>) target_semaphore(%3 : memref<!tpu.dma_semaphore, #tpu.memory_space<semaphore_mem>>)
    %c0 = arith.constant 0 : index
    %c0_0 = arith.constant 0 : index
    %4 = vector.load %arg1[%c0, %c0_0] : memref<176x64xf32, #tpu.memory_space<vmem>>, vector<162x64xf32>
    %c1 = arith.constant 1 : index
    %c0_1 = arith.constant 0 : index
    %5 = vector.load %arg1[%c1, %c0_1] : memref<176x64xf32, #tpu.memory_space<vmem>>, vector<162x64xf32>
    %c9 = arith.constant 9 : index
    %c0_2 = arith.constant 0 : index
    %6 = vector.load %arg1[%c9, %c0_2] : memref<176x64xf32, #tpu.memory_space<vmem>>, vector<162x64xf32>
    %c10 = arith.constant 10 : index
    %c0_3 = arith.constant 0 : index
    %7 = vector.load %arg1[%c10, %c0_3] : memref<176x64xf32, #tpu.memory_space<vmem>>, vector<162x64xf32>
    %8 = tpu.concatenate %4, %5, %6, %7 in 1 : vector<162x64xf32>, vector<162x64xf32>, vector<162x64xf32>, vector<162x64xf32> -> vector<162x256xf32>
    %9 = arith.truncf %8 : vector<162x256xf32> to vector<162x256xbf16>
    %c0_4 = arith.constant 0 : index
    %c0_5 = arith.constant 0 : index
    %10 = vector.load %arg2[%c0_4, %c0_5] : memref<256x32xbf16, #tpu.memory_space<vmem>>, vector<256x32xbf16>
    %cst = arith.constant dense<0.000000e+00> : vector<162x32xf32>
    %11 = tpu.matmul %9, %10, %cst {dimension_numbers = #tpu.dot_dimension_numbers<[1], [0], [0], [1], [0, 0, 1, 1], [], []>} : vector<162x256xbf16>, vector<256x32xbf16>, vector<162x32xf32> -> vector<162x32xf32>
    %c0_6 = arith.constant 0 : index
    %c0_7 = arith.constant 0 : index
    %12 = vector.load %arg3[%c0_6, %c0_7] : memref<1x32xf32, #tpu.memory_space<vmem>>, vector<1x32xf32>
    %13 = vector.broadcast %12 : vector<1x32xf32> to vector<162x32xf32>
    %14 = arith.addf %11, %13 : vector<162x32xf32>
    %cst_8 = arith.constant 0.000000e+00 : f32
    %15 = vector.broadcast %cst_8 : f32 to vector<162x32xf32>
    %16 = arith.maximumf %14, %15 : vector<162x32xf32>
    %c0_9 = arith.constant 0 : index
    %c0_10 = arith.constant 0 : index
    %17 = vector.load %arg13[%c0_9, %c0_10] : memref<192x32xf32, #tpu.memory_space<vmem>>, vector<162x32xf32>
    tpu.vector_store %arg13[%c0_9, %c0_10], %16 {strides = array<i32>} : memref<192x32xf32, #tpu.memory_space<vmem>>, vector<162x32xf32>,
    %cst_11 = arith.constant 0.000000e+00 : f32
    %18 = vector.broadcast %cst_11 : f32 to vector<30x32xf32>
    %c162 = arith.constant 162 : index
    %c0_12 = arith.constant 0 : index
    %19 = vector.load %arg13[%c162, %c0_12] : memref<192x32xf32, #tpu.memory_space<vmem>>, vector<30x32xf32>
    tpu.vector_store %arg13[%c162, %c0_12], %18 {strides = array<i32>} : memref<192x32xf32, #tpu.memory_space<vmem>>, vector<30x32xf32>,
    %c0_13 = arith.constant 0 : index
    %c0_14 = arith.constant 0 : index
    %20 = vector.load %arg13[%c0_13, %c0_14] : memref<192x32xf32, #tpu.memory_space<vmem>>, vector<162x32xf32>
    %c1_15 = arith.constant 1 : index
    %c0_16 = arith.constant 0 : index
    %21 = vector.load %arg13[%c1_15, %c0_16] : memref<192x32xf32, #tpu.memory_space<vmem>>, vector<162x32xf32>
    %c2 = arith.constant 2 : index
    %c0_17 = arith.constant 0 : index
    %22 = vector.load %arg13[%c2, %c0_17] : memref<192x32xf32, #tpu.memory_space<vmem>>, vector<162x32xf32>
    %c3 = arith.constant 3 : index
    %c0_18 = arith.constant 0 : index
    %23 = vector.load %arg13[%c3, %c0_18] : memref<192x32xf32, #tpu.memory_space<vmem>>, vector<162x32xf32>
    %c9_19 = arith.constant 9 : index
    %c0_20 = arith.constant 0 : index
    %24 = vector.load %arg13[%c9_19, %c0_20] : memref<192x32xf32, #tpu.memory_space<vmem>>, vector<162x32xf32>
    %c10_21 = arith.constant 10 : index
    %c0_22 = arith.constant 0 : index
    %25 = vector.load %arg13[%c10_21, %c0_22] : memref<192x32xf32, #tpu.memory_space<vmem>>, vector<162x32xf32>
    %c11 = arith.constant 11 : index
    %c0_23 = arith.constant 0 : index
    %26 = vector.load %arg13[%c11, %c0_23] : memref<192x32xf32, #tpu.memory_space<vmem>>, vector<162x32xf32>
    %c12 = arith.constant 12 : index
    %c0_24 = arith.constant 0 : index
    %27 = vector.load %arg13[%c12, %c0_24] : memref<192x32xf32, #tpu.memory_space<vmem>>, vector<162x32xf32>
    %28 = tpu.concatenate %20, %21, %22, %23, %24, %25, %26, %27 in 1 : vector<162x32xf32>, vector<162x32xf32>, vector<162x32xf32>, vector<162x32xf32>, vector<162x32xf32>, vector<162x32xf32>, vector<162x32xf32>, vector<162x32xf32> -> vector<162x256xf32>
    %29 = arith.truncf %28 : vector<162x256xf32> to vector<162x256xbf16>
    %c0_25 = arith.constant 0 : index
    %c0_26 = arith.constant 0 : index
    %30 = vector.load %arg4[%c0_25, %c0_26] : memref<512x64xbf16, #tpu.memory_space<vmem>>, vector<256x64xbf16>
    %cst_27 = arith.constant dense<0.000000e+00> : vector<162x64xf32>
    %31 = tpu.matmul %29, %30, %cst_27 {dimension_numbers = #tpu.dot_dimension_numbers<[1], [0], [0], [1], [0, 0, 1, 1], [], []>} : vector<162x256xbf16>, vector<256x64xbf16>, vector<162x64xf32> -> vector<162x64xf32>
    %c18 = arith.constant 18 : index
    %c0_28 = arith.constant 0 : index
    %32 = vector.load %arg13[%c18, %c0_28] : memref<192x32xf32, #tpu.memory_space<vmem>>, vector<162x32xf32>
    %c19 = arith.constant 19 : index
    %c0_29 = arith.constant 0 : index
    %33 = vector.load %arg13[%c19, %c0_29] : memref<192x32xf32, #tpu.memory_space<vmem>>, vector<162x32xf32>
    %c20 = arith.constant 20 : index
    %c0_30 = arith.constant 0 : index
    %34 = vector.load %arg13[%c20, %c0_30] : memref<192x32xf32, #tpu.memory_space<vmem>>, vector<162x32xf32>
    %c21 = arith.constant 21 : index
    %c0_31 = arith.constant 0 : index
    %35 = vector.load %arg13[%c21, %c0_31] : memref<192x32xf32, #tpu.memory_space<vmem>>, vector<162x32xf32>
    %c27 = arith.constant 27 : index
    %c0_32 = arith.constant 0 : index
    %36 = vector.load %arg13[%c27, %c0_32] : memref<192x32xf32, #tpu.memory_space<vmem>>, vector<162x32xf32>
    %c28 = arith.constant 28 : index
    %c0_33 = arith.constant 0 : index
    %37 = vector.load %arg13[%c28, %c0_33] : memref<192x32xf32, #tpu.memory_space<vmem>>, vector<162x32xf32>
    %c29 = arith.constant 29 : index
    %c0_34 = arith.constant 0 : index
    %38 = vector.load %arg13[%c29, %c0_34] : memref<192x32xf32, #tpu.memory_space<vmem>>, vector<162x32xf32>
    %c30 = arith.constant 30 : index
    %c0_35 = arith.constant 0 : index
    %39 = vector.load %arg13[%c30, %c0_35] : memref<192x32xf32, #tpu.memory_space<vmem>>, vector<162x32xf32>
    %40 = tpu.concatenate %32, %33, %34, %35, %36, %37, %38, %39 in 1 : vector<162x32xf32>, vector<162x32xf32>, vector<162x32xf32>, vector<162x32xf32>, vector<162x32xf32>, vector<162x32xf32>, vector<162x32xf32>, vector<162x32xf32> -> vector<162x256xf32>
    %41 = arith.truncf %40 : vector<162x256xf32> to vector<162x256xbf16>
    %c256 = arith.constant 256 : index
    %c0_36 = arith.constant 0 : index
    %42 = vector.load %arg4[%c256, %c0_36] : memref<512x64xbf16, #tpu.memory_space<vmem>>, vector<256x64xbf16>
    %cst_37 = arith.constant dense<0.000000e+00> : vector<162x64xf32>
    %43 = tpu.matmul %41, %42, %cst_37 {dimension_numbers = #tpu.dot_dimension_numbers<[1], [0], [0], [1], [0, 0, 1, 1], [], []>} : vector<162x256xbf16>, vector<256x64xbf16>, vector<162x64xf32> -> vector<162x64xf32>
    %44 = arith.addf %31, %43 : vector<162x64xf32>
    %c0_38 = arith.constant 0 : index
    %c0_39 = arith.constant 0 : index
    %45 = vector.load %arg5[%c0_38, %c0_39] : memref<1x64xf32, #tpu.memory_space<vmem>>, vector<1x64xf32>
    %46 = vector.broadcast %45 : vector<1x64xf32> to vector<162x64xf32>
    %47 = arith.addf %44, %46 : vector<162x64xf32>
    %cst_40 = arith.constant 0.000000e+00 : f32
    %48 = vector.broadcast %cst_40 : f32 to vector<162x64xf32>
    %49 = arith.maximumf %47, %48 : vector<162x64xf32>
    %c0_41 = arith.constant 0 : index
    %c0_42 = arith.constant 0 : index
    %50 = vector.load %arg14[%c0_41, %c0_42] : memref<168x64xf32, #tpu.memory_space<vmem>>, vector<162x64xf32>
    tpu.vector_store %arg14[%c0_41, %c0_42], %49 {strides = array<i32>} : memref<168x64xf32, #tpu.memory_space<vmem>>, vector<162x64xf32>,
    %c0_43 = arith.constant 0 : index
    %c0_44 = arith.constant 0 : index
    %51 = vector.load %arg14[%c0_43, %c0_44] : memref<168x64xf32, #tpu.memory_space<vmem>>, vector<1x64xf32>
    %c2_45 = arith.constant 2 : index
    %c0_46 = arith.constant 0 : index
    %52 = vector.load %arg14[%c2_45, %c0_46] : memref<168x64xf32, #tpu.memory_space<vmem>>, vector<1x64xf32>
    %c4 = arith.constant 4 : index
    %c0_47 = arith.constant 0 : index
    %53 = vector.load %arg14[%c4, %c0_47] : memref<168x64xf32, #tpu.memory_space<vmem>>, vector<1x64xf32>
    %54 = tpu.concatenate %51, %52, %53 in 0 : vector<1x64xf32>, vector<1x64xf32>, vector<1x64xf32> -> vector<3x64xf32>
    %c0_48 = arith.constant 0 : index
    %c0_49 = arith.constant 0 : index
    %55 = vector.load %arg15[%c0_48, %c0_49] : memref<32x64xf32, #tpu.memory_space<vmem>>, vector<3x64xf32>
    tpu.vector_store %arg15[%c0_48, %c0_49], %54 {strides = array<i32>} : memref<32x64xf32, #tpu.memory_space<vmem>>, vector<3x64xf32>,
    %c18_50 = arith.constant 18 : index
    %c0_51 = arith.constant 0 : index
    %56 = vector.load %arg14[%c18_50, %c0_51] : memref<168x64xf32, #tpu.memory_space<vmem>>, vector<1x64xf32>
    %c20_52 = arith.constant 20 : index
    %c0_53 = arith.constant 0 : index
    %57 = vector.load %arg14[%c20_52, %c0_53] : memref<168x64xf32, #tpu.memory_space<vmem>>, vector<1x64xf32>
    %c22 = arith.constant 22 : index
    %c0_54 = arith.constant 0 : index
    %58 = vector.load %arg14[%c22, %c0_54] : memref<168x64xf32, #tpu.memory_space<vmem>>, vector<1x64xf32>
    %59 = tpu.concatenate %56, %57, %58 in 0 : vector<1x64xf32>, vector<1x64xf32>, vector<1x64xf32> -> vector<3x64xf32>
    %c3_55 = arith.constant 3 : index
    %c0_56 = arith.constant 0 : index
    %60 = vector.load %arg15[%c3_55, %c0_56] : memref<32x64xf32, #tpu.memory_space<vmem>>, vector<3x64xf32>
    tpu.vector_store %arg15[%c3_55, %c0_56], %59 {strides = array<i32>} : memref<32x64xf32, #tpu.memory_space<vmem>>, vector<3x64xf32>,
    %c36 = arith.constant 36 : index
    %c0_57 = arith.constant 0 : index
    %61 = vector.load %arg14[%c36, %c0_57] : memref<168x64xf32, #tpu.memory_space<vmem>>, vector<1x64xf32>
    %c38 = arith.constant 38 : index
    %c0_58 = arith.constant 0 : index
    %62 = vector.load %arg14[%c38, %c0_58] : memref<168x64xf32, #tpu.memory_space<vmem>>, vector<1x64xf32>
    %c40 = arith.constant 40 : index
    %c0_59 = arith.constant 0 : index
    %63 = vector.load %arg14[%c40, %c0_59] : memref<168x64xf32, #tpu.memory_space<vmem>>, vector<1x64xf32>
    %64 = tpu.concatenate %61, %62, %63 in 0 : vector<1x64xf32>, vector<1x64xf32>, vector<1x64xf32> -> vector<3x64xf32>
    %c6 = arith.constant 6 : index
    %c0_60 = arith.constant 0 : index
    %65 = vector.load %arg15[%c6, %c0_60] : memref<32x64xf32, #tpu.memory_space<vmem>>, vector<3x64xf32>
    tpu.vector_store %arg15[%c6, %c0_60], %64 {strides = array<i32>} : memref<32x64xf32, #tpu.memory_space<vmem>>, vector<3x64xf32>,
    %c81 = arith.constant 81 : index
    %c0_61 = arith.constant 0 : index
    %66 = vector.load %arg14[%c81, %c0_61] : memref<168x64xf32, #tpu.memory_space<vmem>>, vector<1x64xf32>
    %c83 = arith.constant 83 : index
    %c0_62 = arith.constant 0 : index
    %67 = vector.load %arg14[%c83, %c0_62] : memref<168x64xf32, #tpu.memory_space<vmem>>, vector<1x64xf32>
    %c85 = arith.constant 85 : index
    %c0_63 = arith.constant 0 : index
    %68 = vector.load %arg14[%c85, %c0_63] : memref<168x64xf32, #tpu.memory_space<vmem>>, vector<1x64xf32>
    %69 = tpu.concatenate %66, %67, %68 in 0 : vector<1x64xf32>, vector<1x64xf32>, vector<1x64xf32> -> vector<3x64xf32>
    %c9_64 = arith.constant 9 : index
    %c0_65 = arith.constant 0 : index
    %70 = vector.load %arg15[%c9_64, %c0_65] : memref<32x64xf32, #tpu.memory_space<vmem>>, vector<3x64xf32>
    tpu.vector_store %arg15[%c9_64, %c0_65], %69 {strides = array<i32>} : memref<32x64xf32, #tpu.memory_space<vmem>>, vector<3x64xf32>,
    %c99 = arith.constant 99 : index
    %c0_66 = arith.constant 0 : index
    %71 = vector.load %arg14[%c99, %c0_66] : memref<168x64xf32, #tpu.memory_space<vmem>>, vector<1x64xf32>
    %c101 = arith.constant 101 : index
    %c0_67 = arith.constant 0 : index
    %72 = vector.load %arg14[%c101, %c0_67] : memref<168x64xf32, #tpu.memory_space<vmem>>, vector<1x64xf32>
    %c103 = arith.constant 103 : index
    %c0_68 = arith.constant 0 : index
    %73 = vector.load %arg14[%c103, %c0_68] : memref<168x64xf32, #tpu.memory_space<vmem>>, vector<1x64xf32>
    %74 = tpu.concatenate %71, %72, %73 in 0 : vector<1x64xf32>, vector<1x64xf32>, vector<1x64xf32> -> vector<3x64xf32>
    %c12_69 = arith.constant 12 : index
    %c0_70 = arith.constant 0 : index
    %75 = vector.load %arg15[%c12_69, %c0_70] : memref<32x64xf32, #tpu.memory_space<vmem>>, vector<3x64xf32>
    tpu.vector_store %arg15[%c12_69, %c0_70], %74 {strides = array<i32>} : memref<32x64xf32, #tpu.memory_space<vmem>>, vector<3x64xf32>,
    %c117 = arith.constant 117 : index
    %c0_71 = arith.constant 0 : index
    %76 = vector.load %arg14[%c117, %c0_71] : memref<168x64xf32, #tpu.memory_space<vmem>>, vector<1x64xf32>
    %c119 = arith.constant 119 : index
    %c0_72 = arith.constant 0 : index
    %77 = vector.load %arg14[%c119, %c0_72] : memref<168x64xf32, #tpu.memory_space<vmem>>, vector<1x64xf32>
    %c121 = arith.constant 121 : index
    %c0_73 = arith.constant 0 : index
    %78 = vector.load %arg14[%c121, %c0_73] : memref<168x64xf32, #tpu.memory_space<vmem>>, vector<1x64xf32>
    %79 = tpu.concatenate %76, %77, %78 in 0 : vector<1x64xf32>, vector<1x64xf32>, vector<1x64xf32> -> vector<3x64xf32>
    %c15 = arith.constant 15 : index
    %c0_74 = arith.constant 0 : index
    %80 = vector.load %arg15[%c15, %c0_74] : memref<32x64xf32, #tpu.memory_space<vmem>>, vector<3x64xf32>
    tpu.vector_store %arg15[%c15, %c0_74], %79 {strides = array<i32>} : memref<32x64xf32, #tpu.memory_space<vmem>>, vector<3x64xf32>,
    %cst_75 = arith.constant 0.000000e+00 : f32
    %81 = vector.broadcast %cst_75 : f32 to vector<14x64xf32>
    %c18_76 = arith.constant 18 : index
    %c0_77 = arith.constant 0 : index
    %82 = vector.load %arg15[%c18_76, %c0_77] : memref<32x64xf32, #tpu.memory_space<vmem>>, vector<14x64xf32>
    tpu.vector_store %arg15[%c18_76, %c0_77], %81 {strides = array<i32>} : memref<32x64xf32, #tpu.memory_space<vmem>>, vector<14x64xf32>,
    %c0_78 = arith.constant 0 : index
    %c0_79 = arith.constant 0 : index
    %83 = vector.load %arg15[%c0_78, %c0_79] : memref<32x64xf32, #tpu.memory_space<vmem>>, vector<18x64xf32>
    %c1_80 = arith.constant 1 : index
    %c0_81 = arith.constant 0 : index
    %84 = vector.load %arg15[%c1_80, %c0_81] : memref<32x64xf32, #tpu.memory_space<vmem>>, vector<18x64xf32>
    %c2_82 = arith.constant 2 : index
    %c0_83 = arith.constant 0 : index
    %85 = vector.load %arg15[%c2_82, %c0_83] : memref<32x64xf32, #tpu.memory_space<vmem>>, vector<18x64xf32>
    %c3_84 = arith.constant 3 : index
    %c0_85 = arith.constant 0 : index
    %86 = vector.load %arg15[%c3_84, %c0_85] : memref<32x64xf32, #tpu.memory_space<vmem>>, vector<18x64xf32>
    %87 = tpu.concatenate %83, %84, %85, %86 in 1 : vector<18x64xf32>, vector<18x64xf32>, vector<18x64xf32>, vector<18x64xf32> -> vector<18x256xf32>
    %88 = arith.truncf %87 : vector<18x256xf32> to vector<18x256xbf16>
    %c0_86 = arith.constant 0 : index
    %c0_87 = arith.constant 0 : index
    %89 = vector.load %arg6[%c0_86, %c0_87] : memref<576x64xbf16, #tpu.memory_space<vmem>>, vector<256x64xbf16>
    %cst_88 = arith.constant dense<0.000000e+00> : vector<18x64xf32>
    %90 = tpu.matmul %88, %89, %cst_88 {dimension_numbers = #tpu.dot_dimension_numbers<[1], [0], [0], [1], [0, 0, 1, 1], [], []>} : vector<18x256xbf16>, vector<256x64xbf16>, vector<18x64xf32> -> vector<18x64xf32>
    %c4_89 = arith.constant 4 : index
    %c0_90 = arith.constant 0 : index
    %91 = vector.load %arg15[%c4_89, %c0_90] : memref<32x64xf32, #tpu.memory_space<vmem>>, vector<18x64xf32>
    %c5 = arith.constant 5 : index
    %c0_91 = arith.constant 0 : index
    %92 = vector.load %arg15[%c5, %c0_91] : memref<32x64xf32, #tpu.memory_space<vmem>>, vector<18x64xf32>
    %c6_92 = arith.constant 6 : index
    %c0_93 = arith.constant 0 : index
    %93 = vector.load %arg15[%c6_92, %c0_93] : memref<32x64xf32, #tpu.memory_space<vmem>>, vector<18x64xf32>
    %c7 = arith.constant 7 : index
    %c0_94 = arith.constant 0 : index
    %94 = vector.load %arg15[%c7, %c0_94] : memref<32x64xf32, #tpu.memory_space<vmem>>, vector<18x64xf32>
    %95 = tpu.concatenate %91, %92, %93, %94 in 1 : vector<18x64xf32>, vector<18x64xf32>, vector<18x64xf32>, vector<18x64xf32> -> vector<18x256xf32>
    %96 = arith.truncf %95 : vector<18x256xf32> to vector<18x256xbf16>
    %c256_95 = arith.constant 256 : index
    %c0_96 = arith.constant 0 : index
    %97 = vector.load %arg6[%c256_95, %c0_96] : memref<576x64xbf16, #tpu.memory_space<vmem>>, vector<256x64xbf16>
    %cst_97 = arith.constant dense<0.000000e+00> : vector<18x64xf32>
    %98 = tpu.matmul %96, %97, %cst_97 {dimension_numbers = #tpu.dot_dimension_numbers<[1], [0], [0], [1], [0, 0, 1, 1], [], []>} : vector<18x256xbf16>, vector<256x64xbf16>, vector<18x64xf32> -> vector<18x64xf32>
    %99 = arith.addf %90, %98 : vector<18x64xf32>
    %c8 = arith.constant 8 : index
    %c0_98 = arith.constant 0 : index
    %100 = vector.load %arg15[%c8, %c0_98] : memref<32x64xf32, #tpu.memory_space<vmem>>, vector<18x64xf32>
    %101 = arith.truncf %100 : vector<18x64xf32> to vector<18x64xbf16>
    %c512 = arith.constant 512 : index
    %c0_99 = arith.constant 0 : index
    %102 = vector.load %arg6[%c512, %c0_99] : memref<576x64xbf16, #tpu.memory_space<vmem>>, vector<64x64xbf16>
    %cst_100 = arith.constant dense<0.000000e+00> : vector<18x64xf32>
    %103 = tpu.matmul %101, %102, %cst_100 {dimension_numbers = #tpu.dot_dimension_numbers<[1], [0], [0], [1], [0, 0, 1, 1], [], []>} : vector<18x64xbf16>, vector<64x64xbf16>, vector<18x64xf32> -> vector<18x64xf32>
    %104 = arith.addf %99, %103 : vector<18x64xf32>
    %c0_101 = arith.constant 0 : index
    %c0_102 = arith.constant 0 : index
    %105 = vector.load %arg7[%c0_101, %c0_102] : memref<1x64xf32, #tpu.memory_space<vmem>>, vector<1x64xf32>
    %106 = vector.broadcast %105 : vector<1x64xf32> to vector<18x64xf32>
    %107 = arith.addf %104, %106 : vector<18x64xf32>
    %cst_103 = arith.constant 0.000000e+00 : f32
    %108 = vector.broadcast %cst_103 : f32 to vector<18x64xf32>
    %109 = arith.maximumf %107, %108 : vector<18x64xf32>
    %c0_104 = arith.constant 0 : index
    %c0_105 = arith.constant 0 : index
    %110 = vector.load %arg16[%c0_104, %c0_105] : memref<24x64xf32, #tpu.memory_space<vmem>>, vector<18x64xf32>
    tpu.vector_store %arg16[%c0_104, %c0_105], %109 {strides = array<i32>} : memref<24x64xf32, #tpu.memory_space<vmem>>, vector<18x64xf32>,
    %c0_i32_106 = arith.constant 0 : i32
    %111 = tpu.memref_slice %arg19[%c0_i32_106] : memref<2x!tpu.dma_semaphore, #tpu.memory_space<semaphore_mem>> -> memref<1x!tpu.dma_semaphore, #tpu.memory_space<semaphore_mem>>
    %112 = tpu.memref_squeeze %111 : memref<1x!tpu.dma_semaphore, #tpu.memory_space<semaphore_mem>> -> memref<!tpu.dma_semaphore, #tpu.memory_space<semaphore_mem>>
    tpu.wait_dma2 semaphore(%112 : memref<!tpu.dma_semaphore, #tpu.memory_space<semaphore_mem>>) src(%arg10 : memref<64x512xbf16, #tpu.memory_space<any>>) dst(%arg17 : memref<64x512xbf16, #tpu.memory_space<vmem>>)
    %c0_107 = arith.constant 0 : index
    %c0_108 = arith.constant 0 : index
    %113 = vector.load %arg16[%c0_107, %c0_108] : memref<24x64xf32, #tpu.memory_space<vmem>>, vector<1x64xf32>
    %c9_109 = arith.constant 9 : index
    %c0_110 = arith.constant 0 : index
    %114 = vector.load %arg16[%c9_109, %c0_110] : memref<24x64xf32, #tpu.memory_space<vmem>>, vector<1x64xf32>
    %115 = tpu.concatenate %113, %114 in 0 : vector<1x64xf32>, vector<1x64xf32> -> vector<2x64xf32>
    %116 = arith.truncf %115 : vector<2x64xf32> to vector<2x64xbf16>
    %c0_111 = arith.constant 0 : index
    %c0_112 = arith.constant 0 : index
    %117 = vector.load %arg17[%c0_111, %c0_112] : memref<64x512xbf16, #tpu.memory_space<vmem>>, vector<64x512xbf16>
    %cst_113 = arith.constant dense<0.000000e+00> : vector<2x512xf32>
    %118 = tpu.matmul %116, %117, %cst_113 {dimension_numbers = #tpu.dot_dimension_numbers<[1], [0], [0], [1], [0, 0, 1, 1], [], []>} : vector<2x64xbf16>, vector<64x512xbf16>, vector<2x512xf32> -> vector<2x512xf32>
    %c0_114 = arith.constant 0 : index
    %c0_115 = arith.constant 0 : index
    %119 = vector.load %arg8[%c0_114, %c0_115] : memref<1x512xf32, #tpu.memory_space<vmem>>, vector<1x512xf32>
    %120 = vector.broadcast %119 : vector<1x512xf32> to vector<2x512xf32>
    %121 = arith.addf %118, %120 : vector<2x512xf32>
    %cst_116 = arith.constant 0.000000e+00 : f32
    %122 = vector.broadcast %cst_116 : f32 to vector<2x512xf32>
    %123 = arith.maximumf %121, %122 : vector<2x512xf32>
    %c1_i32_117 = arith.constant 1 : i32
    %124 = tpu.memref_slice %arg19[%c1_i32_117] : memref<2x!tpu.dma_semaphore, #tpu.memory_space<semaphore_mem>> -> memref<1x!tpu.dma_semaphore, #tpu.memory_space<semaphore_mem>>
    %125 = tpu.memref_squeeze %124 : memref<1x!tpu.dma_semaphore, #tpu.memory_space<semaphore_mem>> -> memref<!tpu.dma_semaphore, #tpu.memory_space<semaphore_mem>>
    tpu.wait_dma2 semaphore(%125 : memref<!tpu.dma_semaphore, #tpu.memory_space<semaphore_mem>>) src(%arg11 : memref<512x128xbf16, #tpu.memory_space<any>>) dst(%arg18 : memref<512x128xbf16, #tpu.memory_space<vmem>>)
    %126 = arith.truncf %123 : vector<2x512xf32> to vector<2x512xbf16>
    %c0_118 = arith.constant 0 : index
    %c0_119 = arith.constant 0 : index
    %127 = vector.load %arg18[%c0_118, %c0_119] : memref<512x128xbf16, #tpu.memory_space<vmem>>, vector<512x128xbf16>
    %cst_120 = arith.constant dense<0.000000e+00> : vector<2x128xf32>
    %128 = tpu.matmul %126, %127, %cst_120 {dimension_numbers = #tpu.dot_dimension_numbers<[1], [0], [0], [1], [0, 0, 1, 1], [], []>} : vector<2x512xbf16>, vector<512x128xbf16>, vector<2x128xf32> -> vector<2x128xf32>
    %c0_121 = arith.constant 0 : index
    %c0_122 = arith.constant 0 : index
    %129 = vector.load %arg9[%c0_121, %c0_122] : memref<1x128xf32, #tpu.memory_space<vmem>>, vector<1x128xf32>
    %130 = vector.broadcast %129 : vector<1x128xf32> to vector<2x128xf32>
    %131 = arith.addf %128, %130 : vector<2x128xf32>
    %c0_123 = arith.constant 0 : index
    %c0_124 = arith.constant 0 : index
    %132 = vector.load %arg12[%c0_123, %c0_124] : memref<2x128xf32, #tpu.memory_space<vmem>>, vector<2x128xf32>
    tpu.vector_store %arg12[%c0_123, %c0_124], %131 {strides = array<i32>} : memref<2x128xf32, #tpu.memory_space<vmem>>, vector<2x128xf32>,
    return
  }
  func.func @transform_0(%arg0: i32) -> (i32, i32) {
    %c0_i32 = arith.constant 0 : i32
    %c0_i32_0 = arith.constant 0 : i32
    %c0_i32_1 = arith.constant 0 : i32
    return %c0_i32, %c0_i32_0 : i32, i32
  }
  func.func @transform_1(%arg0: i32) -> (i32, i32) {
    %c0_i32 = arith.constant 0 : i32
    %c0_i32_0 = arith.constant 0 : i32
    %c0_i32_1 = arith.constant 0 : i32
    return %c0_i32, %c0_i32_0 : i32, i32
  }
  func.func @transform_2(%arg0: i32) -> (i32, i32) {
    %c0_i32 = arith.constant 0 : i32
    %c0_i32_0 = arith.constant 0 : i32
    %c0_i32_1 = arith.constant 0 : i32
    return %c0_i32, %c0_i32_0 : i32, i32
  }
  func.func @transform_3(%arg0: i32) -> (i32, i32) {
    %c0_i32 = arith.constant 0 : i32
    %c0_i32_0 = arith.constant 0 : i32
    %c0_i32_1 = arith.constant 0 : i32
    return %c0_i32, %c0_i32_0 : i32, i32
  }
  func.func @transform_4(%arg0: i32) -> (i32, i32) {
    %c0_i32 = arith.constant 0 : i32
    %c0_i32_0 = arith.constant 0 : i32
    %c0_i32_1 = arith.constant 0 : i32
    return %c0_i32, %c0_i32_0 : i32, i32
  }
  func.func @transform_5(%arg0: i32) -> (i32, i32) {
    %c0_i32 = arith.constant 0 : i32
    %c0_i32_0 = arith.constant 0 : i32
    %c0_i32_1 = arith.constant 0 : i32
    return %c0_i32, %c0_i32_0 : i32, i32
  }
  func.func @transform_6(%arg0: i32) -> (i32, i32) {
    %c0_i32 = arith.constant 0 : i32
    %c0_i32_0 = arith.constant 0 : i32
    %c0_i32_1 = arith.constant 0 : i32
    return %c0_i32, %c0_i32_0 : i32, i32
  }
  func.func @transform_7(%arg0: i32) -> (i32, i32) {
    %c0_i32 = arith.constant 0 : i32
    %c0_i32_0 = arith.constant 0 : i32
    %c0_i32_1 = arith.constant 0 : i32
    return %c0_i32, %c0_i32_0 : i32, i32
  }
  func.func @transform_8(%arg0: i32) -> (i32, i32) {
    %c0_i32 = arith.constant 0 : i32
    %c0_i32_0 = arith.constant 0 : i32
    %c0_i32_1 = arith.constant 0 : i32
    return %c0_i32, %c0_i32_0 : i32, i32
  }
  func.func @transform_11(%arg0: i32) -> (i32, i32) {
    %c0_i32 = arith.constant 0 : i32
    %c0_i32_0 = arith.constant 0 : i32
    %c0_i32_1 = arith.constant 0 : i32
    return %c0_i32, %c0_i32_0 : i32, i32
  }
}

</mosaic_0001>

<llo_original>
// kernel: apply_fn.1
$region0: #{apply_fn.1}
  #allocation0 [shape = 'u32[]', space=smem, size = 0x4, offset = 0x4, fixed_abs, tag = 'smem constant byte address 0x4 - core index']
  #allocation1 [shape = 'u32[144,128]{1,0:T(1,128)}', space=vmem, size = 0x12000, scoped, tag = 'internal scratch']
  #allocation2 [shape = 'f32[192,32]{1,0:T(8,128)}', space=vmem, size = 0x18000, scoped, tag = 'scratch operand']
  #allocation3 [shape = 'f32[168,64]{1,0:T(8,128)}', space=vmem, size = 0x15000, scoped, tag = 'scratch operand']
  #allocation4 [shape = 'f32[32,64]{1,0:T(8,128)}', space=vmem, size = 0x4000, scoped, tag = 'scratch operand']
  #allocation5 [shape = 'f32[24,64]{1,0:T(8,128)}', space=vmem, size = 0x3000, scoped, tag = 'scratch operand']
  #allocation6 [shape = 'bf16[64,512]{1,0:T(8,128)(2,1)}', space=vmem, size = 0x10000, scoped, tag = 'scratch operand']
  #allocation7 [shape = 'bf16[512,128]{1,0:T(8,128)(2,1)}', space=vmem, size = 0x20000, scoped, tag = 'scratch operand']
  #allocation8 [shape = 's32[2]{0}', space=sflag, size = 0x8, scoped, tag = 'scratch operand']
  #allocation11 [shape = 's32[]', space=sflag, size = 0x4, offset = 0, fixed_abs, tag = 'sflag constant byte address 0x0 - dummy sync flag']
  #allocation12 [shape = 's32[]', space=sflag, size = 0x4, offset = 0, fixed_abs, tag = 'sflag constant byte address 0x0 - dummy sync flag']
  %s0 = inlined_call_operand.vmem [shape: f32[176,64], index: 0, kind: input, shape index: {}]
  %s1 = inlined_call_operand.vmem [shape: bf16[256,32], index: 1, kind: input, shape index: {}]
  %s2 = inlined_call_operand.vmem [shape: f32[1,32], index: 2, kind: input, shape index: {}]
  %s3 = inlined_call_operand.vmem [shape: bf16[512,64], index: 3, kind: input, shape index: {}]
  %s4 = inlined_call_operand.vmem [shape: f32[1,64], index: 4, kind: input, shape index: {}]
  %s5 = inlined_call_operand.vmem [shape: bf16[576,64], index: 5, kind: input, shape index: {}]
  %s6 = inlined_call_operand.vmem [shape: f32[1,64], index: 6, kind: input, shape index: {}]
  %s7 = inlined_call_operand.vmem [shape: f32[1,512], index: 7, kind: input, shape index: {}]
  %s8 = inlined_call_operand.vmem [shape: f32[1,128], index: 8, kind: input, shape index: {}]
  %s9 = inlined_call_operand.vmem [shape: bf16[64,512], index: 9, kind: input, shape index: {}]
  %s10 = inlined_call_operand.vmem [shape: bf16[512,128], index: 10, kind: input, shape index: {}]
  %s11 = inlined_call_operand.hbm [shape: f32[2,128], index: 11, kind: output, shape index: {}]
  %s12 = sld [smem:[#allocation0]]
  $region114: #{apply_fn.1} parent=0
    _
  %s14 = ssub.s32 1, %s12
  %s15 = scalar_select 0, %s14, %s12
  $region1: #{apply_fn.1} parent=0
    #allocation9 [shape = 'u8[1024]{0}', space=vmem, size = 0x400, scoped, tag = 'output window, operand 0, single buffered']
    #allocation10 [shape = 's32[1]{0}', space=sflag, size = 0x4, scoped, tag = 'scoped memory for apply_fn.1']
    %16 = vsyncpa [#allocation10], 0
    // Predicated region
    $region2: #{apply_fn.1} parent=1 // pred_check
      _
    $region3: #{apply_fn.1} parent=1 // pred_check_branch
      %18 = sbr.rel (0) target = $region5
    $region4: #{apply_fn.1} parent=1 // pred_region
      _
    $region5: #{apply_fn.1} parent=1 // pred_fallthru
      _
    // Predicated region
    $region6: #{apply_fn.1} parent=1 // pred_check
      _
    $region7: #{apply_fn.1} parent=1 // pred_check_branch
      %20 = sbr.rel (0) target = $region9
    $region8: #{apply_fn.1} parent=1 // pred_region
      _
    $region9: #{apply_fn.1} parent=1 // pred_fallthru
      _
    // Predicated region
    $region10: #{apply_fn.1} parent=1 // pred_check
      _
    $region11: #{apply_fn.1} parent=1 // pred_check_branch
      %22 = sbr.rel (0) target = $region13
    $region12: #{apply_fn.1} parent=1 // pred_region
      _
    $region13: #{apply_fn.1} parent=1 // pred_fallthru
      _
    // Predicated region
    $region14: #{apply_fn.1} parent=1 // pred_check
      _
    $region15: #{apply_fn.1} parent=1 // pred_check_branch
      %24 = sbr.rel (0) target = $region17
    $region16: #{apply_fn.1} parent=1 // pred_region
      _
    $region17: #{apply_fn.1} parent=1 // pred_fallthru
      _
    // Predicated region
    $region18: #{apply_fn.1} parent=1 // pred_check
      _
    $region19: #{apply_fn.1} parent=1 // pred_check_branch
      %26 = sbr.rel (0) target = $region21
    $region20: #{apply_fn.1} parent=1 // pred_region
      _
    $region21: #{apply_fn.1} parent=1 // pred_fallthru
      _
    // Predicated region
    $region22: #{apply_fn.1} parent=1 // pred_check
      _
    $region23: #{apply_fn.1} parent=1 // pred_check_branch
      %28 = sbr.rel (0) target = $region25
    $region24: #{apply_fn.1} parent=1 // pred_region
      _
    $region25: #{apply_fn.1} parent=1 // pred_fallthru
      _
    // Predicated region
    $region26: #{apply_fn.1} parent=1 // pred_check
      _
    $region27: #{apply_fn.1} parent=1 // pred_check_branch
      %30 = sbr.rel (0) target = $region29
    $region28: #{apply_fn.1} parent=1 // pred_region
      _
    $region29: #{apply_fn.1} parent=1 // pred_fallthru
      _
    // Predicated region
    $region30: #{apply_fn.1} parent=1 // pred_check
      _
    $region31: #{apply_fn.1} parent=1 // pred_check_branch
      %32 = sbr.rel (0) target = $region33
    $region32: #{apply_fn.1} parent=1 // pred_region
      _
    $region33: #{apply_fn.1} parent=1 // pred_fallthru
      _
    // Predicated region
    $region34: #{apply_fn.1} parent=1 // pred_check
      _
    $region35: #{apply_fn.1} parent=1 // pred_check_branch
      %34 = sbr.rel (0) target = $region37
    $region36: #{apply_fn.1} parent=1 // pred_region
      _
    $region37: #{apply_fn.1} parent=1 // pred_fallthru
      _
    %p37 = scmp.lt.u32.totalorder 128, 8
    %p38 = pneg %p37
    // Predicated region
    $region38: #{apply_fn.1} parent=1 // pred_check
      _
    $region39: #{apply_fn.1} parent=1 // pred_check_branch
      %40 = sbr.rel (%p37) target = $region41
    $region40: #{apply_fn.1} parent=1 // pred_region
      %s56 = sand.u32 128, 7
      %p57 = scmp.eq.s32.totalorder %s56, 0
      // Predicated region
      $region53: #{apply_fn.1} parent=40 // pred_check
        %p58 = pneg %p57
      $region54: #{apply_fn.1} parent=40 // pred_check_branch
        %60 = sbr.rel (%p58) target = $region56
      $region55: #{apply_fn.1} parent=40 // pred_region
        loop: start=0, step=1, limit=1
        $region57: #{apply_fn.1} parent=55 // loop_pre_header
          _
        $region58: #{apply_fn.1} parent=55 // loop_header
          %s62 = sphi 0, %s66
          %p63 = scmp.ge.s32.totalorder %s62, 1
          %s67 = sphi %s9, %s9
          %s68 = sphi [#allocation6], [#allocation6]
        $region59: #{apply_fn.1} parent=55 // loop_header_branch
          %65 = sbr.rel (%p63) target = $region63
        $region60: #{apply_fn.1} parent=55 // loop_body
          %v69 = vld [vmem:[%s67] sm:$0xff]
          %70 = vst [vmem:[%s68] sm:$0xff] %v69
          %v71 = vld [vmem:[%s67 + $0x8] sm:$0xff]
          %72 = vst [vmem:[%s68 + $0x8] sm:$0xff] %v71
          %v73 = vld [vmem:[%s67 + $0x10] sm:$0xff]
          %74 = vst [vmem:[%s68 + $0x10] sm:$0xff] %v73
          %v75 = vld [vmem:[%s67 + $0x18] sm:$0xff]
          %76 = vst [vmem:[%s68 + $0x18] sm:$0xff] %v75
          %v77 = vld [vmem:[%s67 + $0x20] sm:$0xff]
          %78 = vst [vmem:[%s68 + $0x20] sm:$0xff] %v77
          %v79 = vld [vmem:[%s67 + $0x28] sm:$0xff]
          %80 = vst [vmem:[%s68 + $0x28] sm:$0xff] %v79
          %v81 = vld [vmem:[%s67 + $0x30] sm:$0xff]
          %82 = vst [vmem:[%s68 + $0x30] sm:$0xff] %v81
          %v83 = vld [vmem:[%s67 + $0x38] sm:$0xff]
          %84 = vst [vmem:[%s68 + $0x38] sm:$0xff] %v83
          %v85 = vld [vmem:[%s67 + $0x40] sm:$0xff]
          %86 = vst [vmem:[%s68 + $0x40] sm:$0xff] %v85
          %v87 = vld [vmem:[%s67 + $0x48] sm:$0xff]
          %88 = vst [vmem:[%s68 + $0x48] sm:$0xff] %v87
          %v89 = vld [vmem:[%s67 + $0x50] sm:$0xff]
          %90 = vst [vmem:[%s68 + $0x50] sm:$0xff] %v89
          %v91 = vld [vmem:[%s67 + $0x58] sm:$0xff]
          %92 = vst [vmem:[%s68 + $0x58] sm:$0xff] %v91
          %v93 = vld [vmem:[%s67 + $0x60] sm:$0xff]
          %94 = vst [vmem:[%s68 + $0x60] sm:$0xff] %v93
          %v95 = vld [vmem:[%s67 + $0x68] sm:$0xff]
          %96 = vst [vmem:[%s68 + $0x68] sm:$0xff] %v95
          %v97 = vld [vmem:[%s67 + $0x70] sm:$0xff]
          %98 = vst [vmem:[%s68 + $0x70] sm:$0xff] %v97
          %v99 = vld [vmem:[%s67 + $0x78] sm:$0xff]
          %100 = vst [vmem:[%s68 + $0x78] sm:$0xff] %v99
        $region61: #{apply_fn.1} parent=55 // loop_footer
          %s66 = sadd.s32 1, %s62
        $region62: #{apply_fn.1} parent=55 // loop_footer_branch
          %61 = sbr.rel target = $region58
        $region63: #{apply_fn.1} parent=55 // loop_exit
          _
      $region56: #{apply_fn.1} parent=40 // pred_fallthru
        _
      %p101 = pneg %p57
      // Predicated region
      $region64: #{apply_fn.1} parent=40 // pred_check
        _
      $region65: #{apply_fn.1} parent=40 // pred_check_branch
        %103 = sbr.rel (%p57) target = $region67
      $region66: #{apply_fn.1} parent=40 // pred_region
        %s104 = sand.u32 128, 7
      $region67: #{apply_fn.1} parent=40 // pred_fallthru
        _
    $region41: #{apply_fn.1} parent=1 // pred_fallthru
      _
    // Predicated region
    $region42: #{apply_fn.1} parent=1 // pred_check
      %p41 = pneg %p37
    $region43: #{apply_fn.1} parent=1 // pred_check_branch
      %43 = sbr.rel (%p41) target = $region45
    $region44: #{apply_fn.1} parent=1 // pred_region
      %s44 = sshll.u32 1, 128
      %s45 = ssub.s32 %s44, 1
      loop: start=0, step=1, limit=1
      $region46: #{apply_fn.1} parent=44 // loop_pre_header
        _
      $region47: #{apply_fn.1} parent=44 // loop_header
        %s47 = sphi 0, %s51
        %p48 = scmp.ge.s32.totalorder %s47, 1
        %s52 = sphi %s9, %s9
        %s53 = sphi [#allocation6], [#allocation6]
      $region48: #{apply_fn.1} parent=44 // loop_header_branch
        %50 = sbr.rel (%p48) target = $region52
      $region49: #{apply_fn.1} parent=44 // loop_body
        %v54 = vld [vmem:[%s52] sm:%s45]
        %55 = vst [vmem:[%s53] sm:%s45] %v54
      $region50: #{apply_fn.1} parent=44 // loop_footer
        %s51 = sadd.s32 1, %s47
      $region51: #{apply_fn.1} parent=44 // loop_footer_branch
        %46 = sbr.rel target = $region47
      $region52: #{apply_fn.1} parent=44 // loop_exit
        _
    $region45: #{apply_fn.1} parent=1 // pred_fallthru
      _
    // Predicated region
    $region68: #{apply_fn.1} parent=1 // pred_check
      _
    $region69: #{apply_fn.1} parent=1 // pred_check_branch
      %107 = sbr.rel (0) target = $region71
    $region70: #{apply_fn.1} parent=1 // pred_region
      %108 = vsyncadd [#allocation8], 2048
    $region71: #{apply_fn.1} parent=1 // pred_fallthru
      _
    %s109 = scalar_lea.sflag [#allocation8], 1
    %p111 = scmp.lt.u32.totalorder 256, 8
    %p112 = pneg %p111
    // Predicated region
    $region72: #{apply_fn.1} parent=1 // pred_check
      _
    $region73: #{apply_fn.1} parent=1 // pred_check_branch
      %114 = sbr.rel (%p111) target = $region75
    $region74: #{apply_fn.1} parent=1 // pred_region
      %s130 = sand.u32 256, 7
      %p131 = scmp.eq.s32.totalorder %s130, 0
      // Predicated region
      $region87: #{apply_fn.1} parent=74 // pred_check
        %p132 = pneg %p131
      $region88: #{apply_fn.1} parent=74 // pred_check_branch
        %134 = sbr.rel (%p132) target = $region90
      $region89: #{apply_fn.1} parent=74 // pred_region
        loop: start=0, step=1, limit=1
        $region91: #{apply_fn.1} parent=89 // loop_pre_header
          _
        $region92: #{apply_fn.1} parent=89 // loop_header
          %s136 = sphi 0, %s140
          %p137 = scmp.ge.s32.totalorder %s136, 1
          %s141 = sphi %s10, %s10
          %s142 = sphi [#allocation7], [#allocation7]
        $region93: #{apply_fn.1} parent=89 // loop_header_branch
          %139 = sbr.rel (%p137) target = $region97
        $region94: #{apply_fn.1} parent=89 // loop_body
          %v143 = vld [vmem:[%s141] sm:$0xff]
          %144 = vst [vmem:[%s142] sm:$0xff] %v143
          %v145 = vld [vmem:[%s141 + $0x8] sm:$0xff]
          %146 = vst [vmem:[%s142 + $0x8] sm:$0xff] %v145
          %v147 = vld [vmem:[%s141 + $0x10] sm:$0xff]
          %148 = vst [vmem:[%s142 + $0x10] sm:$0xff] %v147
          %v149 = vld [vmem:[%s141 + $0x18] sm:$0xff]
          %150 = vst [vmem:[%s142 + $0x18] sm:$0xff] %v149
          %v151 = vld [vmem:[%s141 + $0x20] sm:$0xff]
          %152 = vst [vmem:[%s142 + $0x20] sm:$0xff] %v151
          %v153 = vld [vmem:[%s141 + $0x28] sm:$0xff]
          %154 = vst [vmem:[%s142 + $0x28] sm:$0xff] %v153
          %v155 = vld [vmem:[%s141 + $0x30] sm:$0xff]
          %156 = vst [vmem:[%s142 + $0x30] sm:$0xff] %v155
          %v157 = vld [vmem:[%s141 + $0x38] sm:$0xff]
          %158 = vst [vmem:[%s142 + $0x38] sm:$0xff] %v157
          %v159 = vld [vmem:[%s141 + $0x40] sm:$0xff]
          %160 = vst [vmem:[%s142 + $0x40] sm:$0xff] %v159
          %v161 = vld [vmem:[%s141 + $0x48] sm:$0xff]
          %162 = vst [vmem:[%s142 + $0x48] sm:$0xff] %v161
          %v163 = vld [vmem:[%s141 + $0x50] sm:$0xff]
          %164 = vst [vmem:[%s142 + $0x50] sm:$0xff] %v163
          %v165 = vld [vmem:[%s141 + $0x58] sm:$0xff]
          %166 = vst [vmem:[%s142 + $0x58] sm:$0xff] %v165
          %v167 = vld [vmem:[%s141 + $0x60] sm:$0xff]
          %168 = vst [vmem:[%s142 + $0x60] sm:$0xff] %v167
          %v169 = vld [vmem:[%s141 + $0x68] sm:$0xff]
          %170 = vst [vmem:[%s142 + $0x68] sm:$0xff] %v169
          %v171 = vld [vmem:[%s141 + $0x70] sm:$0xff]
          %172 = vst [vmem:[%s142 + $0x70] sm:$0xff] %v171
          %v173 = vld [vmem:[%s141 + $0x78] sm:$0xff]
          %174 = vst [vmem:[%s142 + $0x78] sm:$0xff] %v173
          %v175 = vld [vmem:[%s141 + $0x80] sm:$0xff]
          %176 = vst [vmem:[%s142 + $0x80] sm:$0xff] %v175
          %v177 = vld [vmem:[%s141 + $0x88] sm:$0xff]
          %178 = vst [vmem:[%s142 + $0x88] sm:$0xff] %v177
          %v179 = vld [vmem:[%s141 + $0x90] sm:$0xff]
          %180 = vst [vmem:[%s142 + $0x90] sm:$0xff] %v179
          %v181 = vld [vmem:[%s141 + $0x98] sm:$0xff]
          %182 = vst [vmem:[%s142 + $0x98] sm:$0xff] %v181
          %v183 = vld [vmem:[%s141 + $0xa0] sm:$0xff]
          %184 = vst [vmem:[%s142 + $0xa0] sm:$0xff] %v183
          %v185 = vld [vmem:[%s141 + $0xa8] sm:$0xff]
          %186 = vst [vmem:[%s142 + $0xa8] sm:$0xff] %v185
          %v187 = vld [vmem:[%s141 + $0xb0] sm:$0xff]
          %188 = vst [vmem:[%s142 + $0xb0] sm:$0xff] %v187
          %v189 = vld [vmem:[%s141 + $0xb8] sm:$0xff]
          %190 = vst [vmem:[%s142 + $0xb8] sm:$0xff] %v189
          %v191 = vld [vmem:[%s141 + $0xc0] sm:$0xff]
          %192 = vst [vmem:[%s142 + $0xc0] sm:$0xff] %v191
          %v193 = vld [vmem:[%s141 + $0xc8] sm:$0xff]
          %194 = vst [vmem:[%s142 + $0xc8] sm:$0xff] %v193
          %v195 = vld [vmem:[%s141 + $0xd0] sm:$0xff]
          %196 = vst [vmem:[%s142 + $0xd0] sm:$0xff] %v195
          %v197 = vld [vmem:[%s141 + $0xd8] sm:$0xff]
          %198 = vst [vmem:[%s142 + $0xd8] sm:$0xff] %v197
          %v199 = vld [vmem:[%s141 + $0xe0] sm:$0xff]
          %200 = vst [vmem:[%s142 + $0xe0] sm:$0xff] %v199
          %v201 = vld [vmem:[%s141 + $0xe8] sm:$0xff]
          %202 = vst [vmem:[%s142 + $0xe8] sm:$0xff] %v201
          %v203 = vld [vmem:[%s141 + $0xf0] sm:$0xff]
          %204 = vst [vmem:[%s142 + $0xf0] sm:$0xff] %v203
          %v205 = vld [vmem:[%s141 + $0xf8] sm:$0xff]
          %206 = vst [vmem:[%s142 + $0xf8] sm:$0xff] %v205
        $region95: #{apply_fn.1} parent=89 // loop_footer
          %s140 = sadd.s32 1, %s136
        $region96: #{apply_fn.1} parent=89 // loop_footer_branch
          %135 = sbr.rel target = $region92
        $region97: #{apply_fn.1} parent=89 // loop_exit
          _
      $region90: #{apply_fn.1} parent=74 // pred_fallthru
        _
      %p207 = pneg %p131
      // Predicated region
      $region98: #{apply_fn.1} parent=74 // pred_check
        _
      $region99: #{apply_fn.1} parent=74 // pred_check_branch
        %209 = sbr.rel (%p131) target = $region101
      $region100: #{apply_fn.1} parent=74 // pred_region
        %s210 = sand.u32 256, 7
      $region101: #{apply_fn.1} parent=74 // pred_fallthru
        _
    $region75: #{apply_fn.1} parent=1 // pred_fallthru
      _
    // Predicated region
    $region76: #{apply_fn.1} parent=1 // pred_check
      %p115 = pneg %p111
    $region77: #{apply_fn.1} parent=1 // pred_check_branch
      %117 = sbr.rel (%p115) target = $region79
    $region78: #{apply_fn.1} parent=1 // pred_region
      %s118 = sshll.u32 1, 256
      %s119 = ssub.s32 %s118, 1
      loop: start=0, step=1, limit=1
      $region80: #{apply_fn.1} parent=78 // loop_pre_header
        _
      $region81: #{apply_fn.1} parent=78 // loop_header
        %s121 = sphi 0, %s125
        %p122 = scmp.ge.s32.totalorder %s121, 1
        %s126 = sphi %s10, %s10
        %s127 = sphi [#allocation7], [#allocation7]
      $region82: #{apply_fn.1} parent=78 // loop_header_branch
        %124 = sbr.rel (%p122) target = $region86
      $region83: #{apply_fn.1} parent=78 // loop_body
        %v128 = vld [vmem:[%s126] sm:%s119]
        %129 = vst [vmem:[%s127] sm:%s119] %v128
      $region84: #{apply_fn.1} parent=78 // loop_footer
        %s125 = sadd.s32 1, %s121
      $region85: #{apply_fn.1} parent=78 // loop_footer_branch
        %120 = sbr.rel target = $region81
      $region86: #{apply_fn.1} parent=78 // loop_exit
        _
    $region79: #{apply_fn.1} parent=1 // pred_fallthru
      _
    // Predicated region
    $region102: #{apply_fn.1} parent=1 // pred_check
      _
    $region103: #{apply_fn.1} parent=1 // pred_check_branch
      %213 = sbr.rel (0) target = $region105
    $region104: #{apply_fn.1} parent=1 // pred_region
      %214 = vsyncadd %s109, 4096
    $region105: #{apply_fn.1} parent=1 // pred_fallthru
      _
    %v215 = vld [vmem:[%s0] sm:$0xff]
    %v216 = vld [vmem:[%s0 + $0x8] sm:$0xff]
    %v217 = vld [vmem:[%s0 + $0x10] sm:$0xff]
    %v218 = vld [vmem:[%s0 + $0x18] sm:$0xff]
    %v219 = vld [vmem:[%s0 + $0x20] sm:$0xff]
    %v220 = vld [vmem:[%s0 + $0x28] sm:$0xff]
    %v221 = vld [vmem:[%s0 + $0x30] sm:$0xff]
    %v222 = vld [vmem:[%s0 + $0x38] sm:$0xff]
    %v223 = vld [vmem:[%s0 + $0x40] sm:$0xff]
    %v224 = vld [vmem:[%s0 + $0x48] sm:$0xff]
    %v225 = vld [vmem:[%s0 + $0x50] sm:$0xff]
    %v226 = vld [vmem:[%s0 + $0x58] sm:$0xff]
    %v227 = vld [vmem:[%s0 + $0x60] sm:$0xff]
    %v228 = vld [vmem:[%s0 + $0x68] sm:$0xff]
    %v229 = vld [vmem:[%s0 + $0x70] sm:$0xff]
    %v230 = vld [vmem:[%s0 + $0x78] sm:$0xff]
    %v231 = vld [vmem:[%s0 + $0x80] sm:$0xff]
    %v232 = vld [vmem:[%s0 + $0x88] sm:$0xff]
    %v233 = vld [vmem:[%s0 + $0x90] sm:$0xff]
    %v234 = vld [vmem:[%s0 + $0x98] sm:$0xff]
    %v235 = vld [vmem:[%s0 + $0xa0] sm:$0x3]
    %v236 = vld [vmem:[%s0 + $0x1] sm:$0xff]
    %v237 = vld [vmem:[%s0 + $0x9] sm:$0xff]
    %v238 = vld [vmem:[%s0 + $0x11] sm:$0xff]
    %v239 = vld [vmem:[%s0 + $0x19] sm:$0xff]
    %v240 = vld [vmem:[%s0 + $0x21] sm:$0xff]
    %v241 = vld [vmem:[%s0 + $0x29] sm:$0xff]
    %v242 = vld [vmem:[%s0 + $0x31] sm:$0xff]
    %v243 = vld [vmem:[%s0 + $0x39] sm:$0xff]
    %v244 = vld [vmem:[%s0 + $0x41] sm:$0xff]
    %v245 = vld [vmem:[%s0 + $0x49] sm:$0xff]
    %v246 = vld [vmem:[%s0 + $0x51] sm:$0xff]
    %v247 = vld [vmem:[%s0 + $0x59] sm:$0xff]
    %v248 = vld [vmem:[%s0 + $0x61] sm:$0xff]
    %v249 = vld [vmem:[%s0 + $0x69] sm:$0xff]
    %v250 = vld [vmem:[%s0 + $0x71] sm:$0xff]
    %v251 = vld [vmem:[%s0 + $0x79] sm:$0xff]
    %v252 = vld [vmem:[%s0 + $0x81] sm:$0xff]
    %v253 = vld [vmem:[%s0 + $0x89] sm:$0xff]
    %v254 = vld [vmem:[%s0 + $0x91] sm:$0xff]
    %v255 = vld [vmem:[%s0 + $0x99] sm:$0xff]
    %v256 = vld [vmem:[%s0 + $0xa1] sm:$0x3]
    %v257 = vld [vmem:[%s0 + $0xa1] sm:$0xff]
    %v258 = vld [vmem:[%s0 + $0xa9] sm:$0x3]
    %v259 = vld [vmem:[%s0 + $0xa] sm:$0xff]
    %v260 = vld [vmem:[%s0 + $0x12] sm:$0xff]
    %v261 = vld [vmem:[%s0 + $0x1a] sm:$0xff]
    %v262 = vld [vmem:[%s0 + $0x22] sm:$0xff]
    %v263 = vld [vmem:[%s0 + $0x2a] sm:$0xff]
    %v264 = vld [vmem:[%s0 + $0x32] sm:$0xff]
    %v265 = vld [vmem:[%s0 + $0x3a] sm:$0xff]
    %v266 = vld [vmem:[%s0 + $0x42] sm:$0xff]
    %v267 = vld [vmem:[%s0 + $0x4a] sm:$0xff]
    %v268 = vld [vmem:[%s0 + $0x52] sm:$0xff]
    %v269 = vld [vmem:[%s0 + $0x5a] sm:$0xff]
    %v270 = vld [vmem:[%s0 + $0x62] sm:$0xff]
    %v271 = vld [vmem:[%s0 + $0x6a] sm:$0xff]
    %v272 = vld [vmem:[%s0 + $0x72] sm:$0xff]
    %v273 = vld [vmem:[%s0 + $0x7a] sm:$0xff]
    %v274 = vld [vmem:[%s0 + $0x82] sm:$0xff]
    %v275 = vld [vmem:[%s0 + $0x8a] sm:$0xff]
    %v276 = vld [vmem:[%s0 + $0x92] sm:$0xff]
    %v277 = vld [vmem:[%s0 + $0x9a] sm:$0xff]
    %v278 = vld [vmem:[%s0 + $0xa2] sm:$0xff]
    %v279 = vld [vmem:[%s0 + $0xaa] sm:$0x3]
    %301 = vrot.lane.b32.xlu0 %v236, 64
    %v302 = vpop.permute.xlu0 %301
    %303 = vrot.lane.b32.xlu0 %v237, 64
    %v304 = vpop.permute.xlu0 %303
    %305 = vrot.lane.b32.xlu0 %v238, 64
    %v306 = vpop.permute.xlu0 %305
    %307 = vrot.lane.b32.xlu0 %v239, 64
    %v308 = vpop.permute.xlu0 %307
    %309 = vrot.lane.b32.xlu0 %v240, 64
    %v310 = vpop.permute.xlu0 %309
    %311 = vrot.lane.b32.xlu0 %v241, 64
    %v312 = vpop.permute.xlu0 %311
    %313 = vrot.lane.b32.xlu0 %v242, 64
    %v314 = vpop.permute.xlu0 %313
    %315 = vrot.lane.b32.xlu0 %v243, 64
    %v316 = vpop.permute.xlu0 %315
    %317 = vrot.lane.b32.xlu0 %v244, 64
    %v318 = vpop.permute.xlu0 %317
    %319 = vrot.lane.b32.xlu0 %v245, 64
    %v320 = vpop.permute.xlu0 %319
    %321 = vrot.lane.b32.xlu0 %v246, 64
    %v322 = vpop.permute.xlu0 %321
    %323 = vrot.lane.b32.xlu0 %v247, 64
    %v324 = vpop.permute.xlu0 %323
    %325 = vrot.lane.b32.xlu0 %v248, 64
    %v326 = vpop.permute.xlu0 %325
    %327 = vrot.lane.b32.xlu0 %v249, 64
    %v328 = vpop.permute.xlu0 %327
    %329 = vrot.lane.b32.xlu0 %v250, 64
    %v330 = vpop.permute.xlu0 %329
    %331 = vrot.lane.b32.xlu0 %v251, 64
    %v332 = vpop.permute.xlu0 %331
    %333 = vrot.lane.b32.xlu0 %v252, 64
    %v334 = vpop.permute.xlu0 %333
    %335 = vrot.lane.b32.xlu0 %v253, 64
    %v336 = vpop.permute.xlu0 %335
    %337 = vrot.lane.b32.xlu0 %v254, 64
    %v338 = vpop.permute.xlu0 %337
    %339 = vrot.lane.b32.xlu0 %v255, 64
    %v340 = vpop.permute.xlu0 %339
    %341 = vrot.lane.b32.xlu0 %v256, 64
    %v342 = vpop.permute.xlu0 %341
    %385 = vrot.lane.b32.xlu0 %v259, 64
    %v386 = vpop.permute.xlu0 %385
    %387 = vrot.lane.b32.xlu0 %v260, 64
    %v388 = vpop.permute.xlu0 %387
    %389 = vrot.lane.b32.xlu0 %v261, 64
    %v390 = vpop.permute.xlu0 %389
    %391 = vrot.lane.b32.xlu0 %v262, 64
    %v392 = vpop.permute.xlu0 %391
    %393 = vrot.lane.b32.xlu0 %v263, 64
    %v394 = vpop.permute.xlu0 %393
    %395 = vrot.lane.b32.xlu0 %v264, 64
    %v396 = vpop.permute.xlu0 %395
    %397 = vrot.lane.b32.xlu0 %v265, 64
    %v398 = vpop.permute.xlu0 %397
    %399 = vrot.lane.b32.xlu0 %v266, 64
    %v400 = vpop.permute.xlu0 %399
    %401 = vrot.lane.b32.xlu0 %v267, 64
    %v402 = vpop.permute.xlu0 %401
    %403 = vrot.lane.b32.xlu0 %v268, 64
    %v404 = vpop.permute.xlu0 %403
    %405 = vrot.lane.b32.xlu0 %v269, 64
    %v406 = vpop.permute.xlu0 %405
    %407 = vrot.lane.b32.xlu0 %v270, 64
    %v408 = vpop.permute.xlu0 %407
    %409 = vrot.lane.b32.xlu0 %v271, 64
    %v410 = vpop.permute.xlu0 %409
    %411 = vrot.lane.b32.xlu0 %v272, 64
    %v412 = vpop.permute.xlu0 %411
    %413 = vrot.lane.b32.xlu0 %v273, 64
    %v414 = vpop.permute.xlu0 %413
    %415 = vrot.lane.b32.xlu0 %v274, 64
    %v416 = vpop.permute.xlu0 %415
    %417 = vrot.lane.b32.xlu0 %v275, 64
    %v418 = vpop.permute.xlu0 %417
    %419 = vrot.lane.b32.xlu0 %v276, 64
    %v420 = vpop.permute.xlu0 %419
    %421 = vrot.lane.b32.xlu0 %v277, 64
    %v422 = vpop.permute.xlu0 %421
    %423 = vrot.lane.b32.xlu0 %v278, 64
    %v424 = vpop.permute.xlu0 %423
    %425 = vrot.lane.b32.xlu0 %v279, 64
    %v426 = vpop.permute.xlu0 %425
    %vm448 = vcmask 523264
    %v449 = vsel %vm448, %v215, %v302
    %v450 = vsel %vm448, %v216, %v304
    %v451 = vsel %vm448, %v217, %v306
    %v452 = vsel %vm448, %v218, %v308
    %v453 = vsel %vm448, %v219, %v310
    %v454 = vsel %vm448, %v220, %v312
    %v455 = vsel %vm448, %v221, %v314
    %v456 = vsel %vm448, %v222, %v316
    %v457 = vsel %vm448, %v223, %v318
    %v458 = vsel %vm448, %v224, %v320
    %v459 = vsel %vm448, %v225, %v322
    %v460 = vsel %vm448, %v226, %v324
    %v461 = vsel %vm448, %v227, %v326
    %v462 = vsel %vm448, %v228, %v328
    %v463 = vsel %vm448, %v229, %v330
    %v464 = vsel %vm448, %v230, %v332
    %v465 = vsel %vm448, %v231, %v334
    %v466 = vsel %vm448, %v232, %v336
    %v467 = vsel %vm448, %v233, %v338
    %v468 = vsel %vm448, %v234, %v340
    %v469 = vsel %vm448, %v235, %v342
    %v470 = vsel %vm448, %v237, %v386
    %v471 = vsel %vm448, %v238, %v388
    %v472 = vsel %vm448, %v239, %v390
    %v473 = vsel %vm448, %v240, %v392
    %v474 = vsel %vm448, %v241, %v394
    %v475 = vsel %vm448, %v242, %v396
    %v476 = vsel %vm448, %v243, %v398
    %v477 = vsel %vm448, %v244, %v400
    %v478 = vsel %vm448, %v245, %v402
    %v479 = vsel %vm448, %v246, %v404
    %v480 = vsel %vm448, %v247, %v406
    %v481 = vsel %vm448, %v248, %v408
    %v482 = vsel %vm448, %v249, %v410
    %v483 = vsel %vm448, %v250, %v412
    %v484 = vsel %vm448, %v251, %v414
    %v485 = vsel %vm448, %v252, %v416
    %v486 = vsel %vm448, %v253, %v418
    %v487 = vsel %vm448, %v254, %v420
    %v488 = vsel %vm448, %v255, %v422
    %v489 = vsel %vm448, %v257, %v424
    %v490 = vsel %vm448, %v258, %v426
    %v491 = vpack.c.bf16 %v450, %v449
    %v492 = vpack.c.bf16 %v471, %v470
    %v493 = vpack.c.bf16 %v452, %v451
    %v494 = vpack.c.bf16 %v473, %v472
    %v495 = vpack.c.bf16 %v454, %v453
    %v496 = vpack.c.bf16 %v475, %v474
    %v497 = vpack.c.bf16 %v456, %v455
    %v498 = vpack.c.bf16 %v477, %v476
    %v499 = vpack.c.bf16 %v458, %v457
    %v500 = vpack.c.bf16 %v479, %v478
    %v501 = vpack.c.bf16 %v460, %v459
    %v502 = vpack.c.bf16 %v481, %v480
    %v503 = vpack.c.bf16 %v462, %v461
    %v504 = vpack.c.bf16 %v483, %v482
    %v505 = vpack.c.bf16 %v464, %v463
    %v506 = vpack.c.bf16 %v485, %v484
    %v507 = vpack.c.bf16 %v466, %v465
    %v508 = vpack.c.bf16 %v487, %v486
    %v509 = vpack.c.bf16 %v468, %v467
    %v510 = vpack.c.bf16 %v489, %v488
    %v511 = vpack.c.bf16 %v469, %v469
    %v512 = vpack.c.bf16 %v490, %v490
    %v513 = vld [vmem:[%s1] sm:$0xf]
    %v514 = vld [vmem:[%s1 + $0x4] sm:$0xf]
    %v515 = vld [vmem:[%s1 + $0x8] sm:$0xf]
    %v516 = vld [vmem:[%s1 + $0xc] sm:$0xf]
    %v517 = vld [vmem:[%s1 + $0x10] sm:$0xf]
    %v518 = vld [vmem:[%s1 + $0x14] sm:$0xf]
    %v519 = vld [vmem:[%s1 + $0x18] sm:$0xf]
    %v520 = vld [vmem:[%s1 + $0x1c] sm:$0xf]
    %v521 = vld [vmem:[%s1 + $0x20] sm:$0xf]
    %v522 = vld [vmem:[%s1 + $0x24] sm:$0xf]
    %v523 = vld [vmem:[%s1 + $0x28] sm:$0xf]
    %v524 = vld [vmem:[%s1 + $0x2c] sm:$0xf]
    %v525 = vld [vmem:[%s1 + $0x30] sm:$0xf]
    %v526 = vld [vmem:[%s1 + $0x34] sm:$0xf]
    %v527 = vld [vmem:[%s1 + $0x38] sm:$0xf]
    %v528 = vld [vmem:[%s1 + $0x3c] sm:$0xf]
    %v529 = vld [vmem:[%s1 + $0x40] sm:$0xf]
    %v530 = vld [vmem:[%s1 + $0x44] sm:$0xf]
    %v531 = vld [vmem:[%s1 + $0x48] sm:$0xf]
    %v532 = vld [vmem:[%s1 + $0x4c] sm:$0xf]
    %v533 = vld [vmem:[%s1 + $0x50] sm:$0xf]
    %v534 = vld [vmem:[%s1 + $0x54] sm:$0xf]
    %v535 = vld [vmem:[%s1 + $0x58] sm:$0xf]
    %v536 = vld [vmem:[%s1 + $0x5c] sm:$0xf]
    %v537 = vld [vmem:[%s1 + $0x60] sm:$0xf]
    %v538 = vld [vmem:[%s1 + $0x64] sm:$0xf]
    %v539 = vld [vmem:[%s1 + $0x68] sm:$0xf]
    %v540 = vld [vmem:[%s1 + $0x6c] sm:$0xf]
    %v541 = vld [vmem:[%s1 + $0x70] sm:$0xf]
    %v542 = vld [vmem:[%s1 + $0x74] sm:$0xf]
    %v543 = vld [vmem:[%s1 + $0x78] sm:$0xf]
    %v544 = vld [vmem:[%s1 + $0x7c] sm:$0xf]
    %v545 = vld [vmem:[%s2] sm:$0x1]
    %v547 = vlaneseq
    %v548 = vshrl.u32 %v547, 7
    %v549 = vsub.s32 0, %v548
    %v550 = vrot.slane %v545, %v549
    %v584 = vunpack.c.l.b16 %v513
    %v585 = vunpack.c.l.b16 %v514
    %v586 = vunpack.c.l.b16 %v515
    %v587 = vunpack.c.l.b16 %v516
    %v588 = vunpack.c.l.b16 %v517
    %v589 = vunpack.c.l.b16 %v518
    %v590 = vunpack.c.l.b16 %v519
    %v591 = vunpack.c.l.b16 %v520
    %v592 = vunpack.c.l.b16 %v521
    %v593 = vunpack.c.l.b16 %v522
    %v594 = vunpack.c.l.b16 %v523
    %v595 = vunpack.c.l.b16 %v524
    %v596 = vunpack.c.l.b16 %v525
    %v597 = vunpack.c.l.b16 %v526
    %v598 = vunpack.c.l.b16 %v527
    %v599 = vunpack.c.l.b16 %v528
    %v600 = vunpack.c.l.b16 %v529
    %v601 = vunpack.c.l.b16 %v530
    %v602 = vunpack.c.l.b16 %v531
    %v603 = vunpack.c.l.b16 %v532
    %v604 = vunpack.c.l.b16 %v533
    %v605 = vunpack.c.l.b16 %v534
    %v606 = vunpack.c.l.b16 %v535
    %v607 = vunpack.c.l.b16 %v536
    %v608 = vunpack.c.l.b16 %v537
    %v609 = vunpack.c.l.b16 %v538
    %v610 = vunpack.c.l.b16 %v539
    %v611 = vunpack.c.l.b16 %v540
    %v612 = vunpack.c.l.b16 %v541
    %v613 = vunpack.c.l.b16 %v542
    %v614 = vunpack.c.l.b16 %v543
    %v615 = vunpack.c.l.b16 %v544
    %v616 = vpack.c.b16 %v585, %v584
    %v617 = vpack.c.b16 %v587, %v586
    %v618 = vpack.c.b16 %v589, %v588
    %v619 = vpack.c.b16 %v591, %v590
    %v620 = vpack.c.b16 %v593, %v592
    %v621 = vpack.c.b16 %v595, %v594
    %v622 = vpack.c.b16 %v597, %v596
    %v623 = vpack.c.b16 %v599, %v598
    %v624 = vpack.c.b16 %v601, %v600
    %v625 = vpack.c.b16 %v603, %v602
    %v626 = vpack.c.b16 %v605, %v604
    %v627 = vpack.c.b16 %v607, %v606
    %v628 = vpack.c.b16 %v609, %v608
    %v629 = vpack.c.b16 %v611, %v610
    %v630 = vpack.c.b16 %v613, %v612
    %v631 = vpack.c.b16 %v615, %v614
    %648 = vmatprep.subr.bf16.mxu0 0
    %649 = vmatpush1.bf16.msra.mxu0 %v623
    %650 = vmatprep.subr.bf16.mxu0 0
    %651 = vmatpush1.bf16.msra.mxu0 %v622
    %652 = vmatprep.subr.bf16.mxu0 0
    %653 = vmatpush1.bf16.msra.mxu0 %v621
    %654 = vmatprep.subr.bf16.mxu0 0
    %655 = vmatpush1.bf16.msra.mxu0 %v620
    %656 = vmatprep.subr.bf16.mxu0 0
    %657 = vmatpush1.bf16.msra.mxu0 %v619
    %658 = vmatprep.subr.bf16.mxu0 0
    %659 = vmatpush1.bf16.msra.mxu0 %v618
    %660 = vmatprep.subr.bf16.mxu0 0
    %661 = vmatpush1.bf16.msra.mxu0 %v617
    %662 = vmatprep.subr.bf16.mxu0 0
    %663 = vmatpush1.bf16.msra.mxu0 %v616
    %664 = vmatprep.subr.bf16.mxu0 0
    %665 = vmatpush2.bf16.msra.mxu0 %v631
    %666 = vmatprep.subr.bf16.mxu0 0
    %667 = vmatpush2.bf16.msra.mxu0 %v630
    %668 = vmatprep.subr.bf16.mxu0 0
    %669 = vmatpush2.bf16.msra.mxu0 %v629
    %670 = vmatprep.subr.bf16.mxu0 0
    %671 = vmatpush2.bf16.msra.mxu0 %v628
    %672 = vmatprep.subr.bf16.mxu0 0
    %673 = vmatpush2.bf16.msra.mxu0 %v627
    %674 = vmatprep.subr.bf16.mxu0 0
    %675 = vmatpush2.bf16.msra.mxu0 %v626
    %676 = vmatprep.subr.bf16.mxu0 0
    %677 = vmatpush2.bf16.msra.mxu0 %v625
    %678 = vmatprep.subr.bf16.mxu0 0
    %679 = vmatpush2.bf16.msra.mxu0 %v624
    %680 = vmatprep.mubr.bf16.mxu0 %v492
    %681 = vmatmul.mubr.bf16.gmra.mxu0 %v491
    %v682 = vpop.f32.mrf.mxu0
    %v683 = vadd.f32 %v550, %v682
    %v684 = vpop.f32.mrf.mxu0
    %v685 = vpop.f32.mrf.mxu0
    %v686 = vadd.f32 %v550, %v685
    %v687 = vpop.f32.mrf.mxu0
    %688 = vmatprep.mubr.bf16.mxu0 %v494
    %689 = vmatmul.mubr.bf16.gmra.mxu0 %v493
    %v690 = vpop.f32.mrf.mxu0
    %v691 = vadd.f32 %v550, %v690
    %v692 = vpop.f32.mrf.mxu0
    %v693 = vpop.f32.mrf.mxu0
    %v694 = vadd.f32 %v550, %v693
    %v695 = vpop.f32.mrf.mxu0
    %696 = vmatprep.mubr.bf16.mxu0 %v496
    %697 = vmatmul.mubr.bf16.gmra.mxu0 %v495
    %v698 = vpop.f32.mrf.mxu0
    %v699 = vadd.f32 %v550, %v698
    %v700 = vpop.f32.mrf.mxu0
    %v701 = vpop.f32.mrf.mxu0
    %v702 = vadd.f32 %v550, %v701
    %v703 = vpop.f32.mrf.mxu0
    %704 = vmatprep.mubr.bf16.mxu0 %v498
    %705 = vmatmul.mubr.bf16.gmra.mxu0 %v497
    %v706 = vpop.f32.mrf.mxu0
    %v707 = vadd.f32 %v550, %v706
    %v708 = vpop.f32.mrf.mxu0
    %v709 = vpop.f32.mrf.mxu0
    %v710 = vadd.f32 %v550, %v709
    %v711 = vpop.f32.mrf.mxu0
    %712 = vmatprep.mubr.bf16.mxu0 %v500
    %713 = vmatmul.mubr.bf16.gmra.mxu0 %v499
    %v714 = vpop.f32.mrf.mxu0
    %v715 = vadd.f32 %v550, %v714
    %v716 = vpop.f32.mrf.mxu0
    %v717 = vpop.f32.mrf.mxu0
    %v718 = vadd.f32 %v550, %v717
    %v719 = vpop.f32.mrf.mxu0
    %720 = vmatprep.mubr.bf16.mxu0 %v502
    %721 = vmatmul.mubr.bf16.gmra.mxu0 %v501
    %v722 = vpop.f32.mrf.mxu0
    %v723 = vadd.f32 %v550, %v722
    %v724 = vpop.f32.mrf.mxu0
    %v725 = vpop.f32.mrf.mxu0
    %v726 = vadd.f32 %v550, %v725
    %v727 = vpop.f32.mrf.mxu0
    %728 = vmatprep.mubr.bf16.mxu0 %v504
    %729 = vmatmul.mubr.bf16.gmra.mxu0 %v503
    %v730 = vpop.f32.mrf.mxu0
    %v731 = vadd.f32 %v550, %v730
    %v732 = vpop.f32.mrf.mxu0
    %v733 = vpop.f32.mrf.mxu0
    %v734 = vadd.f32 %v550, %v733
    %v735 = vpop.f32.mrf.mxu0
    %736 = vmatprep.mubr.bf16.mxu0 %v506
    %737 = vmatmul.mubr.bf16.gmra.mxu0 %v505
    %v738 = vpop.f32.mrf.mxu0
    %v739 = vadd.f32 %v550, %v738
    %v740 = vpop.f32.mrf.mxu0
    %v741 = vpop.f32.mrf.mxu0
    %v742 = vadd.f32 %v550, %v741
    %v743 = vpop.f32.mrf.mxu0
    %744 = vmatprep.mubr.bf16.mxu0 %v508
    %745 = vmatmul.mubr.bf16.gmra.mxu0 %v507
    %v746 = vpop.f32.mrf.mxu0
    %v747 = vadd.f32 %v550, %v746
    %v748 = vpop.f32.mrf.mxu0
    %v749 = vpop.f32.mrf.mxu0
    %v750 = vadd.f32 %v550, %v749
    %v751 = vpop.f32.mrf.mxu0
    %752 = vmatprep.mubr.bf16.mxu0 %v510
    %753 = vmatmul.mubr.bf16.gmra.mxu0 %v509
    %v754 = vpop.f32.mrf.mxu0
    %v755 = vadd.f32 %v550, %v754
    %v756 = vpop.f32.mrf.mxu0
    %v757 = vpop.f32.mrf.mxu0
    %v758 = vadd.f32 %v550, %v757
    %v759 = vpop.f32.mrf.mxu0
    %760 = vmatprep.mubr.bf16.mxu0 %v512
    %761 = vmatmul.mubr.bf16.gmra.mxu0 %v511
    %v762 = vpop.f32.mrf.mxu0
    %v763 = vadd.f32 %v550, %v762
    %v764 = vpop.f32.mrf.mxu0
    %v765 = vpop.f32.mrf.mxu0
    %v766 = vpop.f32.mrf.mxu0
    %767 = vdwg.mxu0
    %v768 = vmax.f32 %v683, 0.0
    %v769 = vmax.f32 %v686, 0.0
    %v770 = vmax.f32 %v691, 0.0
    %v771 = vmax.f32 %v694, 0.0
    %v772 = vmax.f32 %v699, 0.0
    %v773 = vmax.f32 %v702, 0.0
    %v774 = vmax.f32 %v707, 0.0
    %v775 = vmax.f32 %v710, 0.0
    %v776 = vmax.f32 %v715, 0.0
    %v777 = vmax.f32 %v718, 0.0
    %v778 = vmax.f32 %v723, 0.0
    %v779 = vmax.f32 %v726, 0.0
    %v780 = vmax.f32 %v731, 0.0
    %v781 = vmax.f32 %v734, 0.0
    %v782 = vmax.f32 %v739, 0.0
    %v783 = vmax.f32 %v742, 0.0
    %v784 = vmax.f32 %v747, 0.0
    %v785 = vmax.f32 %v750, 0.0
    %v786 = vmax.f32 %v755, 0.0
    %v787 = vmax.f32 %v758, 0.0
    %v788 = vmax.f32 %v763, 0.0
    %vm789 = vcmask 261120
    %790 = vst.msk [vmem:[#allocation2] sm:$0xff] %vm789, %v768
    %791 = vst.msk [vmem:[#allocation2 + $0x8] sm:$0xff] %vm789, %v769
    %792 = vst.msk [vmem:[#allocation2 + $0x10] sm:$0xff] %vm789, %v770
    %793 = vst.msk [vmem:[#allocation2 + $0x18] sm:$0xff] %vm789, %v771
    %794 = vst.msk [vmem:[#allocation2 + $0x20] sm:$0xff] %vm789, %v772
    %795 = vst.msk [vmem:[#allocation2 + $0x28] sm:$0xff] %vm789, %v773
    %796 = vst.msk [vmem:[#allocation2 + $0x30] sm:$0xff] %vm789, %v774
    %797 = vst.msk [vmem:[#allocation2 + $0x38] sm:$0xff] %vm789, %v775
    %798 = vst.msk [vmem:[#allocation2 + $0x40] sm:$0xff] %vm789, %v776
    %799 = vst.msk [vmem:[#allocation2 + $0x48] sm:$0xff] %vm789, %v777
    %800 = vst.msk [vmem:[#allocation2 + $0x50] sm:$0xff] %vm789, %v778
    %801 = vst.msk [vmem:[#allocation2 + $0x58] sm:$0xff] %vm789, %v779
    %802 = vst.msk [vmem:[#allocation2 + $0x60] sm:$0xff] %vm789, %v780
    %803 = vst.msk [vmem:[#allocation2 + $0x68] sm:$0xff] %vm789, %v781
    %804 = vst.msk [vmem:[#allocation2 + $0x70] sm:$0xff] %vm789, %v782
    %805 = vst.msk [vmem:[#allocation2 + $0x78] sm:$0xff] %vm789, %v783
    %806 = vst.msk [vmem:[#allocation2 + $0x80] sm:$0xff] %vm789, %v784
    %807 = vst.msk [vmem:[#allocation2 + $0x88] sm:$0xff] %vm789, %v785
    %808 = vst.msk [vmem:[#allocation2 + $0x90] sm:$0xff] %vm789, %v786
    %809 = vst.msk [vmem:[#allocation2 + $0x98] sm:$0xff] %vm789, %v787
    %vm810 = vcmask 254976
    %811 = vst.msk [vmem:[#allocation2 + $0xa0] sm:$0x3] %vm810, %v788
    %812 = vst.msk [vmem:[#allocation2 + $0xa2] sm:$0xff] %vm789, 0.0
    %813 = vst.msk [vmem:[#allocation2 + $0xaa] sm:$0xff] %vm789, 0.0
    %814 = vst.msk [vmem:[#allocation2 + $0xb2] sm:$0xff] %vm789, 0.0
    %vm815 = vcmask 259072
    %816 = vst.msk [vmem:[#allocation2 + $0xba] sm:$0x3f] %vm815, 0.0
    %v817 = vld [vmem:[#allocation2] sm:$0xff]
    %v818 = vld [vmem:[#allocation2 + $0x8] sm:$0xff]
    %v819 = vld [vmem:[#allocation2 + $0x10] sm:$0xff]
    %v820 = vld [vmem:[#allocation2 + $0x18] sm:$0xff]
    %v821 = vld [vmem:[#allocation2 + $0x20] sm:$0xff]
    %v822 = vld [vmem:[#allocation2 + $0x28] sm:$0xff]
    %v823 = vld [vmem:[#allocation2 + $0x30] sm:$0xff]
    %v824 = vld [vmem:[#allocation2 + $0x38] sm:$0xff]
    %v825 = vld [vmem:[#allocation2 + $0x40] sm:$0xff]
    %v826 = vld [vmem:[#allocation2 + $0x48] sm:$0xff]
    %v827 = vld [vmem:[#allocation2 + $0x50] sm:$0xff]
    %v828 = vld [vmem:[#allocation2 + $0x58] sm:$0xff]
    %v829 = vld [vmem:[#allocation2 + $0x60] sm:$0xff]
    %v830 = vld [vmem:[#allocation2 + $0x68] sm:$0xff]
    %v831 = vld [vmem:[#allocation2 + $0x70] sm:$0xff]
    %v832 = vld [vmem:[#allocation2 + $0x78] sm:$0xff]
    %v833 = vld [vmem:[#allocation2 + $0x80] sm:$0xff]
    %v834 = vld [vmem:[#allocation2 + $0x88] sm:$0xff]
    %v835 = vld [vmem:[#allocation2 + $0x90] sm:$0xff]
    %v836 = vld [vmem:[#allocation2 + $0x98] sm:$0xff]
    %v837 = vld [vmem:[#allocation2 + $0xa0] sm:$0x3]
    %v838 = vld [vmem:[#allocation2 + $0x1] sm:$0xff]
    %v839 = vld [vmem:[#allocation2 + $0x9] sm:$0xff]
    %v840 = vld [vmem:[#allocation2 + $0x11] sm:$0xff]
    %v841 = vld [vmem:[#allocation2 + $0x19] sm:$0xff]
    %v842 = vld [vmem:[#allocation2 + $0x21] sm:$0xff]
    %v843 = vld [vmem:[#allocation2 + $0x29] sm:$0xff]
    %v844 = vld [vmem:[#allocation2 + $0x31] sm:$0xff]
    %v845 = vld [vmem:[#allocation2 + $0x39] sm:$0xff]
    %v846 = vld [vmem:[#allocation2 + $0x41] sm:$0xff]
    %v847 = vld [vmem:[#allocation2 + $0x49] sm:$0xff]
    %v848 = vld [vmem:[#allocation2 + $0x51] sm:$0xff]
    %v849 = vld [vmem:[#allocation2 + $0x59] sm:$0xff]
    %v850 = vld [vmem:[#allocation2 + $0x61] sm:$0xff]
    %v851 = vld [vmem:[#allocation2 + $0x69] sm:$0xff]
    %v852 = vld [vmem:[#allocation2 + $0x71] sm:$0xff]
    %v853 = vld [vmem:[#allocation2 + $0x79] sm:$0xff]
    %v854 = vld [vmem:[#allocation2 + $0x81] sm:$0xff]
    %v855 = vld [vmem:[#allocation2 + $0x89] sm:$0xff]
    %v856 = vld [vmem:[#allocation2 + $0x91] sm:$0xff]
    %v857 = vld [vmem:[#allocation2 + $0x99] sm:$0xff]
    %v858 = vld [vmem:[#allocation2 + $0xa1] sm:$0x3]
    %v859 = vld [vmem:[#allocation2 + $0x2] sm:$0xff]
    %v860 = vld [vmem:[#allocation2 + $0xa] sm:$0xff]
    %v861 = vld [vmem:[#allocation2 + $0x12] sm:$0xff]
    %v862 = vld [vmem:[#allocation2 + $0x1a] sm:$0xff]
    %v863 = vld [vmem:[#allocation2 + $0x22] sm:$0xff]
    %v864 = vld [vmem:[#allocation2 + $0x2a] sm:$0xff]
    %v865 = vld [vmem:[#allocation2 + $0x32] sm:$0xff]
    %v866 = vld [vmem:[#allocation2 + $0x3a] sm:$0xff]
    %v867 = vld [vmem:[#allocation2 + $0x42] sm:$0xff]
    %v868 = vld [vmem:[#allocation2 + $0x4a] sm:$0xff]
    %v869 = vld [vmem:[#allocation2 + $0x52] sm:$0xff]
    %v870 = vld [vmem:[#allocation2 + $0x5a] sm:$0xff]
    %v871 = vld [vmem:[#allocation2 + $0x62] sm:$0xff]
    %v872 = vld [vmem:[#allocation2 + $0x6a] sm:$0xff]
    %v873 = vld [vmem:[#allocation2 + $0x72] sm:$0xff]
    %v874 = vld [vmem:[#allocation2 + $0x7a] sm:$0xff]
    %v875 = vld [vmem:[#allocation2 + $0x82] sm:$0xff]
    %v876 = vld [vmem:[#allocation2 + $0x8a] sm:$0xff]
    %v877 = vld [vmem:[#allocation2 + $0x92] sm:$0xff]
    %v878 = vld [vmem:[#allocation2 + $0x9a] sm:$0xff]
    %v879 = vld [vmem:[#allocation2 + $0xa2] sm:$0x3]
    %v880 = vld [vmem:[#allocation2 + $0x3] sm:$0xff]
    %v881 = vld [vmem:[#allocation2 + $0xb] sm:$0xff]
    %v882 = vld [vmem:[#allocation2 + $0x13] sm:$0xff]
    %v883 = vld [vmem:[#allocation2 + $0x1b] sm:$0xff]
    %v884 = vld [vmem:[#allocation2 + $0x23] sm:$0xff]
    %v885 = vld [vmem:[#allocation2 + $0x2b] sm:$0xff]
    %v886 = vld [vmem:[#allocation2 + $0x33] sm:$0xff]
    %v887 = vld [vmem:[#allocation2 + $0x3b] sm:$0xff]
    %v888 = vld [vmem:[#allocation2 + $0x43] sm:$0xff]
    %v889 = vld [vmem:[#allocation2 + $0x4b] sm:$0xff]
    %v890 = vld [vmem:[#allocation2 + $0x53] sm:$0xff]
    %v891 = vld [vmem:[#allocation2 + $0x5b] sm:$0xff]
    %v892 = vld [vmem:[#allocation2 + $0x63] sm:$0xff]
    %v893 = vld [vmem:[#allocation2 + $0x6b] sm:$0xff]
    %v894 = vld [vmem:[#allocation2 + $0x73] sm:$0xff]
    %v895 = vld [vmem:[#allocation2 + $0x7b] sm:$0xff]
    %v896 = vld [vmem:[#allocation2 + $0x83] sm:$0xff]
    %v897 = vld [vmem:[#allocation2 + $0x8b] sm:$0xff]
    %v898 = vld [vmem:[#allocation2 + $0x93] sm:$0xff]
    %v899 = vld [vmem:[#allocation2 + $0x9b] sm:$0xff]
    %v900 = vld [vmem:[#allocation2 + $0xa3] sm:$0x3]
    %v901 = vld [vmem:[#allocation2 + $0xa1] sm:$0xff]
    %v902 = vld [vmem:[#allocation2 + $0xa9] sm:$0x3]
    %v903 = vld [vmem:[#allocation2 + $0xa2] sm:$0xff]
    %v904 = vld [vmem:[#allocation2 + $0xaa] sm:$0x3]
    %v905 = vld [vmem:[#allocation2 + $0xa3] sm:$0xff]
    %v906 = vld [vmem:[#allocation2 + $0xab] sm:$0x3]
    %v907 = vld [vmem:[#allocation2 + $0xc] sm:$0xff]
    %v908 = vld [vmem:[#allocation2 + $0x14] sm:$0xff]
    %v909 = vld [vmem:[#allocation2 + $0x1c] sm:$0xff]
    %v910 = vld [vmem:[#allocation2 + $0x24] sm:$0xff]
    %v911 = vld [vmem:[#allocation2 + $0x2c] sm:$0xff]
    %v912 = vld [vmem:[#allocation2 + $0x34] sm:$0xff]
    %v913 = vld [vmem:[#allocation2 + $0x3c] sm:$0xff]
    %v914 = vld [vmem:[#allocation2 + $0x44] sm:$0xff]
    %v915 = vld [vmem:[#allocation2 + $0x4c] sm:$0xff]
    %v916 = vld [vmem:[#allocation2 + $0x54] sm:$0xff]
    %v917 = vld [vmem:[#allocation2 + $0x5c] sm:$0xff]
    %v918 = vld [vmem:[#allocation2 + $0x64] sm:$0xff]
    %v919 = vld [vmem:[#allocation2 + $0x6c] sm:$0xff]
    %v920 = vld [vmem:[#allocation2 + $0x74] sm:$0xff]
    %v921 = vld [vmem:[#allocation2 + $0x7c] sm:$0xff]
    %v922 = vld [vmem:[#allocation2 + $0x84] sm:$0xff]
    %v923 = vld [vmem:[#allocation2 + $0x8c] sm:$0xff]
    %v924 = vld [vmem:[#allocation2 + $0x94] sm:$0xff]
    %v925 = vld [vmem:[#allocation2 + $0x9c] sm:$0xff]
    %v926 = vld [vmem:[#allocation2 + $0xa4] sm:$0xff]
    %v927 = vld [vmem:[#allocation2 + $0xac] sm:$0x3]
    %949 = vrot.lane.b32.xlu0 %v838, 32
    %v950 = vpop.permute.xlu0 %949
    %951 = vrot.lane.b32.xlu0 %v839, 32
    %v952 = vpop.permute.xlu0 %951
    %953 = vrot.lane.b32.xlu0 %v840, 32
    %v954 = vpop.permute.xlu0 %953
    %955 = vrot.lane.b32.xlu0 %v841, 32
    %v956 = vpop.permute.xlu0 %955
    %957 = vrot.lane.b32.xlu0 %v842, 32
    %v958 = vpop.permute.xlu0 %957
    %959 = vrot.lane.b32.xlu0 %v843, 32
    %v960 = vpop.permute.xlu0 %959
    %961 = vrot.lane.b32.xlu0 %v844, 32
    %v962 = vpop.permute.xlu0 %961
    %963 = vrot.lane.b32.xlu0 %v845, 32
    %v964 = vpop.permute.xlu0 %963
    %965 = vrot.lane.b32.xlu0 %v846, 32
    %v966 = vpop.permute.xlu0 %965
    %967 = vrot.lane.b32.xlu0 %v847, 32
    %v968 = vpop.permute.xlu0 %967
    %969 = vrot.lane.b32.xlu0 %v848, 32
    %v970 = vpop.permute.xlu0 %969
    %971 = vrot.lane.b32.xlu0 %v849, 32
    %v972 = vpop.permute.xlu0 %971
    %973 = vrot.lane.b32.xlu0 %v850, 32
    %v974 = vpop.permute.xlu0 %973
    %975 = vrot.lane.b32.xlu0 %v851, 32
    %v976 = vpop.permute.xlu0 %975
    %977 = vrot.lane.b32.xlu0 %v852, 32
    %v978 = vpop.permute.xlu0 %977
    %979 = vrot.lane.b32.xlu0 %v853, 32
    %v980 = vpop.permute.xlu0 %979
    %981 = vrot.lane.b32.xlu0 %v854, 32
    %v982 = vpop.permute.xlu0 %981
    %983 = vrot.lane.b32.xlu0 %v855, 32
    %v984 = vpop.permute.xlu0 %983
    %985 = vrot.lane.b32.xlu0 %v856, 32
    %v986 = vpop.permute.xlu0 %985
    %987 = vrot.lane.b32.xlu0 %v857, 32
    %v988 = vpop.permute.xlu0 %987
    %989 = vrot.lane.b32.xlu0 %v858, 32
    %v990 = vpop.permute.xlu0 %989
    %1033 = vrot.lane.b32.xlu0 %v859, 64
    %v1034 = vpop.permute.xlu0 %1033
    %1035 = vrot.lane.b32.xlu0 %v860, 64
    %v1036 = vpop.permute.xlu0 %1035
    %1037 = vrot.lane.b32.xlu0 %v861, 64
    %v1038 = vpop.permute.xlu0 %1037
    %1039 = vrot.lane.b32.xlu0 %v862, 64
    %v1040 = vpop.permute.xlu0 %1039
    %1041 = vrot.lane.b32.xlu0 %v863, 64
    %v1042 = vpop.permute.xlu0 %1041
    %1043 = vrot.lane.b32.xlu0 %v864, 64
    %v1044 = vpop.permute.xlu0 %1043
    %1045 = vrot.lane.b32.xlu0 %v865, 64
    %v1046 = vpop.permute.xlu0 %1045
    %1047 = vrot.lane.b32.xlu0 %v866, 64
    %v1048 = vpop.permute.xlu0 %1047
    %1049 = vrot.lane.b32.xlu0 %v867, 64
    %v1050 = vpop.permute.xlu0 %1049
    %1051 = vrot.lane.b32.xlu0 %v868, 64
    %v1052 = vpop.permute.xlu0 %1051
    %1053 = vrot.lane.b32.xlu0 %v869, 64
    %v1054 = vpop.permute.xlu0 %1053
    %1055 = vrot.lane.b32.xlu0 %v870, 64
    %v1056 = vpop.permute.xlu0 %1055
    %1057 = vrot.lane.b32.xlu0 %v871, 64
    %v1058 = vpop.permute.xlu0 %1057
    %1059 = vrot.lane.b32.xlu0 %v872, 64
    %v1060 = vpop.permute.xlu0 %1059
    %1061 = vrot.lane.b32.xlu0 %v873, 64
    %v1062 = vpop.permute.xlu0 %1061
    %1063 = vrot.lane.b32.xlu0 %v874, 64
    %v1064 = vpop.permute.xlu0 %1063
    %1065 = vrot.lane.b32.xlu0 %v875, 64
    %v1066 = vpop.permute.xlu0 %1065
    %1067 = vrot.lane.b32.xlu0 %v876, 64
    %v1068 = vpop.permute.xlu0 %1067
    %1069 = vrot.lane.b32.xlu0 %v877, 64
    %v1070 = vpop.permute.xlu0 %1069
    %1071 = vrot.lane.b32.xlu0 %v878, 64
    %v1072 = vpop.permute.xlu0 %1071
    %1073 = vrot.lane.b32.xlu0 %v879, 64
    %v1074 = vpop.permute.xlu0 %1073
    %1117 = vrot.lane.b32.xlu0 %v880, 96
    %v1118 = vpop.permute.xlu0 %1117
    %1119 = vrot.lane.b32.xlu0 %v881, 96
    %v1120 = vpop.permute.xlu0 %1119
    %1121 = vrot.lane.b32.xlu0 %v882, 96
    %v1122 = vpop.permute.xlu0 %1121
    %1123 = vrot.lane.b32.xlu0 %v883, 96
    %v1124 = vpop.permute.xlu0 %1123
    %1125 = vrot.lane.b32.xlu0 %v884, 96
    %v1126 = vpop.permute.xlu0 %1125
    %1127 = vrot.lane.b32.xlu0 %v885, 96
    %v1128 = vpop.permute.xlu0 %1127
    %1129 = vrot.lane.b32.xlu0 %v886, 96
    %v1130 = vpop.permute.xlu0 %1129
    %1131 = vrot.lane.b32.xlu0 %v887, 96
    %v1132 = vpop.permute.xlu0 %1131
    %1133 = vrot.lane.b32.xlu0 %v888, 96
    %v1134 = vpop.permute.xlu0 %1133
    %1135 = vrot.lane.b32.xlu0 %v889, 96
    %v1136 = vpop.permute.xlu0 %1135
    %1137 = vrot.lane.b32.xlu0 %v890, 96
    %v1138 = vpop.permute.xlu0 %1137
    %1139 = vrot.lane.b32.xlu0 %v891, 96
    %v1140 = vpop.permute.xlu0 %1139
    %1141 = vrot.lane.b32.xlu0 %v892, 96
    %v1142 = vpop.permute.xlu0 %1141
    %1143 = vrot.lane.b32.xlu0 %v893, 96
    %v1144 = vpop.permute.xlu0 %1143
    %1145 = vrot.lane.b32.xlu0 %v894, 96
    %v1146 = vpop.permute.xlu0 %1145
    %1147 = vrot.lane.b32.xlu0 %v895, 96
    %v1148 = vpop.permute.xlu0 %1147
    %1149 = vrot.lane.b32.xlu0 %v896, 96
    %v1150 = vpop.permute.xlu0 %1149
    %1151 = vrot.lane.b32.xlu0 %v897, 96
    %v1152 = vpop.permute.xlu0 %1151
    %1153 = vrot.lane.b32.xlu0 %v898, 96
    %v1154 = vpop.permute.xlu0 %1153
    %1155 = vrot.lane.b32.xlu0 %v899, 96
    %v1156 = vpop.permute.xlu0 %1155
    %1157 = vrot.lane.b32.xlu0 %v900, 96
    %v1158 = vpop.permute.xlu0 %1157
    %1182 = vrot.lane.b32.xlu0 %v860, 32
    %v1183 = vpop.permute.xlu0 %1182
    %1184 = vrot.lane.b32.xlu0 %v861, 32
    %v1185 = vpop.permute.xlu0 %1184
    %1186 = vrot.lane.b32.xlu0 %v862, 32
    %v1187 = vpop.permute.xlu0 %1186
    %1188 = vrot.lane.b32.xlu0 %v863, 32
    %v1189 = vpop.permute.xlu0 %1188
    %1190 = vrot.lane.b32.xlu0 %v864, 32
    %v1191 = vpop.permute.xlu0 %1190
    %1192 = vrot.lane.b32.xlu0 %v865, 32
    %v1193 = vpop.permute.xlu0 %1192
    %1194 = vrot.lane.b32.xlu0 %v866, 32
    %v1195 = vpop.permute.xlu0 %1194
    %1196 = vrot.lane.b32.xlu0 %v867, 32
    %v1197 = vpop.permute.xlu0 %1196
    %1198 = vrot.lane.b32.xlu0 %v868, 32
    %v1199 = vpop.permute.xlu0 %1198
    %1200 = vrot.lane.b32.xlu0 %v869, 32
    %v1201 = vpop.permute.xlu0 %1200
    %1202 = vrot.lane.b32.xlu0 %v870, 32
    %v1203 = vpop.permute.xlu0 %1202
    %1204 = vrot.lane.b32.xlu0 %v871, 32
    %v1205 = vpop.permute.xlu0 %1204
    %1206 = vrot.lane.b32.xlu0 %v872, 32
    %v1207 = vpop.permute.xlu0 %1206
    %1208 = vrot.lane.b32.xlu0 %v873, 32
    %v1209 = vpop.permute.xlu0 %1208
    %1210 = vrot.lane.b32.xlu0 %v874, 32
    %v1211 = vpop.permute.xlu0 %1210
    %1212 = vrot.lane.b32.xlu0 %v875, 32
    %v1213 = vpop.permute.xlu0 %1212
    %1214 = vrot.lane.b32.xlu0 %v876, 32
    %v1215 = vpop.permute.xlu0 %1214
    %1216 = vrot.lane.b32.xlu0 %v877, 32
    %v1217 = vpop.permute.xlu0 %1216
    %1218 = vrot.lane.b32.xlu0 %v878, 32
    %v1219 = vpop.permute.xlu0 %1218
    %1220 = vrot.lane.b32.xlu0 %v903, 32
    %v1221 = vpop.permute.xlu0 %1220
    %1222 = vrot.lane.b32.xlu0 %v904, 32
    %v1223 = vpop.permute.xlu0 %1222
    %1247 = vrot.lane.b32.xlu0 %v881, 64
    %v1248 = vpop.permute.xlu0 %1247
    %1249 = vrot.lane.b32.xlu0 %v882, 64
    %v1250 = vpop.permute.xlu0 %1249
    %1251 = vrot.lane.b32.xlu0 %v883, 64
    %v1252 = vpop.permute.xlu0 %1251
    %1253 = vrot.lane.b32.xlu0 %v884, 64
    %v1254 = vpop.permute.xlu0 %1253
    %1255 = vrot.lane.b32.xlu0 %v885, 64
    %v1256 = vpop.permute.xlu0 %1255
    %1257 = vrot.lane.b32.xlu0 %v886, 64
    %v1258 = vpop.permute.xlu0 %1257
    %1259 = vrot.lane.b32.xlu0 %v887, 64
    %v1260 = vpop.permute.xlu0 %1259
    %1261 = vrot.lane.b32.xlu0 %v888, 64
    %v1262 = vpop.permute.xlu0 %1261
    %1263 = vrot.lane.b32.xlu0 %v889, 64
    %v1264 = vpop.permute.xlu0 %1263
    %1265 = vrot.lane.b32.xlu0 %v890, 64
    %v1266 = vpop.permute.xlu0 %1265
    %1267 = vrot.lane.b32.xlu0 %v891, 64
    %v1268 = vpop.permute.xlu0 %1267
    %1269 = vrot.lane.b32.xlu0 %v892, 64
    %v1270 = vpop.permute.xlu0 %1269
    %1271 = vrot.lane.b32.xlu0 %v893, 64
    %v1272 = vpop.permute.xlu0 %1271
    %1273 = vrot.lane.b32.xlu0 %v894, 64
    %v1274 = vpop.permute.xlu0 %1273
    %1275 = vrot.lane.b32.xlu0 %v895, 64
    %v1276 = vpop.permute.xlu0 %1275
    %1277 = vrot.lane.b32.xlu0 %v896, 64
    %v1278 = vpop.permute.xlu0 %1277
    %1279 = vrot.lane.b32.xlu0 %v897, 64
    %v1280 = vpop.permute.xlu0 %1279
    %1281 = vrot.lane.b32.xlu0 %v898, 64
    %v1282 = vpop.permute.xlu0 %1281
    %1283 = vrot.lane.b32.xlu0 %v899, 64
    %v1284 = vpop.permute.xlu0 %1283
    %1285 = vrot.lane.b32.xlu0 %v905, 64
    %v1286 = vpop.permute.xlu0 %1285
    %1287 = vrot.lane.b32.xlu0 %v906, 64
    %v1288 = vpop.permute.xlu0 %1287
    %1331 = vrot.lane.b32.xlu0 %v907, 96
    %v1332 = vpop.permute.xlu0 %1331
    %1333 = vrot.lane.b32.xlu0 %v908, 96
    %v1334 = vpop.permute.xlu0 %1333
    %1335 = vrot.lane.b32.xlu0 %v909, 96
    %v1336 = vpop.permute.xlu0 %1335
    %1337 = vrot.lane.b32.xlu0 %v910, 96
    %v1338 = vpop.permute.xlu0 %1337
    %1339 = vrot.lane.b32.xlu0 %v911, 96
    %v1340 = vpop.permute.xlu0 %1339
    %1341 = vrot.lane.b32.xlu0 %v912, 96
    %v1342 = vpop.permute.xlu0 %1341
    %1343 = vrot.lane.b32.xlu0 %v913, 96
    %v1344 = vpop.permute.xlu0 %1343
    %1345 = vrot.lane.b32.xlu0 %v914, 96
    %v1346 = vpop.permute.xlu0 %1345
    %1347 = vrot.lane.b32.xlu0 %v915, 96
    %v1348 = vpop.permute.xlu0 %1347
    %1349 = vrot.lane.b32.xlu0 %v916, 96
    %v1350 = vpop.permute.xlu0 %1349
    %1351 = vrot.lane.b32.xlu0 %v917, 96
    %v1352 = vpop.permute.xlu0 %1351
    %1353 = vrot.lane.b32.xlu0 %v918, 96
    %v1354 = vpop.permute.xlu0 %1353
    %1355 = vrot.lane.b32.xlu0 %v919, 96
    %v1356 = vpop.permute.xlu0 %1355
    %1357 = vrot.lane.b32.xlu0 %v920, 96
    %v1358 = vpop.permute.xlu0 %1357
    %1359 = vrot.lane.b32.xlu0 %v921, 96
    %v1360 = vpop.permute.xlu0 %1359
    %1361 = vrot.lane.b32.xlu0 %v922, 96
    %v1362 = vpop.permute.xlu0 %1361
    %1363 = vrot.lane.b32.xlu0 %v923, 96
    %v1364 = vpop.permute.xlu0 %1363
    %1365 = vrot.lane.b32.xlu0 %v924, 96
    %v1366 = vpop.permute.xlu0 %1365
    %1367 = vrot.lane.b32.xlu0 %v925, 96
    %v1368 = vpop.permute.xlu0 %1367
    %1369 = vrot.lane.b32.xlu0 %v926, 96
    %v1370 = vpop.permute.xlu0 %1369
    %1371 = vrot.lane.b32.xlu0 %v927, 96
    %v1372 = vpop.permute.xlu0 %1371
    %v1394 = vsel %vm789, %v817, %v950
    %v1395 = vsel %vm789, %v818, %v952
    %v1396 = vsel %vm789, %v819, %v954
    %v1397 = vsel %vm789, %v820, %v956
    %v1398 = vsel %vm789, %v821, %v958
    %v1399 = vsel %vm789, %v822, %v960
    %v1400 = vsel %vm789, %v823, %v962
    %v1401 = vsel %vm789, %v824, %v964
    %v1402 = vsel %vm789, %v825, %v966
    %v1403 = vsel %vm789, %v826, %v968
    %v1404 = vsel %vm789, %v827, %v970
    %v1405 = vsel %vm789, %v828, %v972
    %v1406 = vsel %vm789, %v829, %v974
    %v1407 = vsel %vm789, %v830, %v976
    %v1408 = vsel %vm789, %v831, %v978
    %v1409 = vsel %vm789, %v832, %v980
    %v1410 = vsel %vm789, %v833, %v982
    %v1411 = vsel %vm789, %v834, %v984
    %v1412 = vsel %vm789, %v835, %v986
    %v1413 = vsel %vm789, %v836, %v988
    %v1414 = vsel %vm789, %v837, %v990
    %v1415 = vsel %vm448, %v1394, %v1034
    %v1416 = vsel %vm448, %v1395, %v1036
    %v1417 = vsel %vm448, %v1396, %v1038
    %v1418 = vsel %vm448, %v1397, %v1040
    %v1419 = vsel %vm448, %v1398, %v1042
    %v1420 = vsel %vm448, %v1399, %v1044
    %v1421 = vsel %vm448, %v1400, %v1046
    %v1422 = vsel %vm448, %v1401, %v1048
    %v1423 = vsel %vm448, %v1402, %v1050
    %v1424 = vsel %vm448, %v1403, %v1052
    %v1425 = vsel %vm448, %v1404, %v1054
    %v1426 = vsel %vm448, %v1405, %v1056
    %v1427 = vsel %vm448, %v1406, %v1058
    %v1428 = vsel %vm448, %v1407, %v1060
    %v1429 = vsel %vm448, %v1408, %v1062
    %v1430 = vsel %vm448, %v1409, %v1064
    %v1431 = vsel %vm448, %v1410, %v1066
    %v1432 = vsel %vm448, %v1411, %v1068
    %v1433 = vsel %vm448, %v1412, %v1070
    %v1434 = vsel %vm448, %v1413, %v1072
    %v1435 = vsel %vm448, %v1414, %v1074
    %vm1436 = vcmask 785408
    %v1437 = vsel %vm1436, %v1415, %v1118
    %v1438 = vsel %vm1436, %v1416, %v1120
    %v1439 = vsel %vm1436, %v1417, %v1122
    %v1440 = vsel %vm1436, %v1418, %v1124
    %v1441 = vsel %vm1436, %v1419, %v1126
    %v1442 = vsel %vm1436, %v1420, %v1128
    %v1443 = vsel %vm1436, %v1421, %v1130
    %v1444 = vsel %vm1436, %v1422, %v1132
    %v1445 = vsel %vm1436, %v1423, %v1134
    %v1446 = vsel %vm1436, %v1424, %v1136
    %v1447 = vsel %vm1436, %v1425, %v1138
    %v1448 = vsel %vm1436, %v1426, %v1140
    %v1449 = vsel %vm1436, %v1427, %v1142
    %v1450 = vsel %vm1436, %v1428, %v1144
    %v1451 = vsel %vm1436, %v1429, %v1146
    %v1452 = vsel %vm1436, %v1430, %v1148
    %v1453 = vsel %vm1436, %v1431, %v1150
    %v1454 = vsel %vm1436, %v1432, %v1152
    %v1455 = vsel %vm1436, %v1433, %v1154
    %v1456 = vsel %vm1436, %v1434, %v1156
    %v1457 = vsel %vm1436, %v1435, %v1158
    %v1458 = vsel %vm789, %v839, %v1183
    %v1459 = vsel %vm789, %v840, %v1185
    %v1460 = vsel %vm789, %v841, %v1187
    %v1461 = vsel %vm789, %v842, %v1189
    %v1462 = vsel %vm789, %v843, %v1191
    %v1463 = vsel %vm789, %v844, %v1193
    %v1464 = vsel %vm789, %v845, %v1195
    %v1465 = vsel %vm789, %v846, %v1197
    %v1466 = vsel %vm789, %v847, %v1199
    %v1467 = vsel %vm789, %v848, %v1201
    %v1468 = vsel %vm789, %v849, %v1203
    %v1469 = vsel %vm789, %v850, %v1205
    %v1470 = vsel %vm789, %v851, %v1207
    %v1471 = vsel %vm789, %v852, %v1209
    %v1472 = vsel %vm789, %v853, %v1211
    %v1473 = vsel %vm789, %v854, %v1213
    %v1474 = vsel %vm789, %v855, %v1215
    %v1475 = vsel %vm789, %v856, %v1217
    %v1476 = vsel %vm789, %v857, %v1219
    %v1477 = vsel %vm789, %v901, %v1221
    %v1478 = vsel %vm789, %v902, %v1223
    %v1479 = vsel %vm448, %v1458, %v1248
    %v1480 = vsel %vm448, %v1459, %v1250
    %v1481 = vsel %vm448, %v1460, %v1252
    %v1482 = vsel %vm448, %v1461, %v1254
    %v1483 = vsel %vm448, %v1462, %v1256
    %v1484 = vsel %vm448, %v1463, %v1258
    %v1485 = vsel %vm448, %v1464, %v1260
    %v1486 = vsel %vm448, %v1465, %v1262
    %v1487 = vsel %vm448, %v1466, %v1264
    %v1488 = vsel %vm448, %v1467, %v1266
    %v1489 = vsel %vm448, %v1468, %v1268
    %v1490 = vsel %vm448, %v1469, %v1270
    %v1491 = vsel %vm448, %v1470, %v1272
    %v1492 = vsel %vm448, %v1471, %v1274
    %v1493 = vsel %vm448, %v1472, %v1276
    %v1494 = vsel %vm448, %v1473, %v1278
    %v1495 = vsel %vm448, %v1474, %v1280
    %v1496 = vsel %vm448, %v1475, %v1282
    %v1497 = vsel %vm448, %v1476, %v1284
    %v1498 = vsel %vm448, %v1477, %v1286
    %v1499 = vsel %vm448, %v1478, %v1288
    %v1500 = vsel %vm1436, %v1479, %v1332
    %v1501 = vsel %vm1436, %v1480, %v1334
    %v1502 = vsel %vm1436, %v1481, %v1336
    %v1503 = vsel %vm1436, %v1482, %v1338
    %v1504 = vsel %vm1436, %v1483, %v1340
    %v1505 = vsel %vm1436, %v1484, %v1342
    %v1506 = vsel %vm1436, %v1485, %v1344
    %v1507 = vsel %vm1436, %v1486, %v1346
    %v1508 = vsel %vm1436, %v1487, %v1348
    %v1509 = vsel %vm1436, %v1488, %v1350
    %v1510 = vsel %vm1436, %v1489, %v1352
    %v1511 = vsel %vm1436, %v1490, %v1354
    %v1512 = vsel %vm1436, %v1491, %v1356
    %v1513 = vsel %vm1436, %v1492, %v1358
    %v1514 = vsel %vm1436, %v1493, %v1360
    %v1515 = vsel %vm1436, %v1494, %v1362
    %v1516 = vsel %vm1436, %v1495, %v1364
    %v1517 = vsel %vm1436, %v1496, %v1366
    %v1518 = vsel %vm1436, %v1497, %v1368
    %v1519 = vsel %vm1436, %v1498, %v1370
    %v1520 = vsel %vm1436, %v1499, %v1372
    %v1521 = vpack.c.bf16 %v1438, %v1437
    %v1522 = vpack.c.bf16 %v1501, %v1500
    %v1523 = vpack.c.bf16 %v1440, %v1439
    %v1524 = vpack.c.bf16 %v1503, %v1502
    %v1525 = vpack.c.bf16 %v1442, %v1441
    %v1526 = vpack.c.bf16 %v1505, %v1504
    %v1527 = vpack.c.bf16 %v1444, %v1443
    %v1528 = vpack.c.bf16 %v1507, %v1506
    %v1529 = vpack.c.bf16 %v1446, %v1445
    %v1530 = vpack.c.bf16 %v1509, %v1508
    %v1531 = vpack.c.bf16 %v1448, %v1447
    %v1532 = vpack.c.bf16 %v1511, %v1510
    %v1533 = vpack.c.bf16 %v1450, %v1449
    %v1534 = vpack.c.bf16 %v1513, %v1512
    %v1535 = vpack.c.bf16 %v1452, %v1451
    %v1536 = vpack.c.bf16 %v1515, %v1514
    %v1537 = vpack.c.bf16 %v1454, %v1453
    %v1538 = vpack.c.bf16 %v1517, %v1516
    %v1539 = vpack.c.bf16 %v1456, %v1455
    %v1540 = vpack.c.bf16 %v1519, %v1518
    %v1541 = vpack.c.bf16 %v1457, %v1457
    %v1542 = vpack.c.bf16 %v1520, %v1520
    %v1543 = vld [vmem:[%s3] sm:$0xf]
    %v1544 = vld [vmem:[%s3 + $0x4] sm:$0xf]
    %v1545 = vld [vmem:[%s3 + $0x8] sm:$0xf]
    %v1546 = vld [vmem:[%s3 + $0xc] sm:$0xf]
    %v1547 = vld [vmem:[%s3 + $0x10] sm:$0xf]
    %v1548 = vld [vmem:[%s3 + $0x14] sm:$0xf]
    %v1549 = vld [vmem:[%s3 + $0x18] sm:$0xf]
    %v1550 = vld [vmem:[%s3 + $0x1c] sm:$0xf]
    %v1551 = vld [vmem:[%s3 + $0x20] sm:$0xf]
    %v1552 = vld [vmem:[%s3 + $0x24] sm:$0xf]
    %v1553 = vld [vmem:[%s3 + $0x28] sm:$0xf]
    %v1554 = vld [vmem:[%s3 + $0x2c] sm:$0xf]
    %v1555 = vld [vmem:[%s3 + $0x30] sm:$0xf]
    %v1556 = vld [vmem:[%s3 + $0x34] sm:$0xf]
    %v1557 = vld [vmem:[%s3 + $0x38] sm:$0xf]
    %v1558 = vld [vmem:[%s3 + $0x3c] sm:$0xf]
    %v1559 = vld [vmem:[%s3 + $0x40] sm:$0xf]
    %v1560 = vld [vmem:[%s3 + $0x44] sm:$0xf]
    %v1561 = vld [vmem:[%s3 + $0x48] sm:$0xf]
    %v1562 = vld [vmem:[%s3 + $0x4c] sm:$0xf]
    %v1563 = vld [vmem:[%s3 + $0x50] sm:$0xf]
    %v1564 = vld [vmem:[%s3 + $0x54] sm:$0xf]
    %v1565 = vld [vmem:[%s3 + $0x58] sm:$0xf]
    %v1566 = vld [vmem:[%s3 + $0x5c] sm:$0xf]
    %v1567 = vld [vmem:[%s3 + $0x60] sm:$0xf]
    %v1568 = vld [vmem:[%s3 + $0x64] sm:$0xf]
    %v1569 = vld [vmem:[%s3 + $0x68] sm:$0xf]
    %v1570 = vld [vmem:[%s3 + $0x6c] sm:$0xf]
    %v1571 = vld [vmem:[%s3 + $0x70] sm:$0xf]
    %v1572 = vld [vmem:[%s3 + $0x74] sm:$0xf]
    %v1573 = vld [vmem:[%s3 + $0x78] sm:$0xf]
    %v1574 = vld [vmem:[%s3 + $0x7c] sm:$0xf]
    %v1575 = vld [vmem:[#allocation2 + $0xaa] sm:$0xff]
    %v1576 = vld [vmem:[#allocation2 + $0xb2] sm:$0x3]
    %v1577 = vld [vmem:[#allocation2 + $0xab] sm:$0xff]
    %v1578 = vld [vmem:[#allocation2 + $0xb3] sm:$0x3]
    %v1579 = vld [vmem:[#allocation2 + $0xac] sm:$0xff]
    %v1580 = vld [vmem:[#allocation2 + $0xb4] sm:$0x3]
    %v1581 = vld [vmem:[#allocation2 + $0x15] sm:$0xff]
    %v1582 = vld [vmem:[#allocation2 + $0x1d] sm:$0xff]
    %v1583 = vld [vmem:[#allocation2 + $0x25] sm:$0xff]
    %v1584 = vld [vmem:[#allocation2 + $0x2d] sm:$0xff]
    %v1585 = vld [vmem:[#allocation2 + $0x35] sm:$0xff]
    %v1586 = vld [vmem:[#allocation2 + $0x3d] sm:$0xff]
    %v1587 = vld [vmem:[#allocation2 + $0x45] sm:$0xff]
    %v1588 = vld [vmem:[#allocation2 + $0x4d] sm:$0xff]
    %v1589 = vld [vmem:[#allocation2 + $0x55] sm:$0xff]
    %v1590 = vld [vmem:[#allocation2 + $0x5d] sm:$0xff]
    %v1591 = vld [vmem:[#allocation2 + $0x65] sm:$0xff]
    %v1592 = vld [vmem:[#allocation2 + $0x6d] sm:$0xff]
    %v1593 = vld [vmem:[#allocation2 + $0x75] sm:$0xff]
    %v1594 = vld [vmem:[#allocation2 + $0x7d] sm:$0xff]
    %v1595 = vld [vmem:[#allocation2 + $0x85] sm:$0xff]
    %v1596 = vld [vmem:[#allocation2 + $0x8d] sm:$0xff]
    %v1597 = vld [vmem:[#allocation2 + $0x95] sm:$0xff]
    %v1598 = vld [vmem:[#allocation2 + $0x9d] sm:$0xff]
    %v1599 = vld [vmem:[#allocation2 + $0xa5] sm:$0xff]
    %v1600 = vld [vmem:[#allocation2 + $0xad] sm:$0xff]
    %v1601 = vld [vmem:[#allocation2 + $0xb5] sm:$0x3]
    %v1602 = vld [vmem:[#allocation2 + $0xb3] sm:$0xff]
    %v1603 = vld [vmem:[#allocation2 + $0xbb] sm:$0x3]
    %v1604 = vld [vmem:[#allocation2 + $0xb4] sm:$0xff]
    %v1605 = vld [vmem:[#allocation2 + $0xbc] sm:$0x3]
    %v1606 = vld [vmem:[#allocation2 + $0xb5] sm:$0xff]
    %v1607 = vld [vmem:[#allocation2 + $0xbd] sm:$0x3]
    %v1608 = vld [vmem:[#allocation2 + $0x1e] sm:$0xff]
    %v1609 = vld [vmem:[#allocation2 + $0x26] sm:$0xff]
    %v1610 = vld [vmem:[#allocation2 + $0x2e] sm:$0xff]
    %v1611 = vld [vmem:[#allocation2 + $0x36] sm:$0xff]
    %v1612 = vld [vmem:[#allocation2 + $0x3e] sm:$0xff]
    %v1613 = vld [vmem:[#allocation2 + $0x46] sm:$0xff]
    %v1614 = vld [vmem:[#allocation2 + $0x4e] sm:$0xff]
    %v1615 = vld [vmem:[#allocation2 + $0x56] sm:$0xff]
    %v1616 = vld [vmem:[#allocation2 + $0x5e] sm:$0xff]
    %v1617 = vld [vmem:[#allocation2 + $0x66] sm:$0xff]
    %v1618 = vld [vmem:[#allocation2 + $0x6e] sm:$0xff]
    %v1619 = vld [vmem:[#allocation2 + $0x76] sm:$0xff]
    %v1620 = vld [vmem:[#allocation2 + $0x7e] sm:$0xff]
    %v1621 = vld [vmem:[#allocation2 + $0x86] sm:$0xff]
    %v1622 = vld [vmem:[#allocation2 + $0x8e] sm:$0xff]
    %v1623 = vld [vmem:[#allocation2 + $0x96] sm:$0xff]
    %v1624 = vld [vmem:[#allocation2 + $0x9e] sm:$0xff]
    %v1625 = vld [vmem:[#allocation2 + $0xa6] sm:$0xff]
    %v1626 = vld [vmem:[#allocation2 + $0xae] sm:$0xff]
    %v1627 = vld [vmem:[#allocation2 + $0xb6] sm:$0xff]
    %v1628 = vld [vmem:[#allocation2 + $0xbe] sm:$0x3]
    %1631 = vrot.lane.b32.xlu0 %v882, 32
    %v1632 = vpop.permute.xlu0 %1631
    %1633 = vrot.lane.b32.xlu0 %v883, 32
    %v1634 = vpop.permute.xlu0 %1633
    %1635 = vrot.lane.b32.xlu0 %v884, 32
    %v1636 = vpop.permute.xlu0 %1635
    %1637 = vrot.lane.b32.xlu0 %v885, 32
    %v1638 = vpop.permute.xlu0 %1637
    %1639 = vrot.lane.b32.xlu0 %v886, 32
    %v1640 = vpop.permute.xlu0 %1639
    %1641 = vrot.lane.b32.xlu0 %v887, 32
    %v1642 = vpop.permute.xlu0 %1641
    %1643 = vrot.lane.b32.xlu0 %v888, 32
    %v1644 = vpop.permute.xlu0 %1643
    %1645 = vrot.lane.b32.xlu0 %v889, 32
    %v1646 = vpop.permute.xlu0 %1645
    %1647 = vrot.lane.b32.xlu0 %v890, 32
    %v1648 = vpop.permute.xlu0 %1647
    %1649 = vrot.lane.b32.xlu0 %v891, 32
    %v1650 = vpop.permute.xlu0 %1649
    %1651 = vrot.lane.b32.xlu0 %v892, 32
    %v1652 = vpop.permute.xlu0 %1651
    %1653 = vrot.lane.b32.xlu0 %v893, 32
    %v1654 = vpop.permute.xlu0 %1653
    %1655 = vrot.lane.b32.xlu0 %v894, 32
    %v1656 = vpop.permute.xlu0 %1655
    %1657 = vrot.lane.b32.xlu0 %v895, 32
    %v1658 = vpop.permute.xlu0 %1657
    %1659 = vrot.lane.b32.xlu0 %v896, 32
    %v1660 = vpop.permute.xlu0 %1659
    %1661 = vrot.lane.b32.xlu0 %v897, 32
    %v1662 = vpop.permute.xlu0 %1661
    %1663 = vrot.lane.b32.xlu0 %v898, 32
    %v1664 = vpop.permute.xlu0 %1663
    %1665 = vrot.lane.b32.xlu0 %v899, 32
    %v1666 = vpop.permute.xlu0 %1665
    %1667 = vrot.lane.b32.xlu0 %v905, 32
    %v1668 = vpop.permute.xlu0 %1667
    %1669 = vrot.lane.b32.xlu0 %v1577, 32
    %v1670 = vpop.permute.xlu0 %1669
    %1671 = vrot.lane.b32.xlu0 %v1578, 32
    %v1672 = vpop.permute.xlu0 %1671
    %1696 = vrot.lane.b32.xlu0 %v908, 64
    %v1697 = vpop.permute.xlu0 %1696
    %1698 = vrot.lane.b32.xlu0 %v909, 64
    %v1699 = vpop.permute.xlu0 %1698
    %1700 = vrot.lane.b32.xlu0 %v910, 64
    %v1701 = vpop.permute.xlu0 %1700
    %1702 = vrot.lane.b32.xlu0 %v911, 64
    %v1703 = vpop.permute.xlu0 %1702
    %1704 = vrot.lane.b32.xlu0 %v912, 64
    %v1705 = vpop.permute.xlu0 %1704
    %1706 = vrot.lane.b32.xlu0 %v913, 64
    %v1707 = vpop.permute.xlu0 %1706
    %1708 = vrot.lane.b32.xlu0 %v914, 64
    %v1709 = vpop.permute.xlu0 %1708
    %1710 = vrot.lane.b32.xlu0 %v915, 64
    %v1711 = vpop.permute.xlu0 %1710
    %1712 = vrot.lane.b32.xlu0 %v916, 64
    %v1713 = vpop.permute.xlu0 %1712
    %1714 = vrot.lane.b32.xlu0 %v917, 64
    %v1715 = vpop.permute.xlu0 %1714
    %1716 = vrot.lane.b32.xlu0 %v918, 64
    %v1717 = vpop.permute.xlu0 %1716
    %1718 = vrot.lane.b32.xlu0 %v919, 64
    %v1719 = vpop.permute.xlu0 %1718
    %1720 = vrot.lane.b32.xlu0 %v920, 64
    %v1721 = vpop.permute.xlu0 %1720
    %1722 = vrot.lane.b32.xlu0 %v921, 64
    %v1723 = vpop.permute.xlu0 %1722
    %1724 = vrot.lane.b32.xlu0 %v922, 64
    %v1725 = vpop.permute.xlu0 %1724
    %1726 = vrot.lane.b32.xlu0 %v923, 64
    %v1727 = vpop.permute.xlu0 %1726
    %1728 = vrot.lane.b32.xlu0 %v924, 64
    %v1729 = vpop.permute.xlu0 %1728
    %1730 = vrot.lane.b32.xlu0 %v925, 64
    %v1731 = vpop.permute.xlu0 %1730
    %1732 = vrot.lane.b32.xlu0 %v926, 64
    %v1733 = vpop.permute.xlu0 %1732
    %1734 = vrot.lane.b32.xlu0 %v1579, 64
    %v1735 = vpop.permute.xlu0 %1734
    %1736 = vrot.lane.b32.xlu0 %v1580, 64
    %v1737 = vpop.permute.xlu0 %1736
    %1780 = vrot.lane.b32.xlu0 %v1581, 96
    %v1781 = vpop.permute.xlu0 %1780
    %1782 = vrot.lane.b32.xlu0 %v1582, 96
    %v1783 = vpop.permute.xlu0 %1782
    %1784 = vrot.lane.b32.xlu0 %v1583, 96
    %v1785 = vpop.permute.xlu0 %1784
    %1786 = vrot.lane.b32.xlu0 %v1584, 96
    %v1787 = vpop.permute.xlu0 %1786
    %1788 = vrot.lane.b32.xlu0 %v1585, 96
    %v1789 = vpop.permute.xlu0 %1788
    %1790 = vrot.lane.b32.xlu0 %v1586, 96
    %v1791 = vpop.permute.xlu0 %1790
    %1792 = vrot.lane.b32.xlu0 %v1587, 96
    %v1793 = vpop.permute.xlu0 %1792
    %1794 = vrot.lane.b32.xlu0 %v1588, 96
    %v1795 = vpop.permute.xlu0 %1794
    %1796 = vrot.lane.b32.xlu0 %v1589, 96
    %v1797 = vpop.permute.xlu0 %1796
    %1798 = vrot.lane.b32.xlu0 %v1590, 96
    %v1799 = vpop.permute.xlu0 %1798
    %1800 = vrot.lane.b32.xlu0 %v1591, 96
    %v1801 = vpop.permute.xlu0 %1800
    %1802 = vrot.lane.b32.xlu0 %v1592, 96
    %v1803 = vpop.permute.xlu0 %1802
    %1804 = vrot.lane.b32.xlu0 %v1593, 96
    %v1805 = vpop.permute.xlu0 %1804
    %1806 = vrot.lane.b32.xlu0 %v1594, 96
    %v1807 = vpop.permute.xlu0 %1806
    %1808 = vrot.lane.b32.xlu0 %v1595, 96
    %v1809 = vpop.permute.xlu0 %1808
    %1810 = vrot.lane.b32.xlu0 %v1596, 96
    %v1811 = vpop.permute.xlu0 %1810
    %1812 = vrot.lane.b32.xlu0 %v1597, 96
    %v1813 = vpop.permute.xlu0 %1812
    %1814 = vrot.lane.b32.xlu0 %v1598, 96
    %v1815 = vpop.permute.xlu0 %1814
    %1816 = vrot.lane.b32.xlu0 %v1599, 96
    %v1817 = vpop.permute.xlu0 %1816
    %1818 = vrot.lane.b32.xlu0 %v1600, 96
    %v1819 = vpop.permute.xlu0 %1818
    %1820 = vrot.lane.b32.xlu0 %v1601, 96
    %v1821 = vpop.permute.xlu0 %1820
    %1845 = vrot.lane.b32.xlu0 %v909, 32
    %v1846 = vpop.permute.xlu0 %1845
    %1847 = vrot.lane.b32.xlu0 %v910, 32
    %v1848 = vpop.permute.xlu0 %1847
    %1849 = vrot.lane.b32.xlu0 %v911, 32
    %v1850 = vpop.permute.xlu0 %1849
    %1851 = vrot.lane.b32.xlu0 %v912, 32
    %v1852 = vpop.permute.xlu0 %1851
    %1853 = vrot.lane.b32.xlu0 %v913, 32
    %v1854 = vpop.permute.xlu0 %1853
    %1855 = vrot.lane.b32.xlu0 %v914, 32
    %v1856 = vpop.permute.xlu0 %1855
    %1857 = vrot.lane.b32.xlu0 %v915, 32
    %v1858 = vpop.permute.xlu0 %1857
    %1859 = vrot.lane.b32.xlu0 %v916, 32
    %v1860 = vpop.permute.xlu0 %1859
    %1861 = vrot.lane.b32.xlu0 %v917, 32
    %v1862 = vpop.permute.xlu0 %1861
    %1863 = vrot.lane.b32.xlu0 %v918, 32
    %v1864 = vpop.permute.xlu0 %1863
    %1865 = vrot.lane.b32.xlu0 %v919, 32
    %v1866 = vpop.permute.xlu0 %1865
    %1867 = vrot.lane.b32.xlu0 %v920, 32
    %v1868 = vpop.permute.xlu0 %1867
    %1869 = vrot.lane.b32.xlu0 %v921, 32
    %v1870 = vpop.permute.xlu0 %1869
    %1871 = vrot.lane.b32.xlu0 %v922, 32
    %v1872 = vpop.permute.xlu0 %1871
    %1873 = vrot.lane.b32.xlu0 %v923, 32
    %v1874 = vpop.permute.xlu0 %1873
    %1875 = vrot.lane.b32.xlu0 %v924, 32
    %v1876 = vpop.permute.xlu0 %1875
    %1877 = vrot.lane.b32.xlu0 %v925, 32
    %v1878 = vpop.permute.xlu0 %1877
    %1879 = vrot.lane.b32.xlu0 %v926, 32
    %v1880 = vpop.permute.xlu0 %1879
    %1881 = vrot.lane.b32.xlu0 %v1579, 32
    %v1882 = vpop.permute.xlu0 %1881
    %1883 = vrot.lane.b32.xlu0 %v1604, 32
    %v1884 = vpop.permute.xlu0 %1883
    %1885 = vrot.lane.b32.xlu0 %v1605, 32
    %v1886 = vpop.permute.xlu0 %1885
    %1910 = vrot.lane.b32.xlu0 %v1582, 64
    %v1911 = vpop.permute.xlu0 %1910
    %1912 = vrot.lane.b32.xlu0 %v1583, 64
    %v1913 = vpop.permute.xlu0 %1912
    %1914 = vrot.lane.b32.xlu0 %v1584, 64
    %v1915 = vpop.permute.xlu0 %1914
    %1916 = vrot.lane.b32.xlu0 %v1585, 64
    %v1917 = vpop.permute.xlu0 %1916
    %1918 = vrot.lane.b32.xlu0 %v1586, 64
    %v1919 = vpop.permute.xlu0 %1918
    %1920 = vrot.lane.b32.xlu0 %v1587, 64
    %v1921 = vpop.permute.xlu0 %1920
    %1922 = vrot.lane.b32.xlu0 %v1588, 64
    %v1923 = vpop.permute.xlu0 %1922
    %1924 = vrot.lane.b32.xlu0 %v1589, 64
    %v1925 = vpop.permute.xlu0 %1924
    %1926 = vrot.lane.b32.xlu0 %v1590, 64
    %v1927 = vpop.permute.xlu0 %1926
    %1928 = vrot.lane.b32.xlu0 %v1591, 64
    %v1929 = vpop.permute.xlu0 %1928
    %1930 = vrot.lane.b32.xlu0 %v1592, 64
    %v1931 = vpop.permute.xlu0 %1930
    %1932 = vrot.lane.b32.xlu0 %v1593, 64
    %v1933 = vpop.permute.xlu0 %1932
    %1934 = vrot.lane.b32.xlu0 %v1594, 64
    %v1935 = vpop.permute.xlu0 %1934
    %1936 = vrot.lane.b32.xlu0 %v1595, 64
    %v1937 = vpop.permute.xlu0 %1936
    %1938 = vrot.lane.b32.xlu0 %v1596, 64
    %v1939 = vpop.permute.xlu0 %1938
    %1940 = vrot.lane.b32.xlu0 %v1597, 64
    %v1941 = vpop.permute.xlu0 %1940
    %1942 = vrot.lane.b32.xlu0 %v1598, 64
    %v1943 = vpop.permute.xlu0 %1942
    %1944 = vrot.lane.b32.xlu0 %v1599, 64
    %v1945 = vpop.permute.xlu0 %1944
    %1946 = vrot.lane.b32.xlu0 %v1600, 64
    %v1947 = vpop.permute.xlu0 %1946
    %1948 = vrot.lane.b32.xlu0 %v1606, 64
    %v1949 = vpop.permute.xlu0 %1948
    %1950 = vrot.lane.b32.xlu0 %v1607, 64
    %v1951 = vpop.permute.xlu0 %1950
    %1994 = vrot.lane.b32.xlu0 %v1608, 96
    %v1995 = vpop.permute.xlu0 %1994
    %1996 = vrot.lane.b32.xlu0 %v1609, 96
    %v1997 = vpop.permute.xlu0 %1996
    %1998 = vrot.lane.b32.xlu0 %v1610, 96
    %v1999 = vpop.permute.xlu0 %1998
    %2000 = vrot.lane.b32.xlu0 %v1611, 96
    %v2001 = vpop.permute.xlu0 %2000
    %2002 = vrot.lane.b32.xlu0 %v1612, 96
    %v2003 = vpop.permute.xlu0 %2002
    %2004 = vrot.lane.b32.xlu0 %v1613, 96
    %v2005 = vpop.permute.xlu0 %2004
    %2006 = vrot.lane.b32.xlu0 %v1614, 96
    %v2007 = vpop.permute.xlu0 %2006
    %2008 = vrot.lane.b32.xlu0 %v1615, 96
    %v2009 = vpop.permute.xlu0 %2008
    %2010 = vrot.lane.b32.xlu0 %v1616, 96
    %v2011 = vpop.permute.xlu0 %2010
    %2012 = vrot.lane.b32.xlu0 %v1617, 96
    %v2013 = vpop.permute.xlu0 %2012
    %2014 = vrot.lane.b32.xlu0 %v1618, 96
    %v2015 = vpop.permute.xlu0 %2014
    %2016 = vrot.lane.b32.xlu0 %v1619, 96
    %v2017 = vpop.permute.xlu0 %2016
    %2018 = vrot.lane.b32.xlu0 %v1620, 96
    %v2019 = vpop.permute.xlu0 %2018
    %2020 = vrot.lane.b32.xlu0 %v1621, 96
    %v2021 = vpop.permute.xlu0 %2020
    %2022 = vrot.lane.b32.xlu0 %v1622, 96
    %v2023 = vpop.permute.xlu0 %2022
    %2024 = vrot.lane.b32.xlu0 %v1623, 96
    %v2025 = vpop.permute.xlu0 %2024
    %2026 = vrot.lane.b32.xlu0 %v1624, 96
    %v2027 = vpop.permute.xlu0 %2026
    %2028 = vrot.lane.b32.xlu0 %v1625, 96
    %v2029 = vpop.permute.xlu0 %2028
    %2030 = vrot.lane.b32.xlu0 %v1626, 96
    %v2031 = vpop.permute.xlu0 %2030
    %2032 = vrot.lane.b32.xlu0 %v1627, 96
    %v2033 = vpop.permute.xlu0 %2032
    %2034 = vrot.lane.b32.xlu0 %v1628, 96
    %v2035 = vpop.permute.xlu0 %2034
    %v2057 = vsel %vm789, %v861, %v1632
    %v2058 = vsel %vm789, %v862, %v1634
    %v2059 = vsel %vm789, %v863, %v1636
    %v2060 = vsel %vm789, %v864, %v1638
    %v2061 = vsel %vm789, %v865, %v1640
    %v2062 = vsel %vm789, %v866, %v1642
    %v2063 = vsel %vm789, %v867, %v1644
    %v2064 = vsel %vm789, %v868, %v1646
    %v2065 = vsel %vm789, %v869, %v1648
    %v2066 = vsel %vm789, %v870, %v1650
    %v2067 = vsel %vm789, %v871, %v1652
    %v2068 = vsel %vm789, %v872, %v1654
    %v2069 = vsel %vm789, %v873, %v1656
    %v2070 = vsel %vm789, %v874, %v1658
    %v2071 = vsel %vm789, %v875, %v1660
    %v2072 = vsel %vm789, %v876, %v1662
    %v2073 = vsel %vm789, %v877, %v1664
    %v2074 = vsel %vm789, %v878, %v1666
    %v2075 = vsel %vm789, %v903, %v1668
    %v2076 = vsel %vm789, %v1575, %v1670
    %v2077 = vsel %vm789, %v1576, %v1672
    %v2078 = vsel %vm448, %v2057, %v1697
    %v2079 = vsel %vm448, %v2058, %v1699
    %v2080 = vsel %vm448, %v2059, %v1701
    %v2081 = vsel %vm448, %v2060, %v1703
    %v2082 = vsel %vm448, %v2061, %v1705
    %v2083 = vsel %vm448, %v2062, %v1707
    %v2084 = vsel %vm448, %v2063, %v1709
    %v2085 = vsel %vm448, %v2064, %v1711
    %v2086 = vsel %vm448, %v2065, %v1713
    %v2087 = vsel %vm448, %v2066, %v1715
    %v2088 = vsel %vm448, %v2067, %v1717
    %v2089 = vsel %vm448, %v2068, %v1719
    %v2090 = vsel %vm448, %v2069, %v1721
    %v2091 = vsel %vm448, %v2070, %v1723
    %v2092 = vsel %vm448, %v2071, %v1725
    %v2093 = vsel %vm448, %v2072, %v1727
    %v2094 = vsel %vm448, %v2073, %v1729
    %v2095 = vsel %vm448, %v2074, %v1731
    %v2096 = vsel %vm448, %v2075, %v1733
    %v2097 = vsel %vm448, %v2076, %v1735
    %v2098 = vsel %vm448, %v2077, %v1737
    %v2099 = vsel %vm1436, %v2078, %v1781
    %v2100 = vsel %vm1436, %v2079, %v1783
    %v2101 = vsel %vm1436, %v2080, %v1785
    %v2102 = vsel %vm1436, %v2081, %v1787
    %v2103 = vsel %vm1436, %v2082, %v1789
    %v2104 = vsel %vm1436, %v2083, %v1791
    %v2105 = vsel %vm1436, %v2084, %v1793
    %v2106 = vsel %vm1436, %v2085, %v1795
    %v2107 = vsel %vm1436, %v2086, %v1797
    %v2108 = vsel %vm1436, %v2087, %v1799
    %v2109 = vsel %vm1436, %v2088, %v1801
    %v2110 = vsel %vm1436, %v2089, %v1803
    %v2111 = vsel %vm1436, %v2090, %v1805
    %v2112 = vsel %vm1436, %v2091, %v1807
    %v2113 = vsel %vm1436, %v2092, %v1809
    %v2114 = vsel %vm1436, %v2093, %v1811
    %v2115 = vsel %vm1436, %v2094, %v1813
    %v2116 = vsel %vm1436, %v2095, %v1815
    %v2117 = vsel %vm1436, %v2096, %v1817
    %v2118 = vsel %vm1436, %v2097, %v1819
    %v2119 = vsel %vm1436, %v2098, %v1821
    %v2120 = vsel %vm789, %v883, %v1846
    %v2121 = vsel %vm789, %v884, %v1848
    %v2122 = vsel %vm789, %v885, %v1850
    %v2123 = vsel %vm789, %v886, %v1852
    %v2124 = vsel %vm789, %v887, %v1854
    %v2125 = vsel %vm789, %v888, %v1856
    %v2126 = vsel %vm789, %v889, %v1858
    %v2127 = vsel %vm789, %v890, %v1860
    %v2128 = vsel %vm789, %v891, %v1862
    %v2129 = vsel %vm789, %v892, %v1864
    %v2130 = vsel %vm789, %v893, %v1866
    %v2131 = vsel %vm789, %v894, %v1868
    %v2132 = vsel %vm789, %v895, %v1870
    %v2133 = vsel %vm789, %v896, %v1872
    %v2134 = vsel %vm789, %v897, %v1874
    %v2135 = vsel %vm789, %v898, %v1876
    %v2136 = vsel %vm789, %v899, %v1878
    %v2137 = vsel %vm789, %v905, %v1880
    %v2138 = vsel %vm789, %v1577, %v1882
    %v2139 = vsel %vm789, %v1602, %v1884
    %v2140 = vsel %vm789, %v1603, %v1886
    %v2141 = vsel %vm448, %v2120, %v1911
    %v2142 = vsel %vm448, %v2121, %v1913
    %v2143 = vsel %vm448, %v2122, %v1915
    %v2144 = vsel %vm448, %v2123, %v1917
    %v2145 = vsel %vm448, %v2124, %v1919
    %v2146 = vsel %vm448, %v2125, %v1921
    %v2147 = vsel %vm448, %v2126, %v1923
    %v2148 = vsel %vm448, %v2127, %v1925
    %v2149 = vsel %vm448, %v2128, %v1927
    %v2150 = vsel %vm448, %v2129, %v1929
    %v2151 = vsel %vm448, %v2130, %v1931
    %v2152 = vsel %vm448, %v2131, %v1933
    %v2153 = vsel %vm448, %v2132, %v1935
    %v2154 = vsel %vm448, %v2133, %v1937
    %v2155 = vsel %vm448, %v2134, %v1939
    %v2156 = vsel %vm448, %v2135, %v1941
    %v2157 = vsel %vm448, %v2136, %v1943
    %v2158 = vsel %vm448, %v2137, %v1945
    %v2159 = vsel %vm448, %v2138, %v1947
    %v2160 = vsel %vm448, %v2139, %v1949
    %v2161 = vsel %vm448, %v2140, %v1951
    %v2162 = vsel %vm1436, %v2141, %v1995
    %v2163 = vsel %vm1436, %v2142, %v1997
    %v2164 = vsel %vm1436, %v2143, %v1999
    %v2165 = vsel %vm1436, %v2144, %v2001
    %v2166 = vsel %vm1436, %v2145, %v2003
    %v2167 = vsel %vm1436, %v2146, %v2005
    %v2168 = vsel %vm1436, %v2147, %v2007
    %v2169 = vsel %vm1436, %v2148, %v2009
    %v2170 = vsel %vm1436, %v2149, %v2011
    %v2171 = vsel %vm1436, %v2150, %v2013
    %v2172 = vsel %vm1436, %v2151, %v2015
    %v2173 = vsel %vm1436, %v2152, %v2017
    %v2174 = vsel %vm1436, %v2153, %v2019
    %v2175 = vsel %vm1436, %v2154, %v2021
    %v2176 = vsel %vm1436, %v2155, %v2023
    %v2177 = vsel %vm1436, %v2156, %v2025
    %v2178 = vsel %vm1436, %v2157, %v2027
    %v2179 = vsel %vm1436, %v2158, %v2029
    %v2180 = vsel %vm1436, %v2159, %v2031
    %v2181 = vsel %vm1436, %v2160, %v2033
    %v2182 = vsel %vm1436, %v2161, %v2035
    %v2183 = vpack.c.bf16 %v2100, %v2099
    %v2184 = vpack.c.bf16 %v2163, %v2162
    %v2185 = vpack.c.bf16 %v2102, %v2101
    %v2186 = vpack.c.bf16 %v2165, %v2164
    %v2187 = vpack.c.bf16 %v2104, %v2103
    %v2188 = vpack.c.bf16 %v2167, %v2166
    %v2189 = vpack.c.bf16 %v2106, %v2105
    %v2190 = vpack.c.bf16 %v2169, %v2168
    %v2191 = vpack.c.bf16 %v2108, %v2107
    %v2192 = vpack.c.bf16 %v2171, %v2170
    %v2193 = vpack.c.bf16 %v2110, %v2109
    %v2194 = vpack.c.bf16 %v2173, %v2172
    %v2195 = vpack.c.bf16 %v2112, %v2111
    %v2196 = vpack.c.bf16 %v2175, %v2174
    %v2197 = vpack.c.bf16 %v2114, %v2113
    %v2198 = vpack.c.bf16 %v2177, %v2176
    %v2199 = vpack.c.bf16 %v2116, %v2115
    %v2200 = vpack.c.bf16 %v2179, %v2178
    %v2201 = vpack.c.bf16 %v2118, %v2117
    %v2202 = vpack.c.bf16 %v2181, %v2180
    %v2203 = vpack.c.bf16 %v2119, %v2119
    %v2204 = vpack.c.bf16 %v2182, %v2182
    %v2205 = vld [vmem:[%s3 + $0x80] sm:$0xf]
    %v2206 = vld [vmem:[%s3 + $0x84] sm:$0xf]
    %v2207 = vld [vmem:[%s3 + $0x88] sm:$0xf]
    %v2208 = vld [vmem:[%s3 + $0x8c] sm:$0xf]
    %v2209 = vld [vmem:[%s3 + $0x90] sm:$0xf]
    %v2210 = vld [vmem:[%s3 + $0x94] sm:$0xf]
    %v2211 = vld [vmem:[%s3 + $0x98] sm:$0xf]
    %v2212 = vld [vmem:[%s3 + $0x9c] sm:$0xf]
    %v2213 = vld [vmem:[%s3 + $0xa0] sm:$0xf]
    %v2214 = vld [vmem:[%s3 + $0xa4] sm:$0xf]
    %v2215 = vld [vmem:[%s3 + $0xa8] sm:$0xf]
    %v2216 = vld [vmem:[%s3 + $0xac] sm:$0xf]
    %v2217 = vld [vmem:[%s3 + $0xb0] sm:$0xf]
    %v2218 = vld [vmem:[%s3 + $0xb4] sm:$0xf]
    %v2219 = vld [vmem:[%s3 + $0xb8] sm:$0xf]
    %v2220 = vld [vmem:[%s3 + $0xbc] sm:$0xf]
    %v2221 = vld [vmem:[%s3 + $0xc0] sm:$0xf]
    %v2222 = vld [vmem:[%s3 + $0xc4] sm:$0xf]
    %v2223 = vld [vmem:[%s3 + $0xc8] sm:$0xf]
    %v2224 = vld [vmem:[%s3 + $0xcc] sm:$0xf]
    %v2225 = vld [vmem:[%s3 + $0xd0] sm:$0xf]
    %v2226 = vld [vmem:[%s3 + $0xd4] sm:$0xf]
    %v2227 = vld [vmem:[%s3 + $0xd8] sm:$0xf]
    %v2228 = vld [vmem:[%s3 + $0xdc] sm:$0xf]
    %v2229 = vld [vmem:[%s3 + $0xe0] sm:$0xf]
    %v2230 = vld [vmem:[%s3 + $0xe4] sm:$0xf]
    %v2231 = vld [vmem:[%s3 + $0xe8] sm:$0xf]
    %v2232 = vld [vmem:[%s3 + $0xec] sm:$0xf]
    %v2233 = vld [vmem:[%s3 + $0xf0] sm:$0xf]
    %v2234 = vld [vmem:[%s3 + $0xf4] sm:$0xf]
    %v2235 = vld [vmem:[%s3 + $0xf8] sm:$0xf]
    %v2236 = vld [vmem:[%s3 + $0xfc] sm:$0xf]
    %v2269 = vunpack.c.l.b16 %v2205
    %v2270 = vunpack.c.l.b16 %v2206
    %v2271 = vunpack.c.l.b16 %v2207
    %v2272 = vunpack.c.l.b16 %v2208
    %v2273 = vunpack.c.l.b16 %v2209
    %v2274 = vunpack.c.l.b16 %v2210
    %v2275 = vunpack.c.l.b16 %v2211
    %v2276 = vunpack.c.l.b16 %v2212
    %v2277 = vunpack.c.l.b16 %v2213
    %v2278 = vunpack.c.l.b16 %v2214
    %v2279 = vunpack.c.l.b16 %v2215
    %v2280 = vunpack.c.l.b16 %v2216
    %v2281 = vunpack.c.l.b16 %v2217
    %v2282 = vunpack.c.l.b16 %v2218
    %v2283 = vunpack.c.l.b16 %v2219
    %v2284 = vunpack.c.l.b16 %v2220
    %v2285 = vunpack.c.l.b16 %v2221
    %v2286 = vunpack.c.l.b16 %v2222
    %v2287 = vunpack.c.l.b16 %v2223
    %v2288 = vunpack.c.l.b16 %v2224
    %v2289 = vunpack.c.l.b16 %v2225
    %v2290 = vunpack.c.l.b16 %v2226
    %v2291 = vunpack.c.l.b16 %v2227
    %v2292 = vunpack.c.l.b16 %v2228
    %v2293 = vunpack.c.l.b16 %v2229
    %v2294 = vunpack.c.l.b16 %v2230
    %v2295 = vunpack.c.l.b16 %v2231
    %v2296 = vunpack.c.l.b16 %v2232
    %v2297 = vunpack.c.l.b16 %v2233
    %v2298 = vunpack.c.l.b16 %v2234
    %v2299 = vunpack.c.l.b16 %v2235
    %v2300 = vunpack.c.l.b16 %v2236
    %v2301 = vpack.c.b16 %v2270, %v2269
    %v2302 = vpack.c.b16 %v2272, %v2271
    %v2303 = vpack.c.b16 %v2274, %v2273
    %v2304 = vpack.c.b16 %v2276, %v2275
    %v2305 = vpack.c.b16 %v2278, %v2277
    %v2306 = vpack.c.b16 %v2280, %v2279
    %v2307 = vpack.c.b16 %v2282, %v2281
    %v2308 = vpack.c.b16 %v2284, %v2283
    %v2309 = vpack.c.b16 %v2286, %v2285
    %v2310 = vpack.c.b16 %v2288, %v2287
    %v2311 = vpack.c.b16 %v2290, %v2289
    %v2312 = vpack.c.b16 %v2292, %v2291
    %v2313 = vpack.c.b16 %v2294, %v2293
    %v2314 = vpack.c.b16 %v2296, %v2295
    %v2315 = vpack.c.b16 %v2298, %v2297
    %v2316 = vpack.c.b16 %v2300, %v2299
    %2333 = vmatprep.subr.bf16.mxu0 0
    %2334 = vmatpush1.bf16.msra.mxu0 %v2308
    %2335 = vmatprep.subr.bf16.mxu0 0
    %2336 = vmatpush1.bf16.msra.mxu0 %v2307
    %2337 = vmatprep.subr.bf16.mxu0 0
    %2338 = vmatpush1.bf16.msra.mxu0 %v2306
    %2339 = vmatprep.subr.bf16.mxu0 0
    %2340 = vmatpush1.bf16.msra.mxu0 %v2305
    %2341 = vmatprep.subr.bf16.mxu0 0
    %2342 = vmatpush1.bf16.msra.mxu0 %v2304
    %2343 = vmatprep.subr.bf16.mxu0 0
    %2344 = vmatpush1.bf16.msra.mxu0 %v2303
    %2345 = vmatprep.subr.bf16.mxu0 0
    %2346 = vmatpush1.bf16.msra.mxu0 %v2302
    %2347 = vmatprep.subr.bf16.mxu0 0
    %2348 = vmatpush1.bf16.msra.mxu0 %v2301
    %2349 = vmatprep.subr.bf16.mxu0 0
    %2350 = vmatpush2.bf16.msra.mxu0 %v2316
    %2351 = vmatprep.subr.bf16.mxu0 0
    %2352 = vmatpush2.bf16.msra.mxu0 %v2315
    %2353 = vmatprep.subr.bf16.mxu0 0
    %2354 = vmatpush2.bf16.msra.mxu0 %v2314
    %2355 = vmatprep.subr.bf16.mxu0 0
    %2356 = vmatpush2.bf16.msra.mxu0 %v2313
    %2357 = vmatprep.subr.bf16.mxu0 0
    %2358 = vmatpush2.bf16.msra.mxu0 %v2312
    %2359 = vmatprep.subr.bf16.mxu0 0
    %2360 = vmatpush2.bf16.msra.mxu0 %v2311
    %2361 = vmatprep.subr.bf16.mxu0 0
    %2362 = vmatpush2.bf16.msra.mxu0 %v2310
    %2363 = vmatprep.subr.bf16.mxu0 0
    %2364 = vmatpush2.bf16.msra.mxu0 %v2309
    %2365 = vmatprep.mubr.bf16.mxu0 %v2184
    %2366 = vmatmul.mubr.bf16.gmra.mxu0 %v2183
    %v2367 = vpop.f32.mrf.mxu0
    %v2368 = vadd.f32 0.0, %v2367
    %v2369 = vpop.f32.mrf.mxu0
    %v2370 = vpop.f32.mrf.mxu0
    %v2371 = vadd.f32 0.0, %v2370
    %v2372 = vpop.f32.mrf.mxu0
    %2373 = vmatprep.mubr.bf16.mxu0 %v2186
    %2374 = vmatmul.mubr.bf16.gmra.mxu0 %v2185
    %v2375 = vpop.f32.mrf.mxu0
    %v2376 = vadd.f32 0.0, %v2375
    %v2377 = vpop.f32.mrf.mxu0
    %v2378 = vpop.f32.mrf.mxu0
    %v2379 = vadd.f32 0.0, %v2378
    %v2380 = vpop.f32.mrf.mxu0
    %2381 = vmatprep.mubr.bf16.mxu0 %v2188
    %2382 = vmatmul.mubr.bf16.gmra.mxu0 %v2187
    %v2383 = vpop.f32.mrf.mxu0
    %v2384 = vadd.f32 0.0, %v2383
    %v2385 = vpop.f32.mrf.mxu0
    %v2386 = vpop.f32.mrf.mxu0
    %v2387 = vadd.f32 0.0, %v2386
    %v2388 = vpop.f32.mrf.mxu0
    %2389 = vmatprep.mubr.bf16.mxu0 %v2190
    %2390 = vmatmul.mubr.bf16.gmra.mxu0 %v2189
    %v2391 = vpop.f32.mrf.mxu0
    %v2392 = vadd.f32 0.0, %v2391
    %v2393 = vpop.f32.mrf.mxu0
    %v2394 = vpop.f32.mrf.mxu0
    %v2395 = vadd.f32 0.0, %v2394
    %v2396 = vpop.f32.mrf.mxu0
    %2397 = vmatprep.mubr.bf16.mxu0 %v2192
    %2398 = vmatmul.mubr.bf16.gmra.mxu0 %v2191
    %v2399 = vpop.f32.mrf.mxu0
    %v2400 = vadd.f32 0.0, %v2399
    %v2401 = vpop.f32.mrf.mxu0
    %v2402 = vpop.f32.mrf.mxu0
    %v2403 = vadd.f32 0.0, %v2402
    %v2404 = vpop.f32.mrf.mxu0
    %2405 = vmatprep.mubr.bf16.mxu0 %v2194
    %2406 = vmatmul.mubr.bf16.gmra.mxu0 %v2193
    %v2407 = vpop.f32.mrf.mxu0
    %v2408 = vadd.f32 0.0, %v2407
    %v2409 = vpop.f32.mrf.mxu0
    %v2410 = vpop.f32.mrf.mxu0
    %v2411 = vadd.f32 0.0, %v2410
    %v2412 = vpop.f32.mrf.mxu0
    %2413 = vmatprep.mubr.bf16.mxu0 %v2196
    %2414 = vmatmul.mubr.bf16.gmra.mxu0 %v2195
    %v2415 = vpop.f32.mrf.mxu0
    %v2416 = vadd.f32 0.0, %v2415
    %v2417 = vpop.f32.mrf.mxu0
    %v2418 = vpop.f32.mrf.mxu0
    %v2419 = vadd.f32 0.0, %v2418
    %v2420 = vpop.f32.mrf.mxu0
    %2421 = vmatprep.mubr.bf16.mxu0 %v2198
    %2422 = vmatmul.mubr.bf16.gmra.mxu0 %v2197
    %v2423 = vpop.f32.mrf.mxu0
    %v2424 = vadd.f32 0.0, %v2423
    %v2425 = vpop.f32.mrf.mxu0
    %v2426 = vpop.f32.mrf.mxu0
    %v2427 = vadd.f32 0.0, %v2426
    %v2428 = vpop.f32.mrf.mxu0
    %2429 = vmatprep.mubr.bf16.mxu0 %v2200
    %2430 = vmatmul.mubr.bf16.gmra.mxu0 %v2199
    %v2431 = vpop.f32.mrf.mxu0
    %v2432 = vadd.f32 0.0, %v2431
    %v2433 = vpop.f32.mrf.mxu0
    %v2434 = vpop.f32.mrf.mxu0
    %v2435 = vadd.f32 0.0, %v2434
    %v2436 = vpop.f32.mrf.mxu0
    %2437 = vmatprep.mubr.bf16.mxu0 %v2202
    %2438 = vmatmul.mubr.bf16.gmra.mxu0 %v2201
    %v2439 = vpop.f32.mrf.mxu0
    %v2440 = vadd.f32 0.0, %v2439
    %v2441 = vpop.f32.mrf.mxu0
    %v2442 = vpop.f32.mrf.mxu0
    %v2443 = vadd.f32 0.0, %v2442
    %v2444 = vpop.f32.mrf.mxu0
    %2445 = vmatprep.mubr.bf16.mxu0 %v2204
    %2446 = vmatmul.mubr.bf16.gmra.mxu0 %v2203
    %v2447 = vpop.f32.mrf.mxu0
    %v2448 = vadd.f32 0.0, %v2447
    %v2449 = vpop.f32.mrf.mxu0
    %v2450 = vpop.f32.mrf.mxu0
    %v2451 = vpop.f32.mrf.mxu0
    %2452 = vdwg.mxu0
    %v2485 = vunpack.c.l.b16 %v1543
    %v2486 = vunpack.c.l.b16 %v1544
    %v2487 = vunpack.c.l.b16 %v1545
    %v2488 = vunpack.c.l.b16 %v1546
    %v2489 = vunpack.c.l.b16 %v1547
    %v2490 = vunpack.c.l.b16 %v1548
    %v2491 = vunpack.c.l.b16 %v1549
    %v2492 = vunpack.c.l.b16 %v1550
    %v2493 = vunpack.c.l.b16 %v1551
    %v2494 = vunpack.c.l.b16 %v1552
    %v2495 = vunpack.c.l.b16 %v1553
    %v2496 = vunpack.c.l.b16 %v1554
    %v2497 = vunpack.c.l.b16 %v1555
    %v2498 = vunpack.c.l.b16 %v1556
    %v2499 = vunpack.c.l.b16 %v1557
    %v2500 = vunpack.c.l.b16 %v1558
    %v2501 = vunpack.c.l.b16 %v1559
    %v2502 = vunpack.c.l.b16 %v1560
    %v2503 = vunpack.c.l.b16 %v1561
    %v2504 = vunpack.c.l.b16 %v1562
    %v2505 = vunpack.c.l.b16 %v1563
    %v2506 = vunpack.c.l.b16 %v1564
    %v2507 = vunpack.c.l.b16 %v1565
    %v2508 = vunpack.c.l.b16 %v1566
    %v2509 = vunpack.c.l.b16 %v1567
    %v2510 = vunpack.c.l.b16 %v1568
    %v2511 = vunpack.c.l.b16 %v1569
    %v2512 = vunpack.c.l.b16 %v1570
    %v2513 = vunpack.c.l.b16 %v1571
    %v2514 = vunpack.c.l.b16 %v1572
    %v2515 = vunpack.c.l.b16 %v1573
    %v2516 = vunpack.c.l.b16 %v1574
    %v2517 = vpack.c.b16 %v2486, %v2485
    %v2518 = vpack.c.b16 %v2488, %v2487
    %v2519 = vpack.c.b16 %v2490, %v2489
    %v2520 = vpack.c.b16 %v2492, %v2491
    %v2521 = vpack.c.b16 %v2494, %v2493
    %v2522 = vpack.c.b16 %v2496, %v2495
    %v2523 = vpack.c.b16 %v2498, %v2497
    %v2524 = vpack.c.b16 %v2500, %v2499
    %v2525 = vpack.c.b16 %v2502, %v2501
    %v2526 = vpack.c.b16 %v2504, %v2503
    %v2527 = vpack.c.b16 %v2506, %v2505
    %v2528 = vpack.c.b16 %v2508, %v2507
    %v2529 = vpack.c.b16 %v2510, %v2509
    %v2530 = vpack.c.b16 %v2512, %v2511
    %v2531 = vpack.c.b16 %v2514, %v2513
    %v2532 = vpack.c.b16 %v2516, %v2515
    %2549 = vmatprep.subr.bf16.mxu0 0
    %2550 = vmatpush1.bf16.msra.mxu0 %v2524
    %2551 = vmatprep.subr.bf16.mxu0 0
    %2552 = vmatpush1.bf16.msra.mxu0 %v2523
    %2553 = vmatprep.subr.bf16.mxu0 0
    %2554 = vmatpush1.bf16.msra.mxu0 %v2522
    %2555 = vmatprep.subr.bf16.mxu0 0
    %2556 = vmatpush1.bf16.msra.mxu0 %v2521
    %2557 = vmatprep.subr.bf16.mxu0 0
    %2558 = vmatpush1.bf16.msra.mxu0 %v2520
    %2559 = vmatprep.subr.bf16.mxu0 0
    %2560 = vmatpush1.bf16.msra.mxu0 %v2519
    %2561 = vmatprep.subr.bf16.mxu0 0
    %2562 = vmatpush1.bf16.msra.mxu0 %v2518
    %2563 = vmatprep.subr.bf16.mxu0 0
    %2564 = vmatpush1.bf16.msra.mxu0 %v2517
    %2565 = vmatprep.subr.bf16.mxu0 0
    %2566 = vmatpush2.bf16.msra.mxu0 %v2532
    %2567 = vmatprep.subr.bf16.mxu0 0
    %2568 = vmatpush2.bf16.msra.mxu0 %v2531
    %2569 = vmatprep.subr.bf16.mxu0 0
    %2570 = vmatpush2.bf16.msra.mxu0 %v2530
    %2571 = vmatprep.subr.bf16.mxu0 0
    %2572 = vmatpush2.bf16.msra.mxu0 %v2529
    %2573 = vmatprep.subr.bf16.mxu0 0
    %2574 = vmatpush2.bf16.msra.mxu0 %v2528
    %2575 = vmatprep.subr.bf16.mxu0 0
    %2576 = vmatpush2.bf16.msra.mxu0 %v2527
    %2577 = vmatprep.subr.bf16.mxu0 0
    %2578 = vmatpush2.bf16.msra.mxu0 %v2526
    %2579 = vmatprep.subr.bf16.mxu0 0
    %2580 = vmatpush2.bf16.msra.mxu0 %v2525
    %2581 = vmatprep.mubr.bf16.mxu0 %v1522
    %2582 = vmatmul.mubr.bf16.gmra.mxu0 %v1521
    %v2583 = vpop.f32.mrf.mxu0
    %v2584 = vadd.f32 %v2368, %v2583
    %v2585 = vpop.f32.mrf.mxu0
    %v2586 = vpop.f32.mrf.mxu0
    %v2587 = vadd.f32 %v2371, %v2586
    %v2588 = vpop.f32.mrf.mxu0
    %2589 = vmatprep.mubr.bf16.mxu0 %v1524
    %2590 = vmatmul.mubr.bf16.gmra.mxu0 %v1523
    %v2591 = vpop.f32.mrf.mxu0
    %v2592 = vadd.f32 %v2376, %v2591
    %v2593 = vpop.f32.mrf.mxu0
    %v2594 = vpop.f32.mrf.mxu0
    %v2595 = vadd.f32 %v2379, %v2594
    %v2596 = vpop.f32.mrf.mxu0
    %2597 = vmatprep.mubr.bf16.mxu0 %v1526
    %2598 = vmatmul.mubr.bf16.gmra.mxu0 %v1525
    %v2599 = vpop.f32.mrf.mxu0
    %v2600 = vadd.f32 %v2384, %v2599
    %v2601 = vpop.f32.mrf.mxu0
    %v2602 = vpop.f32.mrf.mxu0
    %v2603 = vadd.f32 %v2387, %v2602
    %v2604 = vpop.f32.mrf.mxu0
    %2605 = vmatprep.mubr.bf16.mxu0 %v1528
    %2606 = vmatmul.mubr.bf16.gmra.mxu0 %v1527
    %v2607 = vpop.f32.mrf.mxu0
    %v2608 = vadd.f32 %v2392, %v2607
    %v2609 = vpop.f32.mrf.mxu0
    %v2610 = vpop.f32.mrf.mxu0
    %v2611 = vadd.f32 %v2395, %v2610
    %v2612 = vpop.f32.mrf.mxu0
    %2613 = vmatprep.mubr.bf16.mxu0 %v1530
    %2614 = vmatmul.mubr.bf16.gmra.mxu0 %v1529
    %v2615 = vpop.f32.mrf.mxu0
    %v2616 = vadd.f32 %v2400, %v2615
    %v2617 = vpop.f32.mrf.mxu0
    %v2618 = vpop.f32.mrf.mxu0
    %v2619 = vadd.f32 %v2403, %v2618
    %v2620 = vpop.f32.mrf.mxu0
    %2621 = vmatprep.mubr.bf16.mxu0 %v1532
    %2622 = vmatmul.mubr.bf16.gmra.mxu0 %v1531
    %v2623 = vpop.f32.mrf.mxu0
    %v2624 = vadd.f32 %v2408, %v2623
    %v2625 = vpop.f32.mrf.mxu0
    %v2626 = vpop.f32.mrf.mxu0
    %v2627 = vadd.f32 %v2411, %v2626
    %v2628 = vpop.f32.mrf.mxu0
    %2629 = vmatprep.mubr.bf16.mxu0 %v1534
    %2630 = vmatmul.mubr.bf16.gmra.mxu0 %v1533
    %v2631 = vpop.f32.mrf.mxu0
    %v2632 = vadd.f32 %v2416, %v2631
    %v2633 = vpop.f32.mrf.mxu0
    %v2634 = vpop.f32.mrf.mxu0
    %v2635 = vadd.f32 %v2419, %v2634
    %v2636 = vpop.f32.mrf.mxu0
    %2637 = vmatprep.mubr.bf16.mxu0 %v1536
    %2638 = vmatmul.mubr.bf16.gmra.mxu0 %v1535
    %v2639 = vpop.f32.mrf.mxu0
    %v2640 = vadd.f32 %v2424, %v2639
    %v2641 = vpop.f32.mrf.mxu0
    %v2642 = vpop.f32.mrf.mxu0
    %v2643 = vadd.f32 %v2427, %v2642
    %v2644 = vpop.f32.mrf.mxu0
    %2645 = vmatprep.mubr.bf16.mxu0 %v1538
    %2646 = vmatmul.mubr.bf16.gmra.mxu0 %v1537
    %v2647 = vpop.f32.mrf.mxu0
    %v2648 = vadd.f32 %v2432, %v2647
    %v2649 = vpop.f32.mrf.mxu0
    %v2650 = vpop.f32.mrf.mxu0
    %v2651 = vadd.f32 %v2435, %v2650
    %v2652 = vpop.f32.mrf.mxu0
    %2653 = vmatprep.mubr.bf16.mxu0 %v1540
    %2654 = vmatmul.mubr.bf16.gmra.mxu0 %v1539
    %v2655 = vpop.f32.mrf.mxu0
    %v2656 = vadd.f32 %v2440, %v2655
    %v2657 = vpop.f32.mrf.mxu0
    %v2658 = vpop.f32.mrf.mxu0
    %v2659 = vadd.f32 %v2443, %v2658
    %v2660 = vpop.f32.mrf.mxu0
    %2661 = vmatprep.mubr.bf16.mxu0 %v1542
    %2662 = vmatmul.mubr.bf16.gmra.mxu0 %v1541
    %v2663 = vpop.f32.mrf.mxu0
    %v2664 = vadd.f32 %v2448, %v2663
    %v2665 = vpop.f32.mrf.mxu0
    %v2666 = vpop.f32.mrf.mxu0
    %v2667 = vpop.f32.mrf.mxu0
    %2668 = vdwg.mxu0
    %v2669 = vld [vmem:[%s4] sm:$0x1]
    %v2671 = vlaneseq
    %v2672 = vshrl.u32 %v2671, 7
    %v2673 = vsub.s32 0, %v2672
    %v2674 = vrot.slane %v2669, %v2673
    %v2676 = vadd.f32 %v2584, %v2674
    %v2677 = vadd.f32 %v2587, %v2674
    %v2678 = vadd.f32 %v2592, %v2674
    %v2679 = vadd.f32 %v2595, %v2674
    %v2680 = vadd.f32 %v2600, %v2674
    %v2681 = vadd.f32 %v2603, %v2674
    %v2682 = vadd.f32 %v2608, %v2674
    %v2683 = vadd.f32 %v2611, %v2674
    %v2684 = vadd.f32 %v2616, %v2674
    %v2685 = vadd.f32 %v2619, %v2674
    %v2686 = vadd.f32 %v2624, %v2674
    %v2687 = vadd.f32 %v2627, %v2674
    %v2688 = vadd.f32 %v2632, %v2674
    %v2689 = vadd.f32 %v2635, %v2674
    %v2690 = vadd.f32 %v2640, %v2674
    %v2691 = vadd.f32 %v2643, %v2674
    %v2692 = vadd.f32 %v2648, %v2674
    %v2693 = vadd.f32 %v2651, %v2674
    %v2694 = vadd.f32 %v2656, %v2674
    %v2695 = vadd.f32 %v2659, %v2674
    %v2696 = vadd.f32 %v2664, %v2674
    %v2697 = vmax.f32 %v2676, 0.0
    %v2698 = vmax.f32 %v2677, 0.0
    %v2699 = vmax.f32 %v2678, 0.0
    %v2700 = vmax.f32 %v2679, 0.0
    %v2701 = vmax.f32 %v2680, 0.0
    %v2702 = vmax.f32 %v2681, 0.0
    %v2703 = vmax.f32 %v2682, 0.0
    %v2704 = vmax.f32 %v2683, 0.0
    %v2705 = vmax.f32 %v2684, 0.0
    %v2706 = vmax.f32 %v2685, 0.0
    %v2707 = vmax.f32 %v2686, 0.0
    %v2708 = vmax.f32 %v2687, 0.0
    %v2709 = vmax.f32 %v2688, 0.0
    %v2710 = vmax.f32 %v2689, 0.0
    %v2711 = vmax.f32 %v2690, 0.0
    %v2712 = vmax.f32 %v2691, 0.0
    %v2713 = vmax.f32 %v2692, 0.0
    %v2714 = vmax.f32 %v2693, 0.0
    %v2715 = vmax.f32 %v2694, 0.0
    %v2716 = vmax.f32 %v2695, 0.0
    %v2717 = vmax.f32 %v2696, 0.0
    %2718 = vst.msk [vmem:[#allocation3] sm:$0xff] %vm448, %v2697
    %2719 = vst.msk [vmem:[#allocation3 + $0x8] sm:$0xff] %vm448, %v2698
    %2720 = vst.msk [vmem:[#allocation3 + $0x10] sm:$0xff] %vm448, %v2699
    %2721 = vst.msk [vmem:[#allocation3 + $0x18] sm:$0xff] %vm448, %v2700
    %2722 = vst.msk [vmem:[#allocation3 + $0x20] sm:$0xff] %vm448, %v2701
    %2723 = vst.msk [vmem:[#allocation3 + $0x28] sm:$0xff] %vm448, %v2702
    %2724 = vst.msk [vmem:[#allocation3 + $0x30] sm:$0xff] %vm448, %v2703
    %2725 = vst.msk [vmem:[#allocation3 + $0x38] sm:$0xff] %vm448, %v2704
    %2726 = vst.msk [vmem:[#allocation3 + $0x40] sm:$0xff] %vm448, %v2705
    %2727 = vst.msk [vmem:[#allocation3 + $0x48] sm:$0xff] %vm448, %v2706
    %2728 = vst.msk [vmem:[#allocation3 + $0x50] sm:$0xff] %vm448, %v2707
    %2729 = vst.msk [vmem:[#allocation3 + $0x58] sm:$0xff] %vm448, %v2708
    %2730 = vst.msk [vmem:[#allocation3 + $0x60] sm:$0xff] %vm448, %v2709
    %2731 = vst.msk [vmem:[#allocation3 + $0x68] sm:$0xff] %vm448, %v2710
    %2732 = vst.msk [vmem:[#allocation3 + $0x70] sm:$0xff] %vm448, %v2711
    %2733 = vst.msk [vmem:[#allocation3 + $0x78] sm:$0xff] %vm448, %v2712
    %2734 = vst.msk [vmem:[#allocation3 + $0x80] sm:$0xff] %vm448, %v2713
    %2735 = vst.msk [vmem:[#allocation3 + $0x88] sm:$0xff] %vm448, %v2714
    %2736 = vst.msk [vmem:[#allocation3 + $0x90] sm:$0xff] %vm448, %v2715
    %2737 = vst.msk [vmem:[#allocation3 + $0x98] sm:$0xff] %vm448, %v2716
    %vm2738 = vcmask 517120
    %2739 = vst.msk [vmem:[#allocation3 + $0xa0] sm:$0x3] %vm2738, %v2717
    %v2740 = vld [vmem:[#allocation3] sm:$0x1]
    %v2741 = vld [vmem:[#allocation3 + $0x2] sm:$0x1]
    %v2742 = vld [vmem:[#allocation3 + $0x4] sm:$0x1]
    %v2744 = vrot.slane %v2741, 7
    %v2747 = vrot.slane %v2742, 6
    %vm2749 = vcmask 1040384
    %v2750 = vsel %vm2749, %v2740, %v2744
    %vm2751 = vcmask 1041408
    %v2752 = vsel %vm2751, %v2750, %v2747
    %vm2753 = vcmask 518144
    %2754 = vst.msk [vmem:[#allocation4] sm:$0x7] %vm2753, %v2752
    %v2755 = vld [vmem:[#allocation3 + $0x12] sm:$0x1]
    %v2756 = vld [vmem:[#allocation3 + $0x14] sm:$0x1]
    %v2757 = vld [vmem:[#allocation3 + $0x16] sm:$0x1]
    %v2759 = vrot.slane %v2756, 7
    %v2762 = vrot.slane %v2757, 6
    %v2764 = vsel %vm2749, %v2755, %v2759
    %v2765 = vsel %vm2751, %v2764, %v2762
    %2766 = vst.msk [vmem:[#allocation4 + $0x3] sm:$0x7] %vm2753, %v2765
    %v2767 = vld [vmem:[#allocation3 + $0x24] sm:$0x1]
    %v2768 = vld [vmem:[#allocation3 + $0x26] sm:$0x1]
    %v2769 = vld [vmem:[#allocation3 + $0x28] sm:$0x1]
    %v2771 = vrot.slane %v2768, 7
    %v2774 = vrot.slane %v2769, 6
    %v2776 = vsel %vm2749, %v2767, %v2771
    %v2777 = vsel %vm2751, %v2776, %v2774
    %2778 = vst.msk [vmem:[#allocation4 + $0x6] sm:$0x7] %vm2753, %v2777
    %v2779 = vld [vmem:[#allocation3 + $0x51] sm:$0x1]
    %v2780 = vld [vmem:[#allocation3 + $0x53] sm:$0x1]
    %v2781 = vld [vmem:[#allocation3 + $0x55] sm:$0x1]
    %v2783 = vrot.slane %v2780, 7
    %v2786 = vrot.slane %v2781, 6
    %v2788 = vsel %vm2749, %v2779, %v2783
    %v2789 = vsel %vm2751, %v2788, %v2786
    %2790 = vst.msk [vmem:[#allocation4 + $0x9] sm:$0x7] %vm2753, %v2789
    %v2791 = vld [vmem:[#allocation3 + $0x63] sm:$0x1]
    %v2792 = vld [vmem:[#allocation3 + $0x65] sm:$0x1]
    %v2793 = vld [vmem:[#allocation3 + $0x67] sm:$0x1]
    %v2795 = vrot.slane %v2792, 7
    %v2798 = vrot.slane %v2793, 6
    %v2800 = vsel %vm2749, %v2791, %v2795
    %v2801 = vsel %vm2751, %v2800, %v2798
    %2802 = vst.msk [vmem:[#allocation4 + $0xc] sm:$0x7] %vm2753, %v2801
    %v2803 = vld [vmem:[#allocation3 + $0x75] sm:$0x1]
    %v2804 = vld [vmem:[#allocation3 + $0x77] sm:$0x1]
    %v2805 = vld [vmem:[#allocation3 + $0x79] sm:$0x1]
    %v2807 = vrot.slane %v2804, 7
    %v2810 = vrot.slane %v2805, 6
    %v2812 = vsel %vm2749, %v2803, %v2807
    %v2813 = vsel %vm2751, %v2812, %v2810
    %2814 = vst.msk [vmem:[#allocation4 + $0xf] sm:$0x7] %vm2753, %v2813
    %2815 = vst.msk [vmem:[#allocation4 + $0x12] sm:$0xff] %vm448, 0.0
    %vm2816 = vcmask 521216
    %2817 = vst.msk [vmem:[#allocation4 + $0x1a] sm:$0x3f] %vm2816, 0.0
    %v2818 = vld [vmem:[#allocation4] sm:$0xff]
    %v2819 = vld [vmem:[#allocation4 + $0x8] sm:$0xff]
    %v2820 = vld [vmem:[#allocation4 + $0x10] sm:$0x3]
    %v2821 = vld [vmem:[#allocation4 + $0x1] sm:$0xff]
    %v2822 = vld [vmem:[#allocation4 + $0x9] sm:$0xff]
    %v2823 = vld [vmem:[#allocation4 + $0x11] sm:$0x3]
    %v2824 = vld [vmem:[#allocation4 + $0x2] sm:$0xff]
    %v2825 = vld [vmem:[#allocation4 + $0xa] sm:$0xff]
    %v2826 = vld [vmem:[#allocation4 + $0x12] sm:$0x3]
    %v2827 = vld [vmem:[#allocation4 + $0x3] sm:$0xff]
    %v2828 = vld [vmem:[#allocation4 + $0xb] sm:$0xff]
    %v2829 = vld [vmem:[#allocation4 + $0x13] sm:$0x3]
    %2833 = vrot.lane.b32.xlu0 %v2821, 64
    %v2834 = vpop.permute.xlu0 %2833
    %2835 = vrot.lane.b32.xlu0 %v2822, 64
    %v2836 = vpop.permute.xlu0 %2835
    %2837 = vrot.lane.b32.xlu0 %v2823, 64
    %v2838 = vpop.permute.xlu0 %2837
    %2845 = vrot.lane.b32.xlu0 %v2827, 64
    %v2846 = vpop.permute.xlu0 %2845
    %2847 = vrot.lane.b32.xlu0 %v2828, 64
    %v2848 = vpop.permute.xlu0 %2847
    %2849 = vrot.lane.b32.xlu0 %v2829, 64
    %v2850 = vpop.permute.xlu0 %2849
    %v2854 = vsel %vm448, %v2818, %v2834
    %v2855 = vsel %vm448, %v2819, %v2836
    %v2856 = vsel %vm448, %v2820, %v2838
    %v2857 = vsel %vm448, %v2824, %v2846
    %v2858 = vsel %vm448, %v2825, %v2848
    %v2859 = vsel %vm448, %v2826, %v2850
    %v2860 = vpack.c.bf16 %v2855, %v2854
    %v2861 = vpack.c.bf16 %v2858, %v2857
    %v2862 = vpack.c.bf16 %v2856, %v2856
    %v2863 = vpack.c.bf16 %v2859, %v2859
    %v2864 = vld [vmem:[%s5] sm:$0xf]
    %v2865 = vld [vmem:[%s5 + $0x4] sm:$0xf]
    %v2866 = vld [vmem:[%s5 + $0x8] sm:$0xf]
    %v2867 = vld [vmem:[%s5 + $0xc] sm:$0xf]
    %v2868 = vld [vmem:[%s5 + $0x10] sm:$0xf]
    %v2869 = vld [vmem:[%s5 + $0x14] sm:$0xf]
    %v2870 = vld [vmem:[%s5 + $0x18] sm:$0xf]
    %v2871 = vld [vmem:[%s5 + $0x1c] sm:$0xf]
    %v2872 = vld [vmem:[%s5 + $0x20] sm:$0xf]
    %v2873 = vld [vmem:[%s5 + $0x24] sm:$0xf]
    %v2874 = vld [vmem:[%s5 + $0x28] sm:$0xf]
    %v2875 = vld [vmem:[%s5 + $0x2c] sm:$0xf]
    %v2876 = vld [vmem:[%s5 + $0x30] sm:$0xf]
    %v2877 = vld [vmem:[%s5 + $0x34] sm:$0xf]
    %v2878 = vld [vmem:[%s5 + $0x38] sm:$0xf]
    %v2879 = vld [vmem:[%s5 + $0x3c] sm:$0xf]
    %v2880 = vld [vmem:[%s5 + $0x40] sm:$0xf]
    %v2881 = vld [vmem:[%s5 + $0x44] sm:$0xf]
    %v2882 = vld [vmem:[%s5 + $0x48] sm:$0xf]
    %v2883 = vld [vmem:[%s5 + $0x4c] sm:$0xf]
    %v2884 = vld [vmem:[%s5 + $0x50] sm:$0xf]
    %v2885 = vld [vmem:[%s5 + $0x54] sm:$0xf]
    %v2886 = vld [vmem:[%s5 + $0x58] sm:$0xf]
    %v2887 = vld [vmem:[%s5 + $0x5c] sm:$0xf]
    %v2888 = vld [vmem:[%s5 + $0x60] sm:$0xf]
    %v2889 = vld [vmem:[%s5 + $0x64] sm:$0xf]
    %v2890 = vld [vmem:[%s5 + $0x68] sm:$0xf]
    %v2891 = vld [vmem:[%s5 + $0x6c] sm:$0xf]
    %v2892 = vld [vmem:[%s5 + $0x70] sm:$0xf]
    %v2893 = vld [vmem:[%s5 + $0x74] sm:$0xf]
    %v2894 = vld [vmem:[%s5 + $0x78] sm:$0xf]
    %v2895 = vld [vmem:[%s5 + $0x7c] sm:$0xf]
    %v2896 = vld [vmem:[#allocation4 + $0x4] sm:$0xff]
    %v2897 = vld [vmem:[#allocation4 + $0xc] sm:$0xff]
    %v2898 = vld [vmem:[#allocation4 + $0x14] sm:$0x3]
    %v2899 = vld [vmem:[#allocation4 + $0x5] sm:$0xff]
    %v2900 = vld [vmem:[#allocation4 + $0xd] sm:$0xff]
    %v2901 = vld [vmem:[#allocation4 + $0x15] sm:$0x3]
    %v2902 = vld [vmem:[#allocation4 + $0x6] sm:$0xff]
    %v2903 = vld [vmem:[#allocation4 + $0xe] sm:$0xff]
    %v2904 = vld [vmem:[#allocation4 + $0x16] sm:$0x3]
    %v2905 = vld [vmem:[#allocation4 + $0x7] sm:$0xff]
    %v2906 = vld [vmem:[#allocation4 + $0xf] sm:$0xff]
    %v2907 = vld [vmem:[#allocation4 + $0x17] sm:$0x3]
    %2911 = vrot.lane.b32.xlu0 %v2899, 64
    %v2912 = vpop.permute.xlu0 %2911
    %2913 = vrot.lane.b32.xlu0 %v2900, 64
    %v2914 = vpop.permute.xlu0 %2913
    %2915 = vrot.lane.b32.xlu0 %v2901, 64
    %v2916 = vpop.permute.xlu0 %2915
    %2923 = vrot.lane.b32.xlu0 %v2905, 64
    %v2924 = vpop.permute.xlu0 %2923
    %2925 = vrot.lane.b32.xlu0 %v2906, 64
    %v2926 = vpop.permute.xlu0 %2925
    %2927 = vrot.lane.b32.xlu0 %v2907, 64
    %v2928 = vpop.permute.xlu0 %2927
    %v2932 = vsel %vm448, %v2896, %v2912
    %v2933 = vsel %vm448, %v2897, %v2914
    %v2934 = vsel %vm448, %v2898, %v2916
    %v2935 = vsel %vm448, %v2902, %v2924
    %v2936 = vsel %vm448, %v2903, %v2926
    %v2937 = vsel %vm448, %v2904, %v2928
    %v2938 = vpack.c.bf16 %v2933, %v2932
    %v2939 = vpack.c.bf16 %v2936, %v2935
    %v2940 = vpack.c.bf16 %v2934, %v2934
    %v2941 = vpack.c.bf16 %v2937, %v2937
    %v2942 = vld [vmem:[%s5 + $0x80] sm:$0xf]
    %v2943 = vld [vmem:[%s5 + $0x84] sm:$0xf]
    %v2944 = vld [vmem:[%s5 + $0x88] sm:$0xf]
    %v2945 = vld [vmem:[%s5 + $0x8c] sm:$0xf]
    %v2946 = vld [vmem:[%s5 + $0x90] sm:$0xf]
    %v2947 = vld [vmem:[%s5 + $0x94] sm:$0xf]
    %v2948 = vld [vmem:[%s5 + $0x98] sm:$0xf]
    %v2949 = vld [vmem:[%s5 + $0x9c] sm:$0xf]
    %v2950 = vld [vmem:[%s5 + $0xa0] sm:$0xf]
    %v2951 = vld [vmem:[%s5 + $0xa4] sm:$0xf]
    %v2952 = vld [vmem:[%s5 + $0xa8] sm:$0xf]
    %v2953 = vld [vmem:[%s5 + $0xac] sm:$0xf]
    %v2954 = vld [vmem:[%s5 + $0xb0] sm:$0xf]
    %v2955 = vld [vmem:[%s5 + $0xb4] sm:$0xf]
    %v2956 = vld [vmem:[%s5 + $0xb8] sm:$0xf]
    %v2957 = vld [vmem:[%s5 + $0xbc] sm:$0xf]
    %v2958 = vld [vmem:[%s5 + $0xc0] sm:$0xf]
    %v2959 = vld [vmem:[%s5 + $0xc4] sm:$0xf]
    %v2960 = vld [vmem:[%s5 + $0xc8] sm:$0xf]
    %v2961 = vld [vmem:[%s5 + $0xcc] sm:$0xf]
    %v2962 = vld [vmem:[%s5 + $0xd0] sm:$0xf]
    %v2963 = vld [vmem:[%s5 + $0xd4] sm:$0xf]
    %v2964 = vld [vmem:[%s5 + $0xd8] sm:$0xf]
    %v2965 = vld [vmem:[%s5 + $0xdc] sm:$0xf]
    %v2966 = vld [vmem:[%s5 + $0xe0] sm:$0xf]
    %v2967 = vld [vmem:[%s5 + $0xe4] sm:$0xf]
    %v2968 = vld [vmem:[%s5 + $0xe8] sm:$0xf]
    %v2969 = vld [vmem:[%s5 + $0xec] sm:$0xf]
    %v2970 = vld [vmem:[%s5 + $0xf0] sm:$0xf]
    %v2971 = vld [vmem:[%s5 + $0xf4] sm:$0xf]
    %v2972 = vld [vmem:[%s5 + $0xf8] sm:$0xf]
    %v2973 = vld [vmem:[%s5 + $0xfc] sm:$0xf]
    %v3006 = vunpack.c.l.b16 %v2942
    %v3007 = vunpack.c.l.b16 %v2943
    %v3008 = vunpack.c.l.b16 %v2944
    %v3009 = vunpack.c.l.b16 %v2945
    %v3010 = vunpack.c.l.b16 %v2946
    %v3011 = vunpack.c.l.b16 %v2947
    %v3012 = vunpack.c.l.b16 %v2948
    %v3013 = vunpack.c.l.b16 %v2949
    %v3014 = vunpack.c.l.b16 %v2950
    %v3015 = vunpack.c.l.b16 %v2951
    %v3016 = vunpack.c.l.b16 %v2952
    %v3017 = vunpack.c.l.b16 %v2953
    %v3018 = vunpack.c.l.b16 %v2954
    %v3019 = vunpack.c.l.b16 %v2955
    %v3020 = vunpack.c.l.b16 %v2956
    %v3021 = vunpack.c.l.b16 %v2957
    %v3022 = vunpack.c.l.b16 %v2958
    %v3023 = vunpack.c.l.b16 %v2959
    %v3024 = vunpack.c.l.b16 %v2960
    %v3025 = vunpack.c.l.b16 %v2961
    %v3026 = vunpack.c.l.b16 %v2962
    %v3027 = vunpack.c.l.b16 %v2963
    %v3028 = vunpack.c.l.b16 %v2964
    %v3029 = vunpack.c.l.b16 %v2965
    %v3030 = vunpack.c.l.b16 %v2966
    %v3031 = vunpack.c.l.b16 %v2967
    %v3032 = vunpack.c.l.b16 %v2968
    %v3033 = vunpack.c.l.b16 %v2969
    %v3034 = vunpack.c.l.b16 %v2970
    %v3035 = vunpack.c.l.b16 %v2971
    %v3036 = vunpack.c.l.b16 %v2972
    %v3037 = vunpack.c.l.b16 %v2973
    %v3038 = vpack.c.b16 %v3007, %v3006
    %v3039 = vpack.c.b16 %v3009, %v3008
    %v3040 = vpack.c.b16 %v3011, %v3010
    %v3041 = vpack.c.b16 %v3013, %v3012
    %v3042 = vpack.c.b16 %v3015, %v3014
    %v3043 = vpack.c.b16 %v3017, %v3016
    %v3044 = vpack.c.b16 %v3019, %v3018
    %v3045 = vpack.c.b16 %v3021, %v3020
    %v3046 = vpack.c.b16 %v3023, %v3022
    %v3047 = vpack.c.b16 %v3025, %v3024
    %v3048 = vpack.c.b16 %v3027, %v3026
    %v3049 = vpack.c.b16 %v3029, %v3028
    %v3050 = vpack.c.b16 %v3031, %v3030
    %v3051 = vpack.c.b16 %v3033, %v3032
    %v3052 = vpack.c.b16 %v3035, %v3034
    %v3053 = vpack.c.b16 %v3037, %v3036
    %3070 = vmatprep.subr.bf16.mxu0 0
    %3071 = vmatpush1.bf16.msra.mxu0 %v3045
    %3072 = vmatprep.subr.bf16.mxu0 0
    %3073 = vmatpush1.bf16.msra.mxu0 %v3044
    %3074 = vmatprep.subr.bf16.mxu0 0
    %3075 = vmatpush1.bf16.msra.mxu0 %v3043
    %3076 = vmatprep.subr.bf16.mxu0 0
    %3077 = vmatpush1.bf16.msra.mxu0 %v3042
    %3078 = vmatprep.subr.bf16.mxu0 0
    %3079 = vmatpush1.bf16.msra.mxu0 %v3041
    %3080 = vmatprep.subr.bf16.mxu0 0
    %3081 = vmatpush1.bf16.msra.mxu0 %v3040
    %3082 = vmatprep.subr.bf16.mxu0 0
    %3083 = vmatpush1.bf16.msra.mxu0 %v3039
    %3084 = vmatprep.subr.bf16.mxu0 0
    %3085 = vmatpush1.bf16.msra.mxu0 %v3038
    %3086 = vmatprep.subr.bf16.mxu0 0
    %3087 = vmatpush2.bf16.msra.mxu0 %v3053
    %3088 = vmatprep.subr.bf16.mxu0 0
    %3089 = vmatpush2.bf16.msra.mxu0 %v3052
    %3090 = vmatprep.subr.bf16.mxu0 0
    %3091 = vmatpush2.bf16.msra.mxu0 %v3051
    %3092 = vmatprep.subr.bf16.mxu0 0
    %3093 = vmatpush2.bf16.msra.mxu0 %v3050
    %3094 = vmatprep.subr.bf16.mxu0 0
    %3095 = vmatpush2.bf16.msra.mxu0 %v3049
    %3096 = vmatprep.subr.bf16.mxu0 0
    %3097 = vmatpush2.bf16.msra.mxu0 %v3048
    %3098 = vmatprep.subr.bf16.mxu0 0
    %3099 = vmatpush2.bf16.msra.mxu0 %v3047
    %3100 = vmatprep.subr.bf16.mxu0 0
    %3101 = vmatpush2.bf16.msra.mxu0 %v3046
    %3102 = vmatprep.mubr.bf16.mxu0 %v2939
    %3103 = vmatmul.mubr.bf16.gmra.mxu0 %v2938
    %v3104 = vpop.f32.mrf.mxu0
    %v3105 = vadd.f32 0.0, %v3104
    %v3106 = vpop.f32.mrf.mxu0
    %v3107 = vpop.f32.mrf.mxu0
    %v3108 = vadd.f32 0.0, %v3107
    %v3109 = vpop.f32.mrf.mxu0
    %3110 = vmatprep.mubr.bf16.mxu0 %v2941
    %3111 = vmatmul.mubr.bf16.gmra.mxu0 %v2940
    %v3112 = vpop.f32.mrf.mxu0
    %v3113 = vadd.f32 0.0, %v3112
    %v3114 = vpop.f32.mrf.mxu0
    %v3115 = vpop.f32.mrf.mxu0
    %v3116 = vpop.f32.mrf.mxu0
    %3117 = vdwg.mxu0
    %v3150 = vunpack.c.l.b16 %v2864
    %v3151 = vunpack.c.l.b16 %v2865
    %v3152 = vunpack.c.l.b16 %v2866
    %v3153 = vunpack.c.l.b16 %v2867
    %v3154 = vunpack.c.l.b16 %v2868
    %v3155 = vunpack.c.l.b16 %v2869
    %v3156 = vunpack.c.l.b16 %v2870
    %v3157 = vunpack.c.l.b16 %v2871
    %v3158 = vunpack.c.l.b16 %v2872
    %v3159 = vunpack.c.l.b16 %v2873
    %v3160 = vunpack.c.l.b16 %v2874
    %v3161 = vunpack.c.l.b16 %v2875
    %v3162 = vunpack.c.l.b16 %v2876
    %v3163 = vunpack.c.l.b16 %v2877
    %v3164 = vunpack.c.l.b16 %v2878
    %v3165 = vunpack.c.l.b16 %v2879
    %v3166 = vunpack.c.l.b16 %v2880
    %v3167 = vunpack.c.l.b16 %v2881
    %v3168 = vunpack.c.l.b16 %v2882
    %v3169 = vunpack.c.l.b16 %v2883
    %v3170 = vunpack.c.l.b16 %v2884
    %v3171 = vunpack.c.l.b16 %v2885
    %v3172 = vunpack.c.l.b16 %v2886
    %v3173 = vunpack.c.l.b16 %v2887
    %v3174 = vunpack.c.l.b16 %v2888
    %v3175 = vunpack.c.l.b16 %v2889
    %v3176 = vunpack.c.l.b16 %v2890
    %v3177 = vunpack.c.l.b16 %v2891
    %v3178 = vunpack.c.l.b16 %v2892
    %v3179 = vunpack.c.l.b16 %v2893
    %v3180 = vunpack.c.l.b16 %v2894
    %v3181 = vunpack.c.l.b16 %v2895
    %v3182 = vpack.c.b16 %v3151, %v3150
    %v3183 = vpack.c.b16 %v3153, %v3152
    %v3184 = vpack.c.b16 %v3155, %v3154
    %v3185 = vpack.c.b16 %v3157, %v3156
    %v3186 = vpack.c.b16 %v3159, %v3158
    %v3187 = vpack.c.b16 %v3161, %v3160
    %v3188 = vpack.c.b16 %v3163, %v3162
    %v3189 = vpack.c.b16 %v3165, %v3164
    %v3190 = vpack.c.b16 %v3167, %v3166
    %v3191 = vpack.c.b16 %v3169, %v3168
    %v3192 = vpack.c.b16 %v3171, %v3170
    %v3193 = vpack.c.b16 %v3173, %v3172
    %v3194 = vpack.c.b16 %v3175, %v3174
    %v3195 = vpack.c.b16 %v3177, %v3176
    %v3196 = vpack.c.b16 %v3179, %v3178
    %v3197 = vpack.c.b16 %v3181, %v3180
    %3214 = vmatprep.subr.bf16.mxu0 0
    %3215 = vmatpush1.bf16.msra.mxu0 %v3189
    %3216 = vmatprep.subr.bf16.mxu0 0
    %3217 = vmatpush1.bf16.msra.mxu0 %v3188
    %3218 = vmatprep.subr.bf16.mxu0 0
    %3219 = vmatpush1.bf16.msra.mxu0 %v3187
    %3220 = vmatprep.subr.bf16.mxu0 0
    %3221 = vmatpush1.bf16.msra.mxu0 %v3186
    %3222 = vmatprep.subr.bf16.mxu0 0
    %3223 = vmatpush1.bf16.msra.mxu0 %v3185
    %3224 = vmatprep.subr.bf16.mxu0 0
    %3225 = vmatpush1.bf16.msra.mxu0 %v3184
    %3226 = vmatprep.subr.bf16.mxu0 0
    %3227 = vmatpush1.bf16.msra.mxu0 %v3183
    %3228 = vmatprep.subr.bf16.mxu0 0
    %3229 = vmatpush1.bf16.msra.mxu0 %v3182
    %3230 = vmatprep.subr.bf16.mxu0 0
    %3231 = vmatpush2.bf16.msra.mxu0 %v3197
    %3232 = vmatprep.subr.bf16.mxu0 0
    %3233 = vmatpush2.bf16.msra.mxu0 %v3196
    %3234 = vmatprep.subr.bf16.mxu0 0
    %3235 = vmatpush2.bf16.msra.mxu0 %v3195
    %3236 = vmatprep.subr.bf16.mxu0 0
    %3237 = vmatpush2.bf16.msra.mxu0 %v3194
    %3238 = vmatprep.subr.bf16.mxu0 0
    %3239 = vmatpush2.bf16.msra.mxu0 %v3193
    %3240 = vmatprep.subr.bf16.mxu0 0
    %3241 = vmatpush2.bf16.msra.mxu0 %v3192
    %3242 = vmatprep.subr.bf16.mxu0 0
    %3243 = vmatpush2.bf16.msra.mxu0 %v3191
    %3244 = vmatprep.subr.bf16.mxu0 0
    %3245 = vmatpush2.bf16.msra.mxu0 %v3190
    %3246 = vmatprep.mubr.bf16.mxu0 %v2861
    %3247 = vmatmul.mubr.bf16.gmra.mxu0 %v2860
    %v3248 = vpop.f32.mrf.mxu0
    %v3249 = vadd.f32 %v3105, %v3248
    %v3250 = vpop.f32.mrf.mxu0
    %v3251 = vpop.f32.mrf.mxu0
    %v3252 = vadd.f32 %v3108, %v3251
    %v3253 = vpop.f32.mrf.mxu0
    %3254 = vmatprep.mubr.bf16.mxu0 %v2863
    %3255 = vmatmul.mubr.bf16.gmra.mxu0 %v2862
    %v3256 = vpop.f32.mrf.mxu0
    %v3257 = vadd.f32 %v3113, %v3256
    %v3258 = vpop.f32.mrf.mxu0
    %v3259 = vpop.f32.mrf.mxu0
    %v3260 = vpop.f32.mrf.mxu0
    %3261 = vdwg.mxu0
    %v3262 = vld [vmem:[#allocation4 + $0x8] sm:$0xff]
    %v3263 = vld [vmem:[#allocation4 + $0x10] sm:$0xff]
    %v3264 = vld [vmem:[#allocation4 + $0x18] sm:$0x3]
    %v3265 = vpack.c.bf16 %v3263, %v3262
    %v3266 = vpack.c.bf16 %v3264, %v3264
    %v3267 = vld [vmem:[%s5 + $0x100] sm:$0xf]
    %v3268 = vld [vmem:[%s5 + $0x104] sm:$0xf]
    %v3269 = vld [vmem:[%s5 + $0x108] sm:$0xf]
    %v3270 = vld [vmem:[%s5 + $0x10c] sm:$0xf]
    %v3271 = vld [vmem:[%s5 + $0x110] sm:$0xf]
    %v3272 = vld [vmem:[%s5 + $0x114] sm:$0xf]
    %v3273 = vld [vmem:[%s5 + $0x118] sm:$0xf]
    %v3274 = vld [vmem:[%s5 + $0x11c] sm:$0xf]
    %v3283 = vunpack.c.l.b16 %v3267
    %v3284 = vunpack.c.l.b16 %v3268
    %v3285 = vunpack.c.l.b16 %v3269
    %v3286 = vunpack.c.l.b16 %v3270
    %v3287 = vunpack.c.l.b16 %v3271
    %v3288 = vunpack.c.l.b16 %v3272
    %v3289 = vunpack.c.l.b16 %v3273
    %v3290 = vunpack.c.l.b16 %v3274
    %v3291 = vpack.c.b16 %v3284, %v3283
    %v3292 = vpack.c.b16 %v3286, %v3285
    %v3293 = vpack.c.b16 %v3288, %v3287
    %v3294 = vpack.c.b16 %v3290, %v3289
    %v3300 = vsel %vm448, %v3265, 0
    %v3303 = vsel %vm448, %v3266, 0
    %3305 = vmatprep.subr.bf16.mxu0 0
    %3306 = vmatpush1.bf16.msra.mxu0 0
    %3307 = vmatprep.subr.bf16.mxu0 0
    %3308 = vmatpush1.bf16.msra.mxu0 0
    %3309 = vmatprep.subr.bf16.mxu0 0
    %3310 = vmatpush1.bf16.msra.mxu0 0
    %3311 = vmatprep.subr.bf16.mxu0 0
    %3312 = vmatpush1.bf16.msra.mxu0 0
    %3313 = vmatprep.subr.bf16.mxu0 0
    %3314 = vmatpush1.bf16.msra.mxu0 %v3294
    %3315 = vmatprep.subr.bf16.mxu0 0
    %3316 = vmatpush1.bf16.msra.mxu0 %v3293
    %3317 = vmatprep.subr.bf16.mxu0 0
    %3318 = vmatpush1.bf16.msra.mxu0 %v3292
    %3319 = vmatprep.subr.bf16.mxu0 0
    %3320 = vmatpush1.bf16.msra.mxu0 %v3291
    %3321 = vmatprep.subr.bf16.mxu0 0
    %3322 = vmatpush2.bf16.msra.mxu0 0
    %3323 = vmatprep.subr.bf16.mxu0 0
    %3324 = vmatpush2.bf16.msra.mxu0 0
    %3325 = vmatprep.subr.bf16.mxu0 0
    %3326 = vmatpush2.bf16.msra.mxu0 0
    %3327 = vmatprep.subr.bf16.mxu0 0
    %3328 = vmatpush2.bf16.msra.mxu0 0
    %3329 = vmatprep.subr.bf16.mxu0 0
    %3330 = vmatpush2.bf16.msra.mxu0 0
    %3331 = vmatprep.subr.bf16.mxu0 0
    %3332 = vmatpush2.bf16.msra.mxu0 0
    %3333 = vmatprep.subr.bf16.mxu0 0
    %3334 = vmatpush2.bf16.msra.mxu0 0
    %3335 = vmatprep.subr.bf16.mxu0 0
    %3336 = vmatpush2.bf16.msra.mxu0 0
    %3337 = vmatprep.mubr.bf16.mxu0 0
    %3338 = vmatmul.mubr.bf16.gmra.mxu0 %v3300
    %v3339 = vpop.f32.mrf.mxu0
    %v3340 = vadd.f32 0.0, %v3339
    %v3341 = vpop.f32.mrf.mxu0
    %v3342 = vpop.f32.mrf.mxu0
    %v3343 = vadd.f32 0.0, %v3342
    %v3344 = vpop.f32.mrf.mxu0
    %3345 = vmatprep.mubr.bf16.mxu0 0
    %3346 = vmatmul.mubr.bf16.gmra.mxu0 %v3303
    %v3347 = vpop.f32.mrf.mxu0
    %v3348 = vadd.f32 0.0, %v3347
    %v3349 = vpop.f32.mrf.mxu0
    %v3350 = vpop.f32.mrf.mxu0
    %v3351 = vpop.f32.mrf.mxu0
    %3352 = vdwg.mxu0
    %v3353 = vadd.f32 %v3249, %v3340
    %v3354 = vadd.f32 %v3252, %v3343
    %v3355 = vadd.f32 %v3257, %v3348
    %v3356 = vld [vmem:[%s6] sm:$0x1]
    %v3358 = vlaneseq
    %v3359 = vshrl.u32 %v3358, 7
    %v3360 = vsub.s32 0, %v3359
    %v3361 = vrot.slane %v3356, %v3360
    %v3363 = vadd.f32 %v3353, %v3361
    %v3364 = vadd.f32 %v3354, %v3361
    %v3365 = vadd.f32 %v3355, %v3361
    %v3366 = vmax.f32 %v3363, 0.0
    %v3367 = vmax.f32 %v3364, 0.0
    %v3368 = vmax.f32 %v3365, 0.0
    %3369 = vst.msk [vmem:[#allocation5] sm:$0xff] %vm448, %v3366
    %3370 = vst.msk [vmem:[#allocation5 + $0x8] sm:$0xff] %vm448, %v3367
    %3371 = vst.msk [vmem:[#allocation5 + $0x10] sm:$0x3] %vm2738, %v3368
    %s3372 = smul.u32 4, 8
    %s3373 = smul.u32 %s3372, 4
    %s3374 = sshll.u32 %s3373, 4
    %3375 = dma.done [#allocation8], %s3374
    %v3376 = vld [vmem:[#allocation5] sm:$0x1]
    %v3377 = vld [vmem:[#allocation5 + $0x9] sm:$0x1]
    %v3379 = vrot.slane %v3377, 7
    %v3381 = vsel %vm2749, %v3376, %v3379
    %v3382 = vpack.c.bf16 %v3381, %v3381
    %v3383 = vld [vmem:[#allocation6] sm:$0xff]
    %v3384 = vld [vmem:[#allocation6 + $0x8] sm:$0xff]
    %v3385 = vld [vmem:[#allocation6 + $0x10] sm:$0xff]
    %v3386 = vld [vmem:[#allocation6 + $0x18] sm:$0xff]
    %v3387 = vld [vmem:[#allocation6 + $0x20] sm:$0xff]
    %v3388 = vld [vmem:[#allocation6 + $0x28] sm:$0xff]
    %v3389 = vld [vmem:[#allocation6 + $0x30] sm:$0xff]
    %v3390 = vld [vmem:[#allocation6 + $0x38] sm:$0xff]
    %v3391 = vld [vmem:[#allocation6 + $0x40] sm:$0xff]
    %v3392 = vld [vmem:[#allocation6 + $0x48] sm:$0xff]
    %v3393 = vld [vmem:[#allocation6 + $0x50] sm:$0xff]
    %v3394 = vld [vmem:[#allocation6 + $0x58] sm:$0xff]
    %v3395 = vld [vmem:[#allocation6 + $0x60] sm:$0xff]
    %v3396 = vld [vmem:[#allocation6 + $0x68] sm:$0xff]
    %v3397 = vld [vmem:[#allocation6 + $0x70] sm:$0xff]
    %v3398 = vld [vmem:[#allocation6 + $0x78] sm:$0xff]
    %v3399 = vld [vmem:[%s7] sm:$0xf]
    %v3401 = vlaneseq
    %v3402 = vshrl.u32 %v3401, 7
    %v3403 = vsub.s32 0, %v3402
    %v3404 = vrot.slane %v3399, %v3403
    %v3405 = vlaneseq
    %v3406 = vshrl.u32 %v3405, 7
    %v3407 = vsub.s32 1, %v3406
    %v3408 = vrot.slane %v3399, %v3407
    %v3409 = vlaneseq
    %v3410 = vshrl.u32 %v3409, 7
    %v3411 = vsub.s32 2, %v3410
    %v3412 = vrot.slane %v3399, %v3411
    %v3413 = vlaneseq
    %v3414 = vshrl.u32 %v3413, 7
    %v3415 = vsub.s32 3, %v3414
    %v3416 = vrot.slane %v3399, %v3415
    %v3437 = vunpack.c.l.b16 %v3383
    %v3438 = vunpack.c.h.b16 %v3383
    %v3439 = vunpack.c.l.b16 %v3384
    %v3440 = vunpack.c.h.b16 %v3384
    %v3441 = vunpack.c.l.b16 %v3385
    %v3442 = vunpack.c.h.b16 %v3385
    %v3443 = vunpack.c.l.b16 %v3386
    %v3444 = vunpack.c.h.b16 %v3386
    %v3445 = vunpack.c.l.b16 %v3387
    %v3446 = vunpack.c.h.b16 %v3387
    %v3447 = vunpack.c.l.b16 %v3388
    %v3448 = vunpack.c.h.b16 %v3388
    %v3449 = vunpack.c.l.b16 %v3389
    %v3450 = vunpack.c.h.b16 %v3389
    %v3451 = vunpack.c.l.b16 %v3390
    %v3452 = vunpack.c.h.b16 %v3390
    %v3453 = vunpack.c.l.b16 %v3391
    %v3454 = vunpack.c.h.b16 %v3391
    %v3455 = vunpack.c.l.b16 %v3392
    %v3456 = vunpack.c.h.b16 %v3392
    %v3457 = vunpack.c.l.b16 %v3393
    %v3458 = vunpack.c.h.b16 %v3393
    %v3459 = vunpack.c.l.b16 %v3394
    %v3460 = vunpack.c.h.b16 %v3394
    %v3461 = vunpack.c.l.b16 %v3395
    %v3462 = vunpack.c.h.b16 %v3395
    %v3463 = vunpack.c.l.b16 %v3396
    %v3464 = vunpack.c.h.b16 %v3396
    %v3465 = vunpack.c.l.b16 %v3397
    %v3466 = vunpack.c.h.b16 %v3397
    %v3467 = vunpack.c.l.b16 %v3398
    %v3468 = vunpack.c.h.b16 %v3398
    %v3469 = vpack.c.b16 %v3441, %v3437
    %v3470 = vpack.c.b16 %v3442, %v3438
    %v3471 = vpack.c.b16 %v3443, %v3439
    %v3472 = vpack.c.b16 %v3444, %v3440
    %v3473 = vpack.c.b16 %v3449, %v3445
    %v3474 = vpack.c.b16 %v3450, %v3446
    %v3475 = vpack.c.b16 %v3451, %v3447
    %v3476 = vpack.c.b16 %v3452, %v3448
    %v3477 = vpack.c.b16 %v3457, %v3453
    %v3478 = vpack.c.b16 %v3458, %v3454
    %v3479 = vpack.c.b16 %v3459, %v3455
    %v3480 = vpack.c.b16 %v3460, %v3456
    %v3481 = vpack.c.b16 %v3465, %v3461
    %v3482 = vpack.c.b16 %v3466, %v3462
    %v3483 = vpack.c.b16 %v3467, %v3463
    %v3484 = vpack.c.b16 %v3468, %v3464
    %v3502 = vsel %vm448, %v3382, 0
    %3504 = vmatprep.subr.bf16.mxu0 0
    %3505 = vmatpush1.bf16.msra.mxu0 0
    %3506 = vmatprep.subr.bf16.mxu0 0
    %3507 = vmatpush1.bf16.msra.mxu0 0
    %3508 = vmatprep.subr.bf16.mxu0 0
    %3509 = vmatpush1.bf16.msra.mxu0 0
    %3510 = vmatprep.subr.bf16.mxu0 0
    %3511 = vmatpush1.bf16.msra.mxu0 0
    %3512 = vmatprep.subr.bf16.mxu0 %v3482
    %3513 = vmatpush1.bf16.msra.mxu0 %v3481
    %3514 = vmatprep.subr.bf16.mxu0 %v3478
    %3515 = vmatpush1.bf16.msra.mxu0 %v3477
    %3516 = vmatprep.subr.bf16.mxu0 %v3474
    %3517 = vmatpush1.bf16.msra.mxu0 %v3473
    %3518 = vmatprep.subr.bf16.mxu0 %v3470
    %3519 = vmatpush1.bf16.msra.mxu0 %v3469
    %3520 = vmatprep.subr.bf16.mxu0 0
    %3521 = vmatpush2.bf16.msra.mxu0 0
    %3522 = vmatprep.subr.bf16.mxu0 0
    %3523 = vmatpush2.bf16.msra.mxu0 0
    %3524 = vmatprep.subr.bf16.mxu0 0
    %3525 = vmatpush2.bf16.msra.mxu0 0
    %3526 = vmatprep.subr.bf16.mxu0 0
    %3527 = vmatpush2.bf16.msra.mxu0 0
    %3528 = vmatprep.subr.bf16.mxu0 0
    %3529 = vmatpush2.bf16.msra.mxu0 0
    %3530 = vmatprep.subr.bf16.mxu0 0
    %3531 = vmatpush2.bf16.msra.mxu0 0
    %3532 = vmatprep.subr.bf16.mxu0 0
    %3533 = vmatpush2.bf16.msra.mxu0 0
    %3534 = vmatprep.subr.bf16.mxu0 0
    %3535 = vmatpush2.bf16.msra.mxu0 0
    %3536 = vmatprep.mubr.bf16.mxu0 0
    %3537 = vmatmul.mubr.bf16.gmra.mxu0 %v3502
    %v3538 = vpop.f32.mrf.mxu0
    %v3539 = vadd.f32 %v3404, %v3538
    %v3540 = vpop.f32.mrf.mxu0
    %v3541 = vadd.f32 %v3408, %v3540
    %v3542 = vpop.f32.mrf.mxu0
    %v3543 = vpop.f32.mrf.mxu0
    %3544 = vdwg.mxu0
    %3545 = vmatprep.subr.bf16.mxu0 0
    %3546 = vmatpush1.bf16.msra.mxu0 0
    %3547 = vmatprep.subr.bf16.mxu0 0
    %3548 = vmatpush1.bf16.msra.mxu0 0
    %3549 = vmatprep.subr.bf16.mxu0 0
    %3550 = vmatpush1.bf16.msra.mxu0 0
    %3551 = vmatprep.subr.bf16.mxu0 0
    %3552 = vmatpush1.bf16.msra.mxu0 0
    %3553 = vmatprep.subr.bf16.mxu0 %v3484
    %3554 = vmatpush1.bf16.msra.mxu0 %v3483
    %3555 = vmatprep.subr.bf16.mxu0 %v3480
    %3556 = vmatpush1.bf16.msra.mxu0 %v3479
    %3557 = vmatprep.subr.bf16.mxu0 %v3476
    %3558 = vmatpush1.bf16.msra.mxu0 %v3475
    %3559 = vmatprep.subr.bf16.mxu0 %v3472
    %3560 = vmatpush1.bf16.msra.mxu0 %v3471
    %3561 = vmatprep.subr.bf16.mxu0 0
    %3562 = vmatpush2.bf16.msra.mxu0 0
    %3563 = vmatprep.subr.bf16.mxu0 0
    %3564 = vmatpush2.bf16.msra.mxu0 0
    %3565 = vmatprep.subr.bf16.mxu0 0
    %3566 = vmatpush2.bf16.msra.mxu0 0
    %3567 = vmatprep.subr.bf16.mxu0 0
    %3568 = vmatpush2.bf16.msra.mxu0 0
    %3569 = vmatprep.subr.bf16.mxu0 0
    %3570 = vmatpush2.bf16.msra.mxu0 0
    %3571 = vmatprep.subr.bf16.mxu0 0
    %3572 = vmatpush2.bf16.msra.mxu0 0
    %3573 = vmatprep.subr.bf16.mxu0 0
    %3574 = vmatpush2.bf16.msra.mxu0 0
    %3575 = vmatprep.subr.bf16.mxu0 0
    %3576 = vmatpush2.bf16.msra.mxu0 0
    %3577 = vmatprep.mubr.bf16.mxu0 0
    %3578 = vmatmul.mubr.bf16.gmra.mxu0 %v3502
    %v3579 = vpop.f32.mrf.mxu0
    %v3580 = vadd.f32 %v3412, %v3579
    %v3581 = vpop.f32.mrf.mxu0
    %v3582 = vadd.f32 %v3416, %v3581
    %v3583 = vpop.f32.mrf.mxu0
    %v3584 = vpop.f32.mrf.mxu0
    %3585 = vdwg.mxu0
    %v3586 = vmax.f32 %v3539, 0.0
    %v3587 = vmax.f32 %v3541, 0.0
    %v3588 = vmax.f32 %v3580, 0.0
    %v3589 = vmax.f32 %v3582, 0.0
    %s3590 = smul.u32 4, 64
    %s3591 = smul.u32 %s3590, 1
    %s3592 = sshll.u32 %s3591, 4
    %3593 = dma.done %s109, %s3592
    %v3594 = vpack.c.bf16 %v3586, %v3586
    %v3595 = vpack.c.bf16 %v3587, %v3587
    %v3596 = vpack.c.bf16 %v3588, %v3588
    %v3597 = vpack.c.bf16 %v3589, %v3589
    %v3598 = vld [vmem:[#allocation7] sm:$0xf]
    %v3599 = vld [vmem:[#allocation7 + $0x4] sm:$0xf]
    %v3600 = vld [vmem:[#allocation7 + $0x8] sm:$0xf]
    %v3601 = vld [vmem:[#allocation7 + $0xc] sm:$0xf]
    %v3602 = vld [vmem:[#allocation7 + $0x10] sm:$0xf]
    %v3603 = vld [vmem:[#allocation7 + $0x14] sm:$0xf]
    %v3604 = vld [vmem:[#allocation7 + $0x18] sm:$0xf]
    %v3605 = vld [vmem:[#allocation7 + $0x1c] sm:$0xf]
    %v3606 = vld [vmem:[#allocation7 + $0x20] sm:$0xf]
    %v3607 = vld [vmem:[#allocation7 + $0x24] sm:$0xf]
    %v3608 = vld [vmem:[#allocation7 + $0x28] sm:$0xf]
    %v3609 = vld [vmem:[#allocation7 + $0x2c] sm:$0xf]
    %v3610 = vld [vmem:[#allocation7 + $0x30] sm:$0xf]
    %v3611 = vld [vmem:[#allocation7 + $0x34] sm:$0xf]
    %v3612 = vld [vmem:[#allocation7 + $0x38] sm:$0xf]
    %v3613 = vld [vmem:[#allocation7 + $0x3c] sm:$0xf]
    %v3614 = vld [vmem:[#allocation7 + $0x40] sm:$0xf]
    %v3615 = vld [vmem:[#allocation7 + $0x44] sm:$0xf]
    %v3616 = vld [vmem:[#allocation7 + $0x48] sm:$0xf]
    %v3617 = vld [vmem:[#allocation7 + $0x4c] sm:$0xf]
    %v3618 = vld [vmem:[#allocation7 + $0x50] sm:$0xf]
    %v3619 = vld [vmem:[#allocation7 + $0x54] sm:$0xf]
    %v3620 = vld [vmem:[#allocation7 + $0x58] sm:$0xf]
    %v3621 = vld [vmem:[#allocation7 + $0x5c] sm:$0xf]
    %v3622 = vld [vmem:[#allocation7 + $0x60] sm:$0xf]
    %v3623 = vld [vmem:[#allocation7 + $0x64] sm:$0xf]
    %v3624 = vld [vmem:[#allocation7 + $0x68] sm:$0xf]
    %v3625 = vld [vmem:[#allocation7 + $0x6c] sm:$0xf]
    %v3626 = vld [vmem:[#allocation7 + $0x70] sm:$0xf]
    %v3627 = vld [vmem:[#allocation7 + $0x74] sm:$0xf]
    %v3628 = vld [vmem:[#allocation7 + $0x78] sm:$0xf]
    %v3629 = vld [vmem:[#allocation7 + $0x7c] sm:$0xf]
    %v3630 = vld [vmem:[#allocation7 + $0x80] sm:$0xf]
    %v3631 = vld [vmem:[#allocation7 + $0x84] sm:$0xf]
    %v3632 = vld [vmem:[#allocation7 + $0x88] sm:$0xf]
    %v3633 = vld [vmem:[#allocation7 + $0x8c] sm:$0xf]
    %v3634 = vld [vmem:[#allocation7 + $0x90] sm:$0xf]
    %v3635 = vld [vmem:[#allocation7 + $0x94] sm:$0xf]
    %v3636 = vld [vmem:[#allocation7 + $0x98] sm:$0xf]
    %v3637 = vld [vmem:[#allocation7 + $0x9c] sm:$0xf]
    %v3638 = vld [vmem:[#allocation7 + $0xa0] sm:$0xf]
    %v3639 = vld [vmem:[#allocation7 + $0xa4] sm:$0xf]
    %v3640 = vld [vmem:[#allocation7 + $0xa8] sm:$0xf]
    %v3641 = vld [vmem:[#allocation7 + $0xac] sm:$0xf]
    %v3642 = vld [vmem:[#allocation7 + $0xb0] sm:$0xf]
    %v3643 = vld [vmem:[#allocation7 + $0xb4] sm:$0xf]
    %v3644 = vld [vmem:[#allocation7 + $0xb8] sm:$0xf]
    %v3645 = vld [vmem:[#allocation7 + $0xbc] sm:$0xf]
    %v3646 = vld [vmem:[#allocation7 + $0xc0] sm:$0xf]
    %v3647 = vld [vmem:[#allocation7 + $0xc4] sm:$0xf]
    %v3648 = vld [vmem:[#allocation7 + $0xc8] sm:$0xf]
    %v3649 = vld [vmem:[#allocation7 + $0xcc] sm:$0xf]
    %v3650 = vld [vmem:[#allocation7 + $0xd0] sm:$0xf]
    %v3651 = vld [vmem:[#allocation7 + $0xd4] sm:$0xf]
    %v3652 = vld [vmem:[#allocation7 + $0xd8] sm:$0xf]
    %v3653 = vld [vmem:[#allocation7 + $0xdc] sm:$0xf]
    %v3654 = vld [vmem:[#allocation7 + $0xe0] sm:$0xf]
    %v3655 = vld [vmem:[#allocation7 + $0xe4] sm:$0xf]
    %v3656 = vld [vmem:[#allocation7 + $0xe8] sm:$0xf]
    %v3657 = vld [vmem:[#allocation7 + $0xec] sm:$0xf]
    %v3658 = vld [vmem:[#allocation7 + $0xf0] sm:$0xf]
    %v3659 = vld [vmem:[#allocation7 + $0xf4] sm:$0xf]
    %v3660 = vld [vmem:[#allocation7 + $0xf8] sm:$0xf]
    %v3661 = vld [vmem:[#allocation7 + $0xfc] sm:$0xf]
    %v3662 = vld [vmem:[%s8] sm:$0x1]
    %v3664 = vlaneseq
    %v3665 = vshrl.u32 %v3664, 7
    %v3666 = vsub.s32 0, %v3665
    %v3667 = vrot.slane %v3662, %v3666
    %v3733 = vunpack.c.l.b16 %v3598
    %v3734 = vunpack.c.l.b16 %v3599
    %v3735 = vunpack.c.l.b16 %v3600
    %v3736 = vunpack.c.l.b16 %v3601
    %v3737 = vunpack.c.l.b16 %v3602
    %v3738 = vunpack.c.l.b16 %v3603
    %v3739 = vunpack.c.l.b16 %v3604
    %v3740 = vunpack.c.l.b16 %v3605
    %v3741 = vunpack.c.l.b16 %v3606
    %v3742 = vunpack.c.l.b16 %v3607
    %v3743 = vunpack.c.l.b16 %v3608
    %v3744 = vunpack.c.l.b16 %v3609
    %v3745 = vunpack.c.l.b16 %v3610
    %v3746 = vunpack.c.l.b16 %v3611
    %v3747 = vunpack.c.l.b16 %v3612
    %v3748 = vunpack.c.l.b16 %v3613
    %v3749 = vunpack.c.l.b16 %v3614
    %v3750 = vunpack.c.l.b16 %v3615
    %v3751 = vunpack.c.l.b16 %v3616
    %v3752 = vunpack.c.l.b16 %v3617
    %v3753 = vunpack.c.l.b16 %v3618
    %v3754 = vunpack.c.l.b16 %v3619
    %v3755 = vunpack.c.l.b16 %v3620
    %v3756 = vunpack.c.l.b16 %v3621
    %v3757 = vunpack.c.l.b16 %v3622
    %v3758 = vunpack.c.l.b16 %v3623
    %v3759 = vunpack.c.l.b16 %v3624
    %v3760 = vunpack.c.l.b16 %v3625
    %v3761 = vunpack.c.l.b16 %v3626
    %v3762 = vunpack.c.l.b16 %v3627
    %v3763 = vunpack.c.l.b16 %v3628
    %v3764 = vunpack.c.l.b16 %v3629
    %v3765 = vunpack.c.l.b16 %v3630
    %v3766 = vunpack.c.l.b16 %v3631
    %v3767 = vunpack.c.l.b16 %v3632
    %v3768 = vunpack.c.l.b16 %v3633
    %v3769 = vunpack.c.l.b16 %v3634
    %v3770 = vunpack.c.l.b16 %v3635
    %v3771 = vunpack.c.l.b16 %v3636
    %v3772 = vunpack.c.l.b16 %v3637
    %v3773 = vunpack.c.l.b16 %v3638
    %v3774 = vunpack.c.l.b16 %v3639
    %v3775 = vunpack.c.l.b16 %v3640
    %v3776 = vunpack.c.l.b16 %v3641
    %v3777 = vunpack.c.l.b16 %v3642
    %v3778 = vunpack.c.l.b16 %v3643
    %v3779 = vunpack.c.l.b16 %v3644
    %v3780 = vunpack.c.l.b16 %v3645
    %v3781 = vunpack.c.l.b16 %v3646
    %v3782 = vunpack.c.l.b16 %v3647
    %v3783 = vunpack.c.l.b16 %v3648
    %v3784 = vunpack.c.l.b16 %v3649
    %v3785 = vunpack.c.l.b16 %v3650
    %v3786 = vunpack.c.l.b16 %v3651
    %v3787 = vunpack.c.l.b16 %v3652
    %v3788 = vunpack.c.l.b16 %v3653
    %v3789 = vunpack.c.l.b16 %v3654
    %v3790 = vunpack.c.l.b16 %v3655
    %v3791 = vunpack.c.l.b16 %v3656
    %v3792 = vunpack.c.l.b16 %v3657
    %v3793 = vunpack.c.l.b16 %v3658
    %v3794 = vunpack.c.l.b16 %v3659
    %v3795 = vunpack.c.l.b16 %v3660
    %v3796 = vunpack.c.l.b16 %v3661
    %v3797 = vpack.c.b16 %v3734, %v3733
    %v3798 = vpack.c.b16 %v3736, %v3735
    %v3799 = vpack.c.b16 %v3738, %v3737
    %v3800 = vpack.c.b16 %v3740, %v3739
    %v3801 = vpack.c.b16 %v3742, %v3741
    %v3802 = vpack.c.b16 %v3744, %v3743
    %v3803 = vpack.c.b16 %v3746, %v3745
    %v3804 = vpack.c.b16 %v3748, %v3747
    %v3805 = vpack.c.b16 %v3750, %v3749
    %v3806 = vpack.c.b16 %v3752, %v3751
    %v3807 = vpack.c.b16 %v3754, %v3753
    %v3808 = vpack.c.b16 %v3756, %v3755
    %v3809 = vpack.c.b16 %v3758, %v3757
    %v3810 = vpack.c.b16 %v3760, %v3759
    %v3811 = vpack.c.b16 %v3762, %v3761
    %v3812 = vpack.c.b16 %v3764, %v3763
    %v3813 = vpack.c.b16 %v3766, %v3765
    %v3814 = vpack.c.b16 %v3768, %v3767
    %v3815 = vpack.c.b16 %v3770, %v3769
    %v3816 = vpack.c.b16 %v3772, %v3771
    %v3817 = vpack.c.b16 %v3774, %v3773
    %v3818 = vpack.c.b16 %v3776, %v3775
    %v3819 = vpack.c.b16 %v3778, %v3777
    %v3820 = vpack.c.b16 %v3780, %v3779
    %v3821 = vpack.c.b16 %v3782, %v3781
    %v3822 = vpack.c.b16 %v3784, %v3783
    %v3823 = vpack.c.b16 %v3786, %v3785
    %v3824 = vpack.c.b16 %v3788, %v3787
    %v3825 = vpack.c.b16 %v3790, %v3789
    %v3826 = vpack.c.b16 %v3792, %v3791
    %v3827 = vpack.c.b16 %v3794, %v3793
    %v3828 = vpack.c.b16 %v3796, %v3795
    %3861 = vmatprep.subr.bf16.mxu0 0
    %3862 = vmatpush1.bf16.msra.mxu0 %v3804
    %3863 = vmatprep.subr.bf16.mxu0 0
    %3864 = vmatpush1.bf16.msra.mxu0 %v3803
    %3865 = vmatprep.subr.bf16.mxu0 0
    %3866 = vmatpush1.bf16.msra.mxu0 %v3802
    %3867 = vmatprep.subr.bf16.mxu0 0
    %3868 = vmatpush1.bf16.msra.mxu0 %v3801
    %3869 = vmatprep.subr.bf16.mxu0 0
    %3870 = vmatpush1.bf16.msra.mxu0 %v3800
    %3871 = vmatprep.subr.bf16.mxu0 0
    %3872 = vmatpush1.bf16.msra.mxu0 %v3799
    %3873 = vmatprep.subr.bf16.mxu0 0
    %3874 = vmatpush1.bf16.msra.mxu0 %v3798
    %3875 = vmatprep.subr.bf16.mxu0 0
    %3876 = vmatpush1.bf16.msra.mxu0 %v3797
    %3877 = vmatprep.subr.bf16.mxu0 0
    %3878 = vmatpush2.bf16.msra.mxu0 %v3812
    %3879 = vmatprep.subr.bf16.mxu0 0
    %3880 = vmatpush2.bf16.msra.mxu0 %v3811
    %3881 = vmatprep.subr.bf16.mxu0 0
    %3882 = vmatpush2.bf16.msra.mxu0 %v3810
    %3883 = vmatprep.subr.bf16.mxu0 0
    %3884 = vmatpush2.bf16.msra.mxu0 %v3809
    %3885 = vmatprep.subr.bf16.mxu0 0
    %3886 = vmatpush2.bf16.msra.mxu0 %v3808
    %3887 = vmatprep.subr.bf16.mxu0 0
    %3888 = vmatpush2.bf16.msra.mxu0 %v3807
    %3889 = vmatprep.subr.bf16.mxu0 0
    %3890 = vmatpush2.bf16.msra.mxu0 %v3806
    %3891 = vmatprep.subr.bf16.mxu0 0
    %3892 = vmatpush2.bf16.msra.mxu0 %v3805
    %3893 = vmatprep.mubr.bf16.mxu0 %v3595
    %3894 = vmatmul.mubr.bf16.gmra.mxu0 %v3594
    %v3895 = vpop.f32.mrf.mxu0
    %v3896 = vadd.f32 %v3667, %v3895
    %v3897 = vpop.f32.mrf.mxu0
    %v3898 = vpop.f32.mrf.mxu0
    %v3899 = vpop.f32.mrf.mxu0
    %3900 = vdwg.mxu0
    %3901 = vmatprep.subr.bf16.mxu0 0
    %3902 = vmatpush1.bf16.msra.mxu0 %v3820
    %3903 = vmatprep.subr.bf16.mxu0 0
    %3904 = vmatpush1.bf16.msra.mxu0 %v3819
    %3905 = vmatprep.subr.bf16.mxu0 0
    %3906 = vmatpush1.bf16.msra.mxu0 %v3818
    %3907 = vmatprep.subr.bf16.mxu0 0
    %3908 = vmatpush1.bf16.msra.mxu0 %v3817
    %3909 = vmatprep.subr.bf16.mxu0 0
    %3910 = vmatpush1.bf16.msra.mxu0 %v3816
    %3911 = vmatprep.subr.bf16.mxu0 0
    %3912 = vmatpush1.bf16.msra.mxu0 %v3815
    %3913 = vmatprep.subr.bf16.mxu0 0
    %3914 = vmatpush1.bf16.msra.mxu0 %v3814
    %3915 = vmatprep.subr.bf16.mxu0 0
    %3916 = vmatpush1.bf16.msra.mxu0 %v3813
    %3917 = vmatprep.subr.bf16.mxu0 0
    %3918 = vmatpush2.bf16.msra.mxu0 %v3828
    %3919 = vmatprep.subr.bf16.mxu0 0
    %3920 = vmatpush2.bf16.msra.mxu0 %v3827
    %3921 = vmatprep.subr.bf16.mxu0 0
    %3922 = vmatpush2.bf16.msra.mxu0 %v3826
    %3923 = vmatprep.subr.bf16.mxu0 0
    %3924 = vmatpush2.bf16.msra.mxu0 %v3825
    %3925 = vmatprep.subr.bf16.mxu0 0
    %3926 = vmatpush2.bf16.msra.mxu0 %v3824
    %3927 = vmatprep.subr.bf16.mxu0 0
    %3928 = vmatpush2.bf16.msra.mxu0 %v3823
    %3929 = vmatprep.subr.bf16.mxu0 0
    %3930 = vmatpush2.bf16.msra.mxu0 %v3822
    %3931 = vmatprep.subr.bf16.mxu0 0
    %3932 = vmatpush2.bf16.msra.mxu0 %v3821
    %3933 = vmatprep.mubr.bf16.mxu0 %v3597
    %3934 = vmatmul.mubr.bf16.gmra.mxu0 %v3596
    %v3935 = vpop.f32.mrf.mxu0
    %v3936 = vadd.f32 %v3896, %v3935
    %v3937 = vpop.f32.mrf.mxu0
    %v3938 = vpop.f32.mrf.mxu0
    %v3939 = vpop.f32.mrf.mxu0
    %3940 = vdwg.mxu0
    %3941 = vst [vmem:[#allocation9] sm:$0x3] %v3936
    // Predicated region
    $region106: #{apply_fn.1} parent=1 // pred_check
      _
    $region107: #{apply_fn.1} parent=1 // pred_check_branch
      %3943 = sbr.rel (0) target = $region109
    $region108: #{apply_fn.1} parent=1 // pred_region
      %s3945 = ssub.s32 32, 32
      %3946 = vsyncadd [#allocation10], %s3945
      %s3948 = sshll.u32 [#allocation9], 4
      %s3949 = int_to_ptr.vmem [resolvable:$true] %s3948
      %3951 = dma.vmem_to_hbm [thread:$0]  %s3949, 32, %s11, [#allocation10]
    $region109: #{apply_fn.1} parent=1 // pred_fallthru
      _
    // Predicated region
    $region110: #{apply_fn.1} parent=1 // pred_check
      _
    $region111: #{apply_fn.1} parent=1 // pred_check_branch
      %3953 = sbr.rel (0) target = $region113
    $region112: #{apply_fn.1} parent=1 // pred_region
      %3954 = dma.done [#allocation10], 32
    $region113: #{apply_fn.1} parent=1 // pred_fallthru
      _
    %3955 = vsyncpa [#allocation10], 1
  %3956 = vsyncmov [#allocation8]
  %s3957 = vpop.sfrf %3956
  %p3958 = scmp.eq.s32.totalorder %s3957, 0
  %p3959 = pneg %p3958
  %3961 = shalt.err (%p3959)
  %s3962 = scalar_lea.sflag [#allocation8], 1
  %3963 = vsyncmov %s3962
  %s3964 = vpop.sfrf %3963
  %p3965 = scmp.eq.s32.totalorder %s3964, 0
  %p3966 = pneg %p3965
  %3968 = shalt.err (%p3966)

</llo_original>
